<compile_context>
chip_gen: v5e
topology: v5e:2x2
jax: 0.10.0
libtpu: 0.0.40
codegen_flags: <defaults>
</compile_context>

<pallas_src>
import functools

import jax
import jax.numpy as jnp
import numpy as np
from jax import lax
from jax.experimental import pallas as pl
from jax.experimental.pallas import tpu as pltpu

NUM_CLASS = 10
CLASS_PAD = 128          # classes padded to a full 128-lane vreg for in-VMEM compute only
BN_EPS = 1e-5


def _pointnet_kernel(x_ref,
                     w1, b1, w2, b2, w3, b3,
                     w4a, w4b, b4, w5, b5,
                     o_ref, h1b_ref, gmax_ref, *, chunk):
    """tb point clouds per grid step; activations chunked over the point axis."""
    tb, _, n = x_ref.shape
    n_chunks = n // chunk

    # ---- conv1 + bn1 + relu ---------------------------------------------------------------
    # Raw NCW (9, N) slab per cloud, 9-channel axis contracted directly (transposed-LHS dot,
    # bf16 in / f32 accumulate).  Results land straight in the resident bf16 scratch: no
    # concatenate, no extra copies.  tb is tiny and static, each matmul has M = N rows.
    for b in range(tb):
        h1 = lax.dot_general(x_ref[b].astype(jnp.bfloat16), w1[...],
                             dimension_numbers=(((0,), (0,)), ((), ())),
                             preferred_element_type=jnp.float32)            # (N, 64)
        h1 = jnp.maximum(h1 + b1[...], 0.0)
        h1b_ref[b] = h1.astype(jnp.bfloat16)

    # ---- phase 1: conv2 + conv3, chunked over points, running per-cloud max ----------------
    gmax_ref[...] = jnp.full_like(gmax_ref, -jnp.inf)

    @pl.loop(0, n_chunks)
    def _(ci):
        off = pl.multiple_of(ci * chunk, chunk)
        h1c = h1b_ref[:, pl.ds(off, chunk), :].reshape(tb * chunk, 64)      # bf16
        h2 = jnp.dot(h1c, w2[...], preferred_element_type=jnp.float32) + b2[...]
        h2 = jnp.maximum(h2, 0.0)                                           # (tb*chunk, 128)
        # b3 deferred past the max pool (exact: max(x + b) == max(x) + b per channel)
        h3 = jnp.dot(h2.astype(jnp.bfloat16), w3[...],
                     preferred_element_type=jnp.float32)                    # (tb*chunk, 1024)
        for b in range(tb):                                                 # cheap XLU reductions
            cmax = jnp.max(h3[b * chunk:(b + 1) * chunk], axis=0, keepdims=True)
            gmax_ref[pl.ds(b, 1), :] = jnp.maximum(gmax_ref[pl.ds(b, 1), :], cmax)

    # ---- deferred bn3 bias + global feature -> per-cloud conv4 bias row --------------------
    g = gmax_ref[...] + b3[...]                                             # (tb, 1024)
    bias4 = jnp.dot(g.astype(jnp.bfloat16), w4a[...],
                    preferred_element_type=jnp.float32) + b4[...]           # (tb, 256)
    bias4 = bias4[:, None, :]                                               # (tb, 1, 256)

    # ---- phase 2: conv4 + conv5 + log_softmax, chunked, compact 10-class store -------------
    @pl.loop(0, n_chunks)
    def _(ci):
        off = pl.multiple_of(ci * chunk, chunk)
        h1c = h1b_ref[:, pl.ds(off, chunk), :].reshape(tb * chunk, 64)      # bf16
        h4 = jnp.dot(h1c, w4b[...], preferred_element_type=jnp.float32)     # (tb*chunk, 256)
        h4 = jnp.maximum(h4.reshape(tb, chunk, 256) + bias4, 0.0)           # (tb, chunk, 256)
        h5 = jnp.dot(h4.reshape(tb * chunk, 256).astype(jnp.bfloat16), w5[...],
                     preferred_element_type=jnp.float32) + b5[...]          # (tb*chunk, 128)
        # log_softmax over classes; padded lanes carry a -1e30 bias so exp() == 0 there.
        m = jnp.max(h5, axis=-1, keepdims=True)
        e = jnp.exp(h5 - m)
        ls = h5 - m - jnp.log(jnp.sum(e, axis=-1, keepdims=True))
        ls = ls.reshape(tb, chunk, CLASS_PAD)
        o_ref[:, pl.ds(off, chunk), :] = ls[:, :, :NUM_CLASS]               # compact 10-lane store


def _full_spec(shape):
    nd = len(shape)
    return pl.BlockSpec(shape, lambda i, _nd=nd: (0,) * _nd)


def _pick_tb(batch, clouds_per_step):
    divs = [d for d in range(1, min(clouds_per_step, batch) + 1) if batch % d == 0]
    # prefer >= 4 grid steps so each v7x TensorCore gets >= 2 pipelined steps
    pref = [d for d in divs if batch // d >= 4]
    return max(pref) if pref else max(divs)


def _pick_chunk(n, tb, target_rows=1024):
    """Largest multiple-of-128 divisor of n with tb*chunk <= target_rows (min 128)."""
    best = 128
    for d in range(128, n + 1, 128):
        if n % d == 0 and tb * d <= target_rows:
            best = d
    return best


def _pick_vmem_limit_bytes():
    default = 48 * 1024 * 1024          # valid on every generation (v7x has 64 MiB physical)
    try:
        cap = int(pltpu.get_tpu_info().vmem_capacity_bytes)
    except Exception:
        return default
    # ~96 MiB on 128-MiB chips (v5e/v6e), ~48 MiB on 64-MiB v7x
    return max(32 * 1024 * 1024, min(cap * 3 // 4, 96 * 1024 * 1024))


def pointnet_forward(x_ncw, params, *, clouds_per_step=4):
    """x_ncw: (B, 9, N) float32 (PyTorch NCW layout).  Returns (B, N, NUM_CLASS) log-probs."""
    B, C_in, N = x_ncw.shape
    assert C_in == 9
    assert N % 128 == 0, "point dimension must be a multiple of 128 (lane width)"
    tb = _pick_tb(B, clouds_per_step)
    chunk = _pick_chunk(N, tb)

    in_specs = [pl.BlockSpec((tb, 9, N), lambda i: (i, 0, 0))]
    for p in params:
        in_specs.append(_full_spec(p.shape))

    out_shape = jax.ShapeDtypeStruct((B, N, NUM_CLASS), jnp.float32)
    out_spec = pl.BlockSpec((tb, N, NUM_CLASS), lambda i: (i, 0, 0))

    # advisory cost estimate so XLA schedules surrounding ops sensibly
    flops = (2 * B * N * (9 * 64 + 64 * 128 + 128 * 1024 + 64 * 256 + 256 * CLASS_PAD)
             + 2 * B * 1024 * 256)
    transcendentals = B * N * (CLASS_PAD + 1)
    param_bytes = sum(int(np.prod(p.shape)) * p.dtype.itemsize for p in params)
    bytes_accessed = (int(np.prod(x_ncw.shape)) * x_ncw.dtype.itemsize
                      + B * N * NUM_CLASS * 4 + param_bytes)

    kernel = functools.partial(_pointnet_kernel, chunk=chunk)

    out = pl.pallas_call(
        kernel,
        out_shape=out_shape,
        grid_spec=pltpu.PrefetchScalarGridSpec(
            num_scalar_prefetch=0,
            grid=(B // tb,),
            in_specs=in_specs,
            out_specs=out_spec,
            scratch_shapes=[
                pltpu.VMEM((tb, N, 64), jnp.bfloat16),   # resident h1 activations (bf16)
                pltpu.VMEM((tb, 1024), jnp.float32),     # running per-cloud max accumulator
            ],
        ),
        compiler_params=pltpu.CompilerParams(
            dimension_semantics=("parallel",),
            vmem_limit_bytes=_pick_vmem_limit_bytes(),
        ),
        cost_estimate=pl.CostEstimate(
            flops=flops,
            transcendentals=transcendentals,
            bytes_accessed=bytes_accessed,
        ),
    )(x_ncw, *params)

    return out


def _init_params(key):
    """Deterministic synthetic parameters; eval-mode BN folded into conv W/b."""
    def conv_init(key, c_in, c_out):
        kw, kb = jax.random.split(key)
        bound = 1.0 / np.sqrt(c_in)
        w = jax.random.uniform(kw, (c_in, c_out), jnp.float32, -bound, bound)
        b = jax.random.uniform(kb, (c_out,), jnp.float32, -bound, bound)
        return w, b

    def bn_params(key, c):
        k1, k2, k3, k4 = jax.random.split(key, 4)
        gamma = jax.random.uniform(k1, (c,), jnp.float32, 0.5, 1.5)
        beta = jax.random.uniform(k2, (c,), jnp.float32, -0.1, 0.1)
        mean = jax.random.uniform(k3, (c,), jnp.float32, -0.1, 0.1)
        var = jax.random.uniform(k4, (c,), jnp.float32, 0.5, 1.5)
        return gamma, beta, mean, var

    def fold(w, b, bn):
        gamma, beta, mean, var = bn
        scale = gamma / jnp.sqrt(var + BN_EPS)
        return w * scale[None, :], (b - mean) * scale + beta

    keys = jax.random.split(key, 9)
    w1, b1 = fold(*conv_init(keys[0], 9, 64), bn_params(keys[5], 64))
    w2, b2 = fold(*conv_init(keys[1], 64, 128), bn_params(keys[6], 128))
    w3, b3 = fold(*conv_init(keys[2], 128, 1024), bn_params(keys[7], 1024))
    w4, b4 = fold(*conv_init(keys[3], 1088, 256), bn_params(keys[8], 256))
    w4a, w4b = w4[:1024, :], w4[1024:, :]      # split for cat([global_feat, x1]) @ w4
    w5, b5 = conv_init(keys[4], 256, NUM_CLASS)

    # classes padded to a full 128-lane vreg for in-kernel compute only: zero weights, bias
    # pinned at -1e30 so padded logits never influence the log_softmax over the real classes.
    w5p = jnp.zeros((256, CLASS_PAD), jnp.float32).at[:, :NUM_CLASS].set(w5)
    b5p = jnp.full((CLASS_PAD,), -1e30, jnp.float32).at[:NUM_CLASS].set(b5)

    as2d = lambda v: v.reshape(1, -1)        # biases kept 2-D (f32)
    bf16 = lambda w: w.astype(jnp.bfloat16)  # bf16 weights at the MXU inputs
    return (bf16(w1), as2d(b1),
            bf16(w2), as2d(b2),
            bf16(w3), as2d(b3),
            bf16(w4a), bf16(w4b), as2d(b4),
            bf16(w5p), as2d(b5p))


def _reference(x_ncw, params):
    """Pure-JAX reference mirroring the kernel's bf16-input / f32-accumulate matmuls."""
    (w1, b1, w2, b2, w3, b3, w4a, w4b, b4, w5p, b5p) = params
    x = jnp.transpose(x_ncw, (0, 2, 1)).astype(jnp.bfloat16)                  # (B, N, 9)
    h1 = jax.nn.relu(jnp.einsum('bnc,cd->bnd', x, w1,
                                preferred_element_type=jnp.float32) + b1)
    h1b = h1.astype(jnp.bfloat16)
    h2 = jax.nn.relu(jnp.einsum('bnc,cd->bnd', h1b, w2,
                                preferred_element_type=jnp.float32) + b2)
    h3 = jnp.einsum('bnc,cd->bnd', h2.astype(jnp.bfloat16), w3,
                    preferred_element_type=jnp.float32) + b3
    g = jnp.max(h3, axis=1)                                                   # (B, 1024)
    bias4 = jnp.einsum('bc,cd->bd', g.astype(jnp.bfloat16), w4a,
                       preferred_element_type=jnp.float32) + b4               # (B, 256)
    h4 = jax.nn.relu(jnp.einsum('bnc,cd->bnd', h1b, w4b,
                                preferred_element_type=jnp.float32) + bias4[:, None, :])
    h5 = jnp.einsum('bnc,cd->bnd', h4.astype(jnp.bfloat16), w5p[:, :NUM_CLASS],
                    preferred_element_type=jnp.float32) + b5p[:, :NUM_CLASS]
    return jax.nn.log_softmax(h5, axis=-1)


if __name__ == "__main__":
    key = jax.random.PRNGKey(0)
    k_x, k_p = jax.random.split(key)

    B, N = 8, 128                                              # small: 8 clouds x 128 points
    x_ncw = jax.random.normal(k_x, (B, 9, N), jnp.float32)     # PyTorch NCW input
    params = _init_params(k_p)

    out = pointnet_forward(x_ncw, params, clouds_per_step=4)   # tb=2 -> grid=(4,)
    out = jax.block_until_ready(out)

    assert out.shape == (B, N, NUM_CLASS), out.shape
    ref = jax.block_until_ready(_reference(x_ncw, params))
    np.testing.assert_allclose(np.asarray(out), np.asarray(ref), rtol=2e-3, atol=2e-3)

    print("KERNEL_OK")
</pallas_src>

<mosaic_0001>
module attributes {stable_mosaic.version = 11 : i64} {
  func.func @_pointnet_kernel(%arg0: i32, %arg1: memref<2x9x128xf32, #tpu.memory_space<vmem>>, %arg2: memref<9x64xbf16, #tpu.memory_space<vmem>>, %arg3: memref<1x64xf32, #tpu.memory_space<vmem>>, %arg4: memref<64x128xbf16, #tpu.memory_space<vmem>>, %arg5: memref<1x128xf32, #tpu.memory_space<vmem>>, %arg6: memref<128x1024xbf16, #tpu.memory_space<vmem>>, %arg7: memref<1x1024xf32, #tpu.memory_space<vmem>>, %arg8: memref<1024x256xbf16, #tpu.memory_space<vmem>>, %arg9: memref<64x256xbf16, #tpu.memory_space<vmem>>, %arg10: memref<1x256xf32, #tpu.memory_space<vmem>>, %arg11: memref<256x128xbf16, #tpu.memory_space<vmem>>, %arg12: memref<1x128xf32, #tpu.memory_space<vmem>>, %arg13: memref<2x128x10xf32, #tpu.memory_space<vmem>>, %arg14: memref<2x128x64xbf16, #tpu.memory_space<vmem>>, %arg15: memref<2x1024xf32, #tpu.memory_space<vmem>>) attributes {dimension_semantics = [#tpu.dimension_semantics<parallel>], iteration_bounds = array<i64: 4>, scalar_prefetch = 0 : i64, scratch_operands = 2 : i64, tpu.core_type = #tpu.core_type<tc>, window_params = [{transform_indices = @transform_0, window_bounds = array<i64: 2, 9, 128>}, {pipeline_mode = #tpu.pipeline_mode<synchronous>, transform_indices = @transform_1, window_bounds = array<i64: 9, 64>}, {pipeline_mode = #tpu.pipeline_mode<synchronous>, transform_indices = @transform_2, window_bounds = array<i64: 1, 64>}, {pipeline_mode = #tpu.pipeline_mode<synchronous>, transform_indices = @transform_3, window_bounds = array<i64: 64, 128>}, {pipeline_mode = #tpu.pipeline_mode<synchronous>, transform_indices = @transform_4, window_bounds = array<i64: 1, 128>}, {pipeline_mode = #tpu.pipeline_mode<synchronous>, transform_indices = @transform_5, window_bounds = array<i64: 128, 1024>}, {pipeline_mode = #tpu.pipeline_mode<synchronous>, transform_indices = @transform_6, window_bounds = array<i64: 1, 1024>}, {pipeline_mode = #tpu.pipeline_mode<synchronous>, transform_indices = @transform_7, window_bounds = array<i64: 1024, 256>}, {pipeline_mode = #tpu.pipeline_mode<synchronous>, transform_indices = @transform_8, window_bounds = array<i64: 64, 256>}, {pipeline_mode = #tpu.pipeline_mode<synchronous>, transform_indices = @transform_9, window_bounds = array<i64: 1, 256>}, {pipeline_mode = #tpu.pipeline_mode<synchronous>, transform_indices = @transform_10, window_bounds = array<i64: 256, 128>}, {pipeline_mode = #tpu.pipeline_mode<synchronous>, transform_indices = @transform_11, window_bounds = array<i64: 1, 128>}, {transform_indices = @transform_12, window_bounds = array<i64: 2, 128, 10>}]} {
    %c0 = arith.constant 0 : index
    %c0_0 = arith.constant 0 : index
    %c0_1 = arith.constant 0 : index
    %0 = vector.load %arg1[%c0, %c0_0, %c0_1] : memref<2x9x128xf32, #tpu.memory_space<vmem>>, vector<1x9x128xf32>
    %1 = vector.shape_cast %0 : vector<1x9x128xf32> to vector<9x128xf32>
    %2 = arith.truncf %1 : vector<9x128xf32> to vector<9x128xbf16>
    %c0_2 = arith.constant 0 : index
    %c0_3 = arith.constant 0 : index
    %3 = vector.load %arg2[%c0_2, %c0_3] : memref<9x64xbf16, #tpu.memory_space<vmem>>, vector<9x64xbf16>
    %cst = arith.constant dense<0.000000e+00> : vector<128x64xf32>
    %4 = tpu.matmul %2, %3, %cst {dimension_numbers = #tpu.dot_dimension_numbers<[0], [0], [1], [1], [0, 1, 1, 1], [], []>} : vector<9x128xbf16>, vector<9x64xbf16>, vector<128x64xf32> -> vector<128x64xf32>
    %c0_4 = arith.constant 0 : index
    %c0_5 = arith.constant 0 : index
    %5 = vector.load %arg3[%c0_4, %c0_5] : memref<1x64xf32, #tpu.memory_space<vmem>>, vector<1x64xf32>
    %6 = vector.broadcast %5 : vector<1x64xf32> to vector<128x64xf32>
    %7 = arith.addf %4, %6 : vector<128x64xf32>
    %cst_6 = arith.constant 0.000000e+00 : f32
    %8 = vector.broadcast %cst_6 : f32 to vector<128x64xf32>
    %9 = arith.maximumf %7, %8 : vector<128x64xf32>
    %10 = arith.truncf %9 : vector<128x64xf32> to vector<128x64xbf16>
    %c0_7 = arith.constant 0 : index
    %c0_8 = arith.constant 0 : index
    %c0_9 = arith.constant 0 : index
    %11 = vector.load %arg14[%c0_7, %c0_8, %c0_9] : memref<2x128x64xbf16, #tpu.memory_space<vmem>>, vector<1x128x64xbf16>
    %12 = vector.shape_cast %11 : vector<1x128x64xbf16> to vector<128x64xbf16>
    %13 = vector.shape_cast %10 : vector<128x64xbf16> to vector<1x128x64xbf16>
    tpu.vector_store %arg14[%c0_7, %c0_8, %c0_9], %13 {strides = array<i32>} : memref<2x128x64xbf16, #tpu.memory_space<vmem>>, vector<1x128x64xbf16>,
    %c1 = arith.constant 1 : index
    %c0_10 = arith.constant 0 : index
    %c0_11 = arith.constant 0 : index
    %14 = vector.load %arg1[%c1, %c0_10, %c0_11] : memref<2x9x128xf32, #tpu.memory_space<vmem>>, vector<1x9x128xf32>
    %15 = vector.shape_cast %14 : vector<1x9x128xf32> to vector<9x128xf32>
    %16 = arith.truncf %15 : vector<9x128xf32> to vector<9x128xbf16>
    %c0_12 = arith.constant 0 : index
    %c0_13 = arith.constant 0 : index
    %17 = vector.load %arg2[%c0_12, %c0_13] : memref<9x64xbf16, #tpu.memory_space<vmem>>, vector<9x64xbf16>
    %cst_14 = arith.constant dense<0.000000e+00> : vector<128x64xf32>
    %18 = tpu.matmul %16, %17, %cst_14 {dimension_numbers = #tpu.dot_dimension_numbers<[0], [0], [1], [1], [0, 1, 1, 1], [], []>} : vector<9x128xbf16>, vector<9x64xbf16>, vector<128x64xf32> -> vector<128x64xf32>
    %c0_15 = arith.constant 0 : index
    %c0_16 = arith.constant 0 : index
    %19 = vector.load %arg3[%c0_15, %c0_16] : memref<1x64xf32, #tpu.memory_space<vmem>>, vector<1x64xf32>
    %20 = vector.broadcast %19 : vector<1x64xf32> to vector<128x64xf32>
    %21 = arith.addf %18, %20 : vector<128x64xf32>
    %cst_17 = arith.constant 0.000000e+00 : f32
    %22 = vector.broadcast %cst_17 : f32 to vector<128x64xf32>
    %23 = arith.maximumf %21, %22 : vector<128x64xf32>
    %24 = arith.truncf %23 : vector<128x64xf32> to vector<128x64xbf16>
    %c1_18 = arith.constant 1 : index
    %c0_19 = arith.constant 0 : index
    %c0_20 = arith.constant 0 : index
    %25 = vector.load %arg14[%c1_18, %c0_19, %c0_20] : memref<2x128x64xbf16, #tpu.memory_space<vmem>>, vector<1x128x64xbf16>
    %26 = vector.shape_cast %25 : vector<1x128x64xbf16> to vector<128x64xbf16>
    %27 = vector.shape_cast %24 : vector<128x64xbf16> to vector<1x128x64xbf16>
    tpu.vector_store %arg14[%c1_18, %c0_19, %c0_20], %27 {strides = array<i32>} : memref<2x128x64xbf16, #tpu.memory_space<vmem>>, vector<1x128x64xbf16>,
    %cst_21 = arith.constant 0xFF800000 : f32
    %28 = vector.broadcast %cst_21 : f32 to vector<2x1024xf32>
    %c0_22 = arith.constant 0 : index
    %c0_23 = arith.constant 0 : index
    %29 = vector.load %arg15[%c0_22, %c0_23] : memref<2x1024xf32, #tpu.memory_space<vmem>>, vector<2x1024xf32>
    tpu.vector_store %arg15[%c0_22, %c0_23], %28 {strides = array<i32>} : memref<2x1024xf32, #tpu.memory_space<vmem>>, vector<2x1024xf32>,
    %c0_i32 = arith.constant 0 : i32
    %c1_i32 = arith.constant 1 : i32
    %30 = arith.muli %c0_i32, %c1_i32 : i32
    %c0_i32_24 = arith.constant 0 : i32
    %31 = arith.addi %c0_i32_24, %30 : i32
    %c128_i32 = arith.constant 128 : i32
    %32 = arith.muli %31, %c128_i32 : i32
    %33 = tpu.assume_multiple %32, 128 : i32
    %c0_25 = arith.constant 0 : index
    %34 = arith.index_cast %33 : i32 to index
    %c0_26 = arith.constant 0 : index
    %35 = vector.load %arg14[%c0_25, %34, %c0_26] : memref<2x128x64xbf16, #tpu.memory_space<vmem>>, vector<2x128x64xbf16>
    %36 = vector.shape_cast %35 : vector<2x128x64xbf16> to vector<256x64xbf16>
    %c0_27 = arith.constant 0 : index
    %c0_28 = arith.constant 0 : index
    %37 = vector.load %arg4[%c0_27, %c0_28] : memref<64x128xbf16, #tpu.memory_space<vmem>>, vector<64x128xbf16>
    %cst_29 = arith.constant dense<0.000000e+00> : vector<256x128xf32>
    %38 = tpu.matmul %36, %37, %cst_29 {dimension_numbers = #tpu.dot_dimension_numbers<[1], [0], [0], [1], [0, 0, 1, 1], [], []>} : vector<256x64xbf16>, vector<64x128xbf16>, vector<256x128xf32> -> vector<256x128xf32>
    %c0_30 = arith.constant 0 : index
    %c0_31 = arith.constant 0 : index
    %39 = vector.load %arg5[%c0_30, %c0_31] : memref<1x128xf32, #tpu.memory_space<vmem>>, vector<1x128xf32>
    %40 = vector.broadcast %39 : vector<1x128xf32> to vector<256x128xf32>
    %41 = arith.addf %38, %40 : vector<256x128xf32>
    %cst_32 = arith.constant 0.000000e+00 : f32
    %42 = vector.broadcast %cst_32 : f32 to vector<256x128xf32>
    %43 = arith.maximumf %41, %42 : vector<256x128xf32>
    %44 = arith.truncf %43 : vector<256x128xf32> to vector<256x128xbf16>
    %c0_33 = arith.constant 0 : index
    %c0_34 = arith.constant 0 : index
    %45 = vector.load %arg6[%c0_33, %c0_34] : memref<128x1024xbf16, #tpu.memory_space<vmem>>, vector<128x1024xbf16>
    %cst_35 = arith.constant dense<0.000000e+00> : vector<256x1024xf32>
    %46 = tpu.matmul %44, %45, %cst_35 {dimension_numbers = #tpu.dot_dimension_numbers<[1], [0], [0], [1], [0, 0, 1, 1], [], []>} : vector<256x128xbf16>, vector<128x1024xbf16>, vector<256x1024xf32> -> vector<256x1024xf32>
    %47 = vector.extract_strided_slice %46 {offsets = [0, 0], sizes = [128, 1024], strides = [1, 1]} : vector<256x1024xf32> to vector<128x1024xf32>
    %cst_36 = arith.constant dense<0xFF800000> : vector<1024xf32>
    %48 = vector.multi_reduction <maximumf>, %47, %cst_36 [0] : vector<128x1024xf32> to vector<1024xf32>
    %49 = vector.shape_cast %48 : vector<1024xf32> to vector<1x1024xf32>
    %c0_37 = arith.constant 0 : index
    %c0_38 = arith.constant 0 : index
    %50 = vector.load %arg15[%c0_37, %c0_38] : memref<2x1024xf32, #tpu.memory_space<vmem>>, vector<1x1024xf32>
    %51 = arith.maximumf %50, %49 : vector<1x1024xf32>
    %c0_39 = arith.constant 0 : index
    %c0_40 = arith.constant 0 : index
    %52 = vector.load %arg15[%c0_39, %c0_40] : memref<2x1024xf32, #tpu.memory_space<vmem>>, vector<1x1024xf32>
    tpu.vector_store %arg15[%c0_39, %c0_40], %51 {strides = array<i32>} : memref<2x1024xf32, #tpu.memory_space<vmem>>, vector<1x1024xf32>,
    %53 = vector.extract_strided_slice %46 {offsets = [128, 0], sizes = [128, 1024], strides = [1, 1]} : vector<256x1024xf32> to vector<128x1024xf32>
    %cst_41 = arith.constant dense<0xFF800000> : vector<1024xf32>
    %54 = vector.multi_reduction <maximumf>, %53, %cst_41 [0] : vector<128x1024xf32> to vector<1024xf32>
    %55 = vector.shape_cast %54 : vector<1024xf32> to vector<1x1024xf32>
    %c1_42 = arith.constant 1 : index
    %c0_43 = arith.constant 0 : index
    %56 = vector.load %arg15[%c1_42, %c0_43] : memref<2x1024xf32, #tpu.memory_space<vmem>>, vector<1x1024xf32>
    %57 = arith.maximumf %56, %55 : vector<1x1024xf32>
    %c1_44 = arith.constant 1 : index
    %c0_45 = arith.constant 0 : index
    %58 = vector.load %arg15[%c1_44, %c0_45] : memref<2x1024xf32, #tpu.memory_space<vmem>>, vector<1x1024xf32>
    tpu.vector_store %arg15[%c1_44, %c0_45], %57 {strides = array<i32>} : memref<2x1024xf32, #tpu.memory_space<vmem>>, vector<1x1024xf32>,
    %c1_i32_46 = arith.constant 1 : i32
    %c0_47 = arith.constant 0 : index
    %c0_48 = arith.constant 0 : index
    %59 = vector.load %arg15[%c0_47, %c0_48] : memref<2x1024xf32, #tpu.memory_space<vmem>>, vector<2x1024xf32>
    %c0_49 = arith.constant 0 : index
    %c0_50 = arith.constant 0 : index
    %60 = vector.load %arg7[%c0_49, %c0_50] : memref<1x1024xf32, #tpu.memory_space<vmem>>, vector<1x1024xf32>
    %61 = vector.broadcast %60 : vector<1x1024xf32> to vector<2x1024xf32>
    %62 = arith.addf %59, %61 : vector<2x1024xf32>
    %63 = arith.truncf %62 : vector<2x1024xf32> to vector<2x1024xbf16>
    %c0_51 = arith.constant 0 : index
    %c0_52 = arith.constant 0 : index
    %64 = vector.load %arg8[%c0_51, %c0_52] : memref<1024x256xbf16, #tpu.memory_space<vmem>>, vector<1024x256xbf16>
    %cst_53 = arith.constant dense<0.000000e+00> : vector<2x256xf32>
    %65 = tpu.matmul %63, %64, %cst_53 {dimension_numbers = #tpu.dot_dimension_numbers<[1], [0], [0], [1], [0, 0, 1, 1], [], []>} : vector<2x1024xbf16>, vector<1024x256xbf16>, vector<2x256xf32> -> vector<2x256xf32>
    %c0_54 = arith.constant 0 : index
    %c0_55 = arith.constant 0 : index
    %66 = vector.load %arg10[%c0_54, %c0_55] : memref<1x256xf32, #tpu.memory_space<vmem>>, vector<1x256xf32>
    %67 = vector.broadcast %66 : vector<1x256xf32> to vector<2x256xf32>
    %68 = arith.addf %65, %67 : vector<2x256xf32>
    %69 = vector.shape_cast %68 : vector<2x256xf32> to vector<2x1x256xf32>
    %c0_i32_56 = arith.constant 0 : i32
    %c1_i32_57 = arith.constant 1 : i32
    %70 = arith.muli %c0_i32_56, %c1_i32_57 : i32
    %c0_i32_58 = arith.constant 0 : i32
    %71 = arith.addi %c0_i32_58, %70 : i32
    %c128_i32_59 = arith.constant 128 : i32
    %72 = arith.muli %71, %c128_i32_59 : i32
    %73 = tpu.assume_multiple %72, 128 : i32
    %c0_60 = arith.constant 0 : index
    %74 = arith.index_cast %73 : i32 to index
    %c0_61 = arith.constant 0 : index
    %75 = vector.load %arg14[%c0_60, %74, %c0_61] : memref<2x128x64xbf16, #tpu.memory_space<vmem>>, vector<2x128x64xbf16>
    %76 = vector.shape_cast %75 : vector<2x128x64xbf16> to vector<256x64xbf16>
    %c0_62 = arith.constant 0 : index
    %c0_63 = arith.constant 0 : index
    %77 = vector.load %arg9[%c0_62, %c0_63] : memref<64x256xbf16, #tpu.memory_space<vmem>>, vector<64x256xbf16>
    %cst_64 = arith.constant dense<0.000000e+00> : vector<256x256xf32>
    %78 = tpu.matmul %76, %77, %cst_64 {dimension_numbers = #tpu.dot_dimension_numbers<[1], [0], [0], [1], [0, 0, 1, 1], [], []>} : vector<256x64xbf16>, vector<64x256xbf16>, vector<256x256xf32> -> vector<256x256xf32>
    %79 = vector.shape_cast %78 : vector<256x256xf32> to vector<2x128x256xf32>
    %80 = vector.broadcast %69 : vector<2x1x256xf32> to vector<2x128x256xf32>
    %81 = arith.addf %79, %80 : vector<2x128x256xf32>
    %cst_65 = arith.constant 0.000000e+00 : f32
    %82 = vector.broadcast %cst_65 : f32 to vector<2x128x256xf32>
    %83 = arith.maximumf %81, %82 : vector<2x128x256xf32>
    %84 = vector.shape_cast %83 : vector<2x128x256xf32> to vector<256x256xf32>
    %85 = arith.truncf %84 : vector<256x256xf32> to vector<256x256xbf16>
    %c0_66 = arith.constant 0 : index
    %c0_67 = arith.constant 0 : index
    %86 = vector.load %arg11[%c0_66, %c0_67] : memref<256x128xbf16, #tpu.memory_space<vmem>>, vector<256x128xbf16>
    %cst_68 = arith.constant dense<0.000000e+00> : vector<256x128xf32>
    %87 = tpu.matmul %85, %86, %cst_68 {dimension_numbers = #tpu.dot_dimension_numbers<[1], [0], [0], [1], [0, 0, 1, 1], [], []>} : vector<256x256xbf16>, vector<256x128xbf16>, vector<256x128xf32> -> vector<256x128xf32>
    %c0_69 = arith.constant 0 : index
    %c0_70 = arith.constant 0 : index
    %88 = vector.load %arg12[%c0_69, %c0_70] : memref<1x128xf32, #tpu.memory_space<vmem>>, vector<1x128xf32>
    %89 = vector.broadcast %88 : vector<1x128xf32> to vector<256x128xf32>
    %90 = arith.addf %87, %89 : vector<256x128xf32>
    %cst_71 = arith.constant dense<0xFF800000> : vector<256xf32>
    %91 = vector.multi_reduction <maximumf>, %90, %cst_71 [1] : vector<256x128xf32> to vector<256xf32>
    %92 = vector.shape_cast %91 : vector<256xf32> to vector<256x1xf32>
    %93 = vector.broadcast %92 : vector<256x1xf32> to vector<256x128xf32>
    %94 = arith.subf %90, %93 : vector<256x128xf32>
    %95 = math.exp %94 : vector<256x128xf32>
    %96 = vector.broadcast %92 : vector<256x1xf32> to vector<256x128xf32>
    %97 = arith.subf %90, %96 : vector<256x128xf32>
    %cst_72 = arith.constant dense<0.000000e+00> : vector<256xf32>
    %98 = vector.multi_reduction <add>, %95, %cst_72 [1] : vector<256x128xf32> to vector<256xf32>
    %99 = vector.shape_cast %98 : vector<256xf32> to vector<256x1xf32>
    %100 = math.log %99 : vector<256x1xf32>
    %101 = vector.broadcast %100 : vector<256x1xf32> to vector<256x128xf32>
    %102 = arith.subf %97, %101 : vector<256x128xf32>
    %103 = vector.shape_cast %102 : vector<256x128xf32> to vector<2x128x128xf32>
    %104 = vector.extract_strided_slice %103 {offsets = [0, 0, 0], sizes = [2, 128, 10], strides = [1, 1, 1]} : vector<2x128x128xf32> to vector<2x128x10xf32>
    %c0_73 = arith.constant 0 : index
    %105 = arith.index_cast %73 : i32 to index
    %c0_74 = arith.constant 0 : index
    %106 = vector.load %arg13[%c0_73, %105, %c0_74] : memref<2x128x10xf32, #tpu.memory_space<vmem>>, vector<2x128x10xf32>
    tpu.vector_store %arg13[%c0_73, %105, %c0_74], %104 {strides = array<i32>} : memref<2x128x10xf32, #tpu.memory_space<vmem>>, vector<2x128x10xf32>,
    %c1_i32_75 = arith.constant 1 : i32
    return
  }
  func.func @transform_0(%arg0: i32) -> (i32, i32, i32) {
    %c0_i32 = arith.constant 0 : i32
    %c0_i32_0 = arith.constant 0 : i32
    %c0_i32_1 = arith.constant 0 : i32
    return %arg0, %c0_i32, %c0_i32_0 : i32, i32, i32
  }
  func.func @transform_1(%arg0: i32) -> (i32, i32) {
    %c0_i32 = arith.constant 0 : i32
    %c0_i32_0 = arith.constant 0 : i32
    %c0_i32_1 = arith.constant 0 : i32
    return %c0_i32, %c0_i32_0 : i32, i32
  }
  func.func @transform_2(%arg0: i32) -> (i32, i32) {
    %c0_i32 = arith.constant 0 : i32
    %c0_i32_0 = arith.constant 0 : i32
    %c0_i32_1 = arith.constant 0 : i32
    return %c0_i32, %c0_i32_0 : i32, i32
  }
  func.func @transform_3(%arg0: i32) -> (i32, i32) {
    %c0_i32 = arith.constant 0 : i32
    %c0_i32_0 = arith.constant 0 : i32
    %c0_i32_1 = arith.constant 0 : i32
    return %c0_i32, %c0_i32_0 : i32, i32
  }
  func.func @transform_4(%arg0: i32) -> (i32, i32) {
    %c0_i32 = arith.constant 0 : i32
    %c0_i32_0 = arith.constant 0 : i32
    %c0_i32_1 = arith.constant 0 : i32
    return %c0_i32, %c0_i32_0 : i32, i32
  }
  func.func @transform_5(%arg0: i32) -> (i32, i32) {
    %c0_i32 = arith.constant 0 : i32
    %c0_i32_0 = arith.constant 0 : i32
    %c0_i32_1 = arith.constant 0 : i32
    return %c0_i32, %c0_i32_0 : i32, i32
  }
  func.func @transform_6(%arg0: i32) -> (i32, i32) {
    %c0_i32 = arith.constant 0 : i32
    %c0_i32_0 = arith.constant 0 : i32
    %c0_i32_1 = arith.constant 0 : i32
    return %c0_i32, %c0_i32_0 : i32, i32
  }
  func.func @transform_7(%arg0: i32) -> (i32, i32) {
    %c0_i32 = arith.constant 0 : i32
    %c0_i32_0 = arith.constant 0 : i32
    %c0_i32_1 = arith.constant 0 : i32
    return %c0_i32, %c0_i32_0 : i32, i32
  }
  func.func @transform_8(%arg0: i32) -> (i32, i32) {
    %c0_i32 = arith.constant 0 : i32
    %c0_i32_0 = arith.constant 0 : i32
    %c0_i32_1 = arith.constant 0 : i32
    return %c0_i32, %c0_i32_0 : i32, i32
  }
  func.func @transform_9(%arg0: i32) -> (i32, i32) {
    %c0_i32 = arith.constant 0 : i32
    %c0_i32_0 = arith.constant 0 : i32
    %c0_i32_1 = arith.constant 0 : i32
    return %c0_i32, %c0_i32_0 : i32, i32
  }
  func.func @transform_10(%arg0: i32) -> (i32, i32) {
    %c0_i32 = arith.constant 0 : i32
    %c0_i32_0 = arith.constant 0 : i32
    %c0_i32_1 = arith.constant 0 : i32
    return %c0_i32, %c0_i32_0 : i32, i32
  }
  func.func @transform_11(%arg0: i32) -> (i32, i32) {
    %c0_i32 = arith.constant 0 : i32
    %c0_i32_0 = arith.constant 0 : i32
    %c0_i32_1 = arith.constant 0 : i32
    return %c0_i32, %c0_i32_0 : i32, i32
  }
  func.func @transform_12(%arg0: i32) -> (i32, i32, i32) {
    %c0_i32 = arith.constant 0 : i32
    %c0_i32_0 = arith.constant 0 : i32
    %c0_i32_1 = arith.constant 0 : i32
    return %arg0, %c0_i32, %c0_i32_0 : i32, i32, i32
  }
}

</mosaic_0001>

<llo_original>
// kernel: tpu_custom_call.1
$region0: #{tpu_custom_call.1}
  #allocation0 [shape = 'u32[]', space=smem, size = 0x4, offset = 0x4, fixed_abs, tag = 'smem constant byte address 0x4 - core index']
  #allocation1 [shape = 'u32[72,128]{1,0:T(1,128)}', space=vmem, size = 0x9000, scoped, tag = 'internal scratch']
  #allocation2 [shape = 'bf16[2,128,64]{2,1,0:T(8,128)(2,1)}', space=vmem, size = 0x10000, scoped, tag = 'scratch operand']
  #allocation3 [shape = 'f32[2,1024]{1,0:T(2,128)}', space=vmem, size = 0x2000, scoped, tag = 'scratch operand']
  %s0 = inlined_call_operand.vmem [shape: f32[8,9,128], index: 0, kind: input, shape index: {}]
  %s1 = inlined_call_operand.vmem [shape: bf16[9,64], index: 1, kind: input, shape index: {}]
  %s2 = inlined_call_operand.vmem [shape: f32[1,64], index: 2, kind: input, shape index: {}]
  %s3 = inlined_call_operand.hbm [shape: bf16[64,128], index: 3, kind: input, shape index: {}]
  %s4 = inlined_call_operand.hbm [shape: f32[1,128], index: 4, kind: input, shape index: {}]
  %s5 = inlined_call_operand.hbm [shape: bf16[128,1024], index: 5, kind: input, shape index: {}]
  %s6 = inlined_call_operand.vmem [shape: f32[1,1024], index: 6, kind: input, shape index: {}]
  %s7 = inlined_call_operand.hbm [shape: bf16[1024,256], index: 7, kind: input, shape index: {}]
  %s8 = inlined_call_operand.vmem [shape: bf16[64,256], index: 8, kind: input, shape index: {}]
  %s9 = inlined_call_operand.hbm [shape: f32[1,256], index: 9, kind: input, shape index: {}]
  %s10 = inlined_call_operand.vmem [shape: bf16[256,128], index: 10, kind: input, shape index: {}]
  %s11 = inlined_call_operand.hbm [shape: f32[1,128], index: 11, kind: input, shape index: {}]
  %s12 = inlined_call_operand.vmem [shape: f32[8,128,10], index: 12, kind: output, shape index: {}]
  %s13 = sld [smem:[#allocation0]]
  $region105: #{tpu_custom_call.1} parent=0
    _
  %s15 = ssub.s32 1, %s13
  %s16 = scalar_select 0, %s15, %s13
  $region1: #{tpu_custom_call.1} parent=0
    #allocation4 [shape = 'u8[16384]{0}', space=vmem, size = 0x4000, scoped, tag = 'input window, operand 3, single buffered']
    #allocation5 [shape = 's32[2]{0}', space=sflag, size = 0x8, scoped, tag = 'scoped memory for tpu_custom_call.1']
    #allocation6 [shape = 'u8[512]{0}', space=vmem, size = 0x400, scoped, tag = 'input window, operand 4, single buffered']
    #allocation7 [shape = 's32[1]{0}', space=sflag, size = 0x4, scoped, tag = 'scoped memory for tpu_custom_call.1']
    #allocation8 [shape = 'u8[262144]{0}', space=vmem, size = 0x40000, scoped, tag = 'input window, operand 5, single buffered']
    #allocation9 [shape = 'u8[524288]{0}', space=vmem, size = 0x80000, scoped, tag = 'input window, operand 7, single buffered']
    #allocation10 [shape = 's32[1]{0}', space=sflag, size = 0x4, scoped, tag = 'scoped memory for tpu_custom_call.1']
    #allocation11 [shape = 'u8[1024]{0}', space=vmem, size = 0x400, scoped, tag = 'input window, operand 9, single buffered']
    #allocation12 [shape = 'u8[512]{0}', space=vmem, size = 0x400, scoped, tag = 'input window, operand 11, single buffered']
    #allocation13 [shape = 's32[1]{0}', space=sflag, size = 0x4, scoped, tag = 'scoped memory for tpu_custom_call.1']
    %17 = vsyncpa [#allocation5], 0
    %18 = vsyncpa [#allocation7], 0
    %19 = vsyncpa [#allocation10], 0
    %20 = vsyncpa [#allocation13], 0
    loop: start=0, step=1, limit=6
    $region2: #{tpu_custom_call.1} parent=1 // loop_pre_header
      _
    $region3: #{tpu_custom_call.1} parent=1 // loop_header
      %s22 = sphi 0, %s26
      %p23 = scmp.ge.s32.totalorder %s22, 6
      %s32 = sphi 0, %s34
      %s35 = sphi 0, %s32
      %s36 = sphi 0, %s35
      %s52 = sphi 0, %s36
      %s56 = sphi 0, %s56
      %s58 = sphi 0, %s56
      %s59 = sphi 0, %s58
      %s73 = sphi 0, %s59
      %s77 = sphi 0, %s77
      %s79 = sphi 0, %s77
      %s80 = sphi 0, %s79
      %s94 = sphi 0, %s80
      %s98 = sphi 0, %s98
      %s100 = sphi 0, %s98
      %s101 = sphi 0, %s100
      %s115 = sphi 0, %s101
      %s119 = sphi 0, %s119
      %s121 = sphi 0, %s119
      %s122 = sphi 0, %s121
      %s136 = sphi 0, %s122
      %s140 = sphi 0, %s140
      %s142 = sphi 0, %s140
      %s143 = sphi 0, %s142
      %s157 = sphi 0, %s143
      %s161 = sphi 0, %s161
      %s163 = sphi 0, %s161
      %s164 = sphi 0, %s163
      %s178 = sphi 0, %s164
      %s182 = sphi 0, %s182
      %s184 = sphi 0, %s182
      %s185 = sphi 0, %s184
      %s199 = sphi 0, %s185
      %s203 = sphi 0, %s203
      %s205 = sphi 0, %s203
      %s206 = sphi 0, %s205
      %s220 = sphi 0, %s206
      %s224 = sphi 0, %s224
      %s226 = sphi 0, %s224
      %s227 = sphi 0, %s226
      %s241 = sphi 0, %s227
      %s245 = sphi 0, %s245
      %s247 = sphi 0, %s245
      %s248 = sphi 0, %s247
      %s262 = sphi 0, %s248
      %s266 = sphi 0, %s266
      %s268 = sphi 0, %s266
      %s269 = sphi 0, %s268
      %s283 = sphi 0, %s269
      %s289 = sphi 0, %s291
      %s292 = sphi 0, %s289
      %s293 = sphi 0, %s292
      %s309 = sphi 0, %s293
    $region4: #{tpu_custom_call.1} parent=1 // loop_header_branch
      %25 = sbr.rel (%p23) target = $region8
    $region5: #{tpu_custom_call.1} parent=1 // loop_body
      %s27 = ssub.s32 %s22, 1
      %s28 = ssub.s32 %s22, 2
      %s29 = sadd.s32 %s22, 1
      %s30 = ssub.s32 %s22, %s29
      %p31 = scmp.eq.s32.totalorder %s30, 0
      %s33 = sadd.s32 %s32, 1
      %s34 = scalar_select %p31, %s32, %s33
      %p37 = pneg %p31
      %p38 = scmp.eq.s32.totalorder %s22, 3
      %p39 = por %p37, %p38
      %p40 = scmp.ne.s32.totalorder %s32, %s35
      %p41 = scmp.eq.s32.totalorder %s22, 0
      %p42 = por %p40, %p41
      %p43 = scmp.ne.s32.totalorder %s32, %s35
      %p44 = scmp.eq.s32.totalorder %s27, 3
      %p45 = por %p43, %p44
      %p46 = scmp.ne.s32.totalorder %s35, %s36
      %p47 = scmp.eq.s32.totalorder %s27, 0
      %p48 = por %p46, %p47
      %p49 = scmp.ne.s32.totalorder %s35, %s36
      %p50 = scmp.eq.s32.totalorder %s28, 3
      %p51 = por %p49, %p50
      %p53 = scmp.ne.s32.totalorder %s36, %s52
      %p54 = scmp.eq.s32.totalorder %s28, 0
      %p55 = por %p53, %p54
      %s57 = sadd.s32 %s56, 1
      %p60 = scmp.eq.s32.totalorder %s22, 3
      %p61 = scmp.ne.s32.totalorder %s56, %s58
      %p62 = scmp.eq.s32.totalorder %s22, 0
      %p63 = por %p61, %p62
      %p64 = scmp.ne.s32.totalorder %s56, %s58
      %p65 = scmp.eq.s32.totalorder %s27, 3
      %p66 = por %p64, %p65
      %p67 = scmp.ne.s32.totalorder %s58, %s59
      %p68 = scmp.eq.s32.totalorder %s27, 0
      %p69 = por %p67, %p68
      %p70 = scmp.ne.s32.totalorder %s58, %s59
      %p71 = scmp.eq.s32.totalorder %s28, 3
      %p72 = por %p70, %p71
      %p74 = scmp.ne.s32.totalorder %s59, %s73
      %p75 = scmp.eq.s32.totalorder %s28, 0
      %p76 = por %p74, %p75
      %s78 = sadd.s32 %s77, 1
      %p81 = scmp.eq.s32.totalorder %s22, 3
      %p82 = scmp.ne.s32.totalorder %s77, %s79
      %p83 = scmp.eq.s32.totalorder %s22, 0
      %p84 = por %p82, %p83
      %p85 = scmp.ne.s32.totalorder %s77, %s79
      %p86 = scmp.eq.s32.totalorder %s27, 3
      %p87 = por %p85, %p86
      %p88 = scmp.ne.s32.totalorder %s79, %s80
      %p89 = scmp.eq.s32.totalorder %s27, 0
      %p90 = por %p88, %p89
      %p91 = scmp.ne.s32.totalorder %s79, %s80
      %p92 = scmp.eq.s32.totalorder %s28, 3
      %p93 = por %p91, %p92
      %p95 = scmp.ne.s32.totalorder %s80, %s94
      %p96 = scmp.eq.s32.totalorder %s28, 0
      %p97 = por %p95, %p96
      %s99 = sadd.s32 %s98, 1
      %p102 = scmp.eq.s32.totalorder %s22, 3
      %p103 = scmp.ne.s32.totalorder %s98, %s100
      %p104 = scmp.eq.s32.totalorder %s22, 0
      %p105 = por %p103, %p104
      %p106 = scmp.ne.s32.totalorder %s98, %s100
      %p107 = scmp.eq.s32.totalorder %s27, 3
      %p108 = por %p106, %p107
      %p109 = scmp.ne.s32.totalorder %s100, %s101
      %p110 = scmp.eq.s32.totalorder %s27, 0
      %p111 = por %p109, %p110
      %p112 = scmp.ne.s32.totalorder %s100, %s101
      %p113 = scmp.eq.s32.totalorder %s28, 3
      %p114 = por %p112, %p113
      %p116 = scmp.ne.s32.totalorder %s101, %s115
      %p117 = scmp.eq.s32.totalorder %s28, 0
      %p118 = por %p116, %p117
      %s120 = sadd.s32 %s119, 1
      %p123 = scmp.eq.s32.totalorder %s22, 3
      %p124 = scmp.ne.s32.totalorder %s119, %s121
      %p125 = scmp.eq.s32.totalorder %s22, 0
      %p126 = por %p124, %p125
      %p127 = scmp.ne.s32.totalorder %s119, %s121
      %p128 = scmp.eq.s32.totalorder %s27, 3
      %p129 = por %p127, %p128
      %p130 = scmp.ne.s32.totalorder %s121, %s122
      %p131 = scmp.eq.s32.totalorder %s27, 0
      %p132 = por %p130, %p131
      %p133 = scmp.ne.s32.totalorder %s121, %s122
      %p134 = scmp.eq.s32.totalorder %s28, 3
      %p135 = por %p133, %p134
      %p137 = scmp.ne.s32.totalorder %s122, %s136
      %p138 = scmp.eq.s32.totalorder %s28, 0
      %p139 = por %p137, %p138
      %s141 = sadd.s32 %s140, 1
      %p144 = scmp.eq.s32.totalorder %s22, 3
      %p145 = scmp.ne.s32.totalorder %s140, %s142
      %p146 = scmp.eq.s32.totalorder %s22, 0
      %p147 = por %p145, %p146
      %p148 = scmp.ne.s32.totalorder %s140, %s142
      %p149 = scmp.eq.s32.totalorder %s27, 3
      %p150 = por %p148, %p149
      %p151 = scmp.ne.s32.totalorder %s142, %s143
      %p152 = scmp.eq.s32.totalorder %s27, 0
      %p153 = por %p151, %p152
      %p154 = scmp.ne.s32.totalorder %s142, %s143
      %p155 = scmp.eq.s32.totalorder %s28, 3
      %p156 = por %p154, %p155
      %p158 = scmp.ne.s32.totalorder %s143, %s157
      %p159 = scmp.eq.s32.totalorder %s28, 0
      %p160 = por %p158, %p159
      %s162 = sadd.s32 %s161, 1
      %p165 = scmp.eq.s32.totalorder %s22, 3
      %p166 = scmp.ne.s32.totalorder %s161, %s163
      %p167 = scmp.eq.s32.totalorder %s22, 0
      %p168 = por %p166, %p167
      %p169 = scmp.ne.s32.totalorder %s161, %s163
      %p170 = scmp.eq.s32.totalorder %s27, 3
      %p171 = por %p169, %p170
      %p172 = scmp.ne.s32.totalorder %s163, %s164
      %p173 = scmp.eq.s32.totalorder %s27, 0
      %p174 = por %p172, %p173
      %p175 = scmp.ne.s32.totalorder %s163, %s164
      %p176 = scmp.eq.s32.totalorder %s28, 3
      %p177 = por %p175, %p176
      %p179 = scmp.ne.s32.totalorder %s164, %s178
      %p180 = scmp.eq.s32.totalorder %s28, 0
      %p181 = por %p179, %p180
      %s183 = sadd.s32 %s182, 1
      %p186 = scmp.eq.s32.totalorder %s22, 3
      %p187 = scmp.ne.s32.totalorder %s182, %s184
      %p188 = scmp.eq.s32.totalorder %s22, 0
      %p189 = por %p187, %p188
      %p190 = scmp.ne.s32.totalorder %s182, %s184
      %p191 = scmp.eq.s32.totalorder %s27, 3
      %p192 = por %p190, %p191
      %p193 = scmp.ne.s32.totalorder %s184, %s185
      %p194 = scmp.eq.s32.totalorder %s27, 0
      %p195 = por %p193, %p194
      %p196 = scmp.ne.s32.totalorder %s184, %s185
      %p197 = scmp.eq.s32.totalorder %s28, 3
      %p198 = por %p196, %p197
      %p200 = scmp.ne.s32.totalorder %s185, %s199
      %p201 = scmp.eq.s32.totalorder %s28, 0
      %p202 = por %p200, %p201
      %s204 = sadd.s32 %s203, 1
      %p207 = scmp.eq.s32.totalorder %s22, 3
      %p208 = scmp.ne.s32.totalorder %s203, %s205
      %p209 = scmp.eq.s32.totalorder %s22, 0
      %p210 = por %p208, %p209
      %p211 = scmp.ne.s32.totalorder %s203, %s205
      %p212 = scmp.eq.s32.totalorder %s27, 3
      %p213 = por %p211, %p212
      %p214 = scmp.ne.s32.totalorder %s205, %s206
      %p215 = scmp.eq.s32.totalorder %s27, 0
      %p216 = por %p214, %p215
      %p217 = scmp.ne.s32.totalorder %s205, %s206
      %p218 = scmp.eq.s32.totalorder %s28, 3
      %p219 = por %p217, %p218
      %p221 = scmp.ne.s32.totalorder %s206, %s220
      %p222 = scmp.eq.s32.totalorder %s28, 0
      %p223 = por %p221, %p222
      %s225 = sadd.s32 %s224, 1
      %p228 = scmp.eq.s32.totalorder %s22, 3
      %p229 = scmp.ne.s32.totalorder %s224, %s226
      %p230 = scmp.eq.s32.totalorder %s22, 0
      %p231 = por %p229, %p230
      %p232 = scmp.ne.s32.totalorder %s224, %s226
      %p233 = scmp.eq.s32.totalorder %s27, 3
      %p234 = por %p232, %p233
      %p235 = scmp.ne.s32.totalorder %s226, %s227
      %p236 = scmp.eq.s32.totalorder %s27, 0
      %p237 = por %p235, %p236
      %p238 = scmp.ne.s32.totalorder %s226, %s227
      %p239 = scmp.eq.s32.totalorder %s28, 3
      %p240 = por %p238, %p239
      %p242 = scmp.ne.s32.totalorder %s227, %s241
      %p243 = scmp.eq.s32.totalorder %s28, 0
      %p244 = por %p242, %p243
      %s246 = sadd.s32 %s245, 1
      %p249 = scmp.eq.s32.totalorder %s22, 3
      %p250 = scmp.ne.s32.totalorder %s245, %s247
      %p251 = scmp.eq.s32.totalorder %s22, 0
      %p252 = por %p250, %p251
      %p253 = scmp.ne.s32.totalorder %s245, %s247
      %p254 = scmp.eq.s32.totalorder %s27, 3
      %p255 = por %p253, %p254
      %p256 = scmp.ne.s32.totalorder %s247, %s248
      %p257 = scmp.eq.s32.totalorder %s27, 0
      %p258 = por %p256, %p257
      %p259 = scmp.ne.s32.totalorder %s247, %s248
      %p260 = scmp.eq.s32.totalorder %s28, 3
      %p261 = por %p259, %p260
      %p263 = scmp.ne.s32.totalorder %s248, %s262
      %p264 = scmp.eq.s32.totalorder %s28, 0
      %p265 = por %p263, %p264
      %s267 = sadd.s32 %s266, 1
      %p270 = scmp.eq.s32.totalorder %s22, 3
      %p271 = scmp.ne.s32.totalorder %s266, %s268
      %p272 = scmp.eq.s32.totalorder %s22, 0
      %p273 = por %p271, %p272
      %p274 = scmp.ne.s32.totalorder %s266, %s268
      %p275 = scmp.eq.s32.totalorder %s27, 3
      %p276 = por %p274, %p275
      %p277 = scmp.ne.s32.totalorder %s268, %s269
      %p278 = scmp.eq.s32.totalorder %s27, 0
      %p279 = por %p277, %p278
      %p280 = scmp.ne.s32.totalorder %s268, %s269
      %p281 = scmp.eq.s32.totalorder %s28, 3
      %p282 = por %p280, %p281
      %p284 = scmp.ne.s32.totalorder %s269, %s283
      %p285 = scmp.eq.s32.totalorder %s28, 0
      %p286 = por %p284, %p285
      %s287 = ssub.s32 %s22, %s29
      %p288 = scmp.eq.s32.totalorder %s287, 0
      %s290 = sadd.s32 %s289, 1
      %s291 = scalar_select %p288, %s289, %s290
      %p294 = pneg %p288
      %p295 = scmp.eq.s32.totalorder %s22, 3
      %p296 = por %p294, %p295
      %p297 = scmp.ne.s32.totalorder %s289, %s292
      %p298 = scmp.eq.s32.totalorder %s22, 0
      %p299 = por %p297, %p298
      %p300 = scmp.ne.s32.totalorder %s289, %s292
      %p301 = scmp.eq.s32.totalorder %s27, 3
      %p302 = por %p300, %p301
      %p303 = scmp.ne.s32.totalorder %s292, %s293
      %p304 = scmp.eq.s32.totalorder %s27, 0
      %p305 = por %p303, %p304
      %p306 = scmp.ne.s32.totalorder %s292, %s293
      %p307 = scmp.eq.s32.totalorder %s28, 3
      %p308 = por %p306, %p307
      %p310 = scmp.ne.s32.totalorder %s293, %s309
      %p311 = scmp.eq.s32.totalorder %s28, 0
      %p312 = por %p310, %p311
      %p313 = scmp.le.s32.totalorder 1, %s22
      %p314 = scmp.lt.s32.totalorder %s22, 5
      %p315 = pnand %p313, %p314
      %p316 = pneg %p315
      // Predicated region
      $region9: #{tpu_custom_call.1} parent=5 // pred_check
        _
      $region10: #{tpu_custom_call.1} parent=5 // pred_check_branch
        %318 = sbr.rel (%p315) target = $region12
      $region11: #{tpu_custom_call.1} parent=5 // pred_region
        %s319 = ssub.s32 %s22, 1
        // Predicated region
        $region13: #{tpu_custom_call.1} parent=11 // pred_check
          %p320 = pneg %p69
        $region14: #{tpu_custom_call.1} parent=11 // pred_check_branch
          %322 = sbr.rel (%p320) target = $region16
        $region15: #{tpu_custom_call.1} parent=11 // pred_region
          _
        $region16: #{tpu_custom_call.1} parent=11 // pred_fallthru
          _
        // Predicated region
        $region17: #{tpu_custom_call.1} parent=11 // pred_check
          %p323 = pneg %p90
        $region18: #{tpu_custom_call.1} parent=11 // pred_check_branch
          %325 = sbr.rel (%p323) target = $region20
        $region19: #{tpu_custom_call.1} parent=11 // pred_region
          _
        $region20: #{tpu_custom_call.1} parent=11 // pred_fallthru
          _
        // Predicated region
        $region21: #{tpu_custom_call.1} parent=11 // pred_check
          %p326 = pneg %p111
        $region22: #{tpu_custom_call.1} parent=11 // pred_check_branch
          %328 = sbr.rel (%p326) target = $region24
        $region23: #{tpu_custom_call.1} parent=11 // pred_region
          %330 = vsyncadd [#allocation5], 0
          %s331 = sshll.u32 %s3, 4
          %s332 = int_to_ptr.hbm [resolvable:$true] %s331
          %s333 = sshll.u32 [#allocation4], 4
          %s334 = int_to_ptr.vmem [resolvable:$true] %s333
          %339 = dma.hbm_to_vmem [thread:$0]  %s332, 512, %s334, [#allocation5], 64, 64, 4
        $region24: #{tpu_custom_call.1} parent=11 // pred_fallthru
          _
        // Predicated region
        $region25: #{tpu_custom_call.1} parent=11 // pred_check
          %p340 = pneg %p132
        $region26: #{tpu_custom_call.1} parent=11 // pred_check_branch
          %342 = sbr.rel (%p340) target = $region28
        $region27: #{tpu_custom_call.1} parent=11 // pred_region
          %344 = vsyncadd [#allocation7], 0
          %s346 = sshll.u32 %s4, 4
          %s347 = int_to_ptr.hbm [resolvable:$true] %s346
          %s348 = sshll.u32 [#allocation6], 4
          %s349 = int_to_ptr.vmem [resolvable:$true] %s348
          %351 = dma.hbm_to_vmem [thread:$0]  %s347, 16, %s349, [#allocation7]
        $region28: #{tpu_custom_call.1} parent=11 // pred_fallthru
          _
        // Predicated region
        $region29: #{tpu_custom_call.1} parent=11 // pred_check
          %p352 = pneg %p153
        $region30: #{tpu_custom_call.1} parent=11 // pred_check_branch
          %354 = sbr.rel (%p352) target = $region32
        $region31: #{tpu_custom_call.1} parent=11 // pred_region
          %356 = vsyncadd [#allocation7], 0
          %s357 = sshll.u32 %s5, 4
          %s358 = int_to_ptr.hbm [resolvable:$true] %s357
          %s359 = sshll.u32 [#allocation8], 4
          %s360 = int_to_ptr.vmem [resolvable:$true] %s359
          %365 = dma.hbm_to_vmem [thread:$0]  %s358, 8192, %s360, [#allocation7], 512, 512, 32
        $region32: #{tpu_custom_call.1} parent=11 // pred_fallthru
          _
        // Predicated region
        $region33: #{tpu_custom_call.1} parent=11 // pred_check
          %p366 = pneg %p174
        $region34: #{tpu_custom_call.1} parent=11 // pred_check_branch
          %368 = sbr.rel (%p366) target = $region36
        $region35: #{tpu_custom_call.1} parent=11 // pred_region
          _
        $region36: #{tpu_custom_call.1} parent=11 // pred_fallthru
          _
        // Predicated region
        $region37: #{tpu_custom_call.1} parent=11 // pred_check
          %p369 = pneg %p195
        $region38: #{tpu_custom_call.1} parent=11 // pred_check_branch
          %371 = sbr.rel (%p369) target = $region40
        $region39: #{tpu_custom_call.1} parent=11 // pred_region
          %373 = vsyncadd [#allocation10], 0
          %s374 = sshll.u32 %s7, 4
          %s375 = int_to_ptr.hbm [resolvable:$true] %s374
          %s376 = sshll.u32 [#allocation9], 4
          %s377 = int_to_ptr.vmem [resolvable:$true] %s376
          %382 = dma.hbm_to_vmem [thread:$0]  %s375, 16384, %s377, [#allocation10], 128, 128, 8
        $region40: #{tpu_custom_call.1} parent=11 // pred_fallthru
          _
        // Predicated region
        $region41: #{tpu_custom_call.1} parent=11 // pred_check
          %p383 = pneg %p216
        $region42: #{tpu_custom_call.1} parent=11 // pred_check_branch
          %385 = sbr.rel (%p383) target = $region44
        $region43: #{tpu_custom_call.1} parent=11 // pred_region
          _
        $region44: #{tpu_custom_call.1} parent=11 // pred_fallthru
          _
        // Predicated region
        $region45: #{tpu_custom_call.1} parent=11 // pred_check
          %p386 = pneg %p237
        $region46: #{tpu_custom_call.1} parent=11 // pred_check_branch
          %388 = sbr.rel (%p386) target = $region48
        $region47: #{tpu_custom_call.1} parent=11 // pred_region
          %390 = vsyncadd [#allocation10], 0
          %s392 = sshll.u32 %s9, 4
          %s393 = int_to_ptr.hbm [resolvable:$true] %s392
          %s394 = sshll.u32 [#allocation11], 4
          %s395 = int_to_ptr.vmem [resolvable:$true] %s394
          %397 = dma.hbm_to_vmem [thread:$0]  %s393, 32, %s395, [#allocation10]
        $region48: #{tpu_custom_call.1} parent=11 // pred_fallthru
          _
        // Predicated region
        $region49: #{tpu_custom_call.1} parent=11 // pred_check
          %p398 = pneg %p258
        $region50: #{tpu_custom_call.1} parent=11 // pred_check_branch
          %400 = sbr.rel (%p398) target = $region52
        $region51: #{tpu_custom_call.1} parent=11 // pred_region
          _
        $region52: #{tpu_custom_call.1} parent=11 // pred_fallthru
          _
        // Predicated region
        $region53: #{tpu_custom_call.1} parent=11 // pred_check
          %p401 = pneg %p279
        $region54: #{tpu_custom_call.1} parent=11 // pred_check_branch
          %403 = sbr.rel (%p401) target = $region56
        $region55: #{tpu_custom_call.1} parent=11 // pred_region
          %405 = vsyncadd [#allocation13], 0
          %s407 = sshll.u32 %s11, 4
          %s408 = int_to_ptr.hbm [resolvable:$true] %s407
          %s409 = sshll.u32 [#allocation12], 4
          %s410 = int_to_ptr.vmem [resolvable:$true] %s409
          %412 = dma.hbm_to_vmem [thread:$0]  %s408, 16, %s410, [#allocation13]
        $region56: #{tpu_custom_call.1} parent=11 // pred_fallthru
          _
      $region12: #{tpu_custom_call.1} parent=5 // pred_fallthru
        _
      %p413 = scmp.lt.s32.totalorder %s22, 4
      // Predicated region
      $region57: #{tpu_custom_call.1} parent=5 // pred_check
        %p414 = pneg %p413
      $region58: #{tpu_custom_call.1} parent=5 // pred_check_branch
        %416 = sbr.rel (%p414) target = $region60
      $region59: #{tpu_custom_call.1} parent=5 // pred_region
        // Predicated region
        $region61: #{tpu_custom_call.1} parent=59 // pred_check
          %p417 = pneg %p42
        $region62: #{tpu_custom_call.1} parent=59 // pred_check_branch
          %419 = sbr.rel (%p417) target = $region64
        $region63: #{tpu_custom_call.1} parent=59 // pred_region
          %s420 = smul.u32 2, %s22
          %p421 = scmp.lt.s32.totalorder %s420, 7
          %s422 = scalar_select %p421, %s420, 7
          %s423 = smul.addr %s422, 2
          %s424 = smul.addr %s423, 8
          %s425 = scalar_lea.vmem %s0, %s424
          %s426 = smul.u32 2, %s22
        $region64: #{tpu_custom_call.1} parent=59 // pred_fallthru
          _
      $region60: #{tpu_custom_call.1} parent=5 // pred_fallthru
        _
      %p427 = scmp.le.s32.totalorder 1, %s22
      %p428 = scmp.lt.s32.totalorder %s22, 5
      %p429 = pnand %p427, %p428
      %p430 = pneg %p429
      // Predicated region
      $region65: #{tpu_custom_call.1} parent=5 // pred_check
        _
      $region66: #{tpu_custom_call.1} parent=5 // pred_check_branch
        %432 = sbr.rel (%p429) target = $region68
      $region67: #{tpu_custom_call.1} parent=5 // pred_region
        %s433 = ssub.s32 %s22, 1
        // Predicated region
        $region69: #{tpu_custom_call.1} parent=67 // pred_check
          %p434 = pneg %p111
        $region70: #{tpu_custom_call.1} parent=67 // pred_check_branch
          %436 = sbr.rel (%p434) target = $region72
        $region71: #{tpu_custom_call.1} parent=67 // pred_region
          %438 = dma.done [#allocation5], 512
        $region72: #{tpu_custom_call.1} parent=67 // pred_fallthru
          _
        // Predicated region
        $region73: #{tpu_custom_call.1} parent=67 // pred_check
          %p439 = pneg %p132
        $region74: #{tpu_custom_call.1} parent=67 // pred_check_branch
          %441 = sbr.rel (%p439) target = $region76
        $region75: #{tpu_custom_call.1} parent=67 // pred_region
          %443 = dma.done [#allocation7], 16
        $region76: #{tpu_custom_call.1} parent=67 // pred_fallthru
          _
        // Predicated region
        $region77: #{tpu_custom_call.1} parent=67 // pred_check
          %p444 = pneg %p153
        $region78: #{tpu_custom_call.1} parent=67 // pred_check_branch
          %446 = sbr.rel (%p444) target = $region80
        $region79: #{tpu_custom_call.1} parent=67 // pred_region
          %448 = dma.done [#allocation7], 8192
        $region80: #{tpu_custom_call.1} parent=67 // pred_fallthru
          _
        // Predicated region
        $region81: #{tpu_custom_call.1} parent=67 // pred_check
          %p449 = pneg %p195
        $region82: #{tpu_custom_call.1} parent=67 // pred_check_branch
          %451 = sbr.rel (%p449) target = $region84
        $region83: #{tpu_custom_call.1} parent=67 // pred_region
          %453 = dma.done [#allocation10], 16384
        $region84: #{tpu_custom_call.1} parent=67 // pred_fallthru
          _
        // Predicated region
        $region85: #{tpu_custom_call.1} parent=67 // pred_check
          %p454 = pneg %p237
        $region86: #{tpu_custom_call.1} parent=67 // pred_check_branch
          %456 = sbr.rel (%p454) target = $region88
        $region87: #{tpu_custom_call.1} parent=67 // pred_region
          %458 = dma.done [#allocation10], 32
        $region88: #{tpu_custom_call.1} parent=67 // pred_fallthru
          _
        // Predicated region
        $region89: #{tpu_custom_call.1} parent=67 // pred_check
          %p459 = pneg %p279
        $region90: #{tpu_custom_call.1} parent=67 // pred_check_branch
          %461 = sbr.rel (%p459) target = $region92
        $region91: #{tpu_custom_call.1} parent=67 // pred_region
          %463 = dma.done [#allocation13], 16
        $region92: #{tpu_custom_call.1} parent=67 // pred_fallthru
          _
        %s464 = smul.u32 2, %s27
        %p465 = scmp.lt.s32.totalorder %s464, 7
        %s466 = scalar_select %p465, %s464, 7
        %s467 = smul.addr %s466, 2
        %s468 = smul.addr %s467, 8
        %s469 = scalar_lea.vmem %s0, %s468
        %p470 = pneg %p48
        %p471 = pneg %p45
        %p472 = pneg %p69
        %p473 = pneg %p66
        %p474 = pneg %p90
        %p475 = pneg %p87
        %p476 = pneg %p111
        %p477 = pneg %p108
        %p478 = pneg %p132
        %p479 = pneg %p129
        %p480 = pneg %p153
        %p481 = pneg %p150
        %p482 = pneg %p174
        %p483 = pneg %p171
        %p484 = pneg %p195
        %p485 = pneg %p192
        %p486 = pneg %p216
        %p487 = pneg %p213
        %p488 = pneg %p237
        %p489 = pneg %p234
        %p490 = pneg %p258
        %p491 = pneg %p255
        %p492 = pneg %p279
        %p493 = pneg %p276
        %p494 = pneg %p305
        %p495 = pneg %p302
        %s496 = smul.u32 2, %s27
        %p497 = scmp.lt.s32.totalorder %s496, 7
        %s498 = scalar_select %p497, %s496, 7
        %s499 = smul.addr %s498, 16
        %s500 = smul.addr %s499, 8
        %s501 = scalar_lea.vmem %s12, %s500
        %s502 = smul.u32 2, %s27
        %p503 = scmp.lt.s32.totalorder %s502, 7
        %s504 = scalar_select %p503, %s502, 7
        %s505 = smul.addr %s504, 2
        %s506 = smul.addr %s505, 8
        %s507 = scalar_lea.vmem %s0, %s506
        %s508 = smul.u32 2, %s27
        %s509 = smul.u32 2, %s27
        %p510 = scmp.lt.s32.totalorder %s509, 7
        %s511 = scalar_select %p510, %s509, 7
        %s512 = smul.addr %s511, 16
        %s513 = smul.addr %s512, 8
        %s514 = scalar_lea.vmem %s12, %s513
        %s515 = smul.u32 2, %s27
        %v517 = vld [vmem:[%s507] sm:$0xff]
        %v518 = vld [vmem:[%s507 + $0x8] sm:$0x1]
        %v519 = vpack.c.bf16 %v518, %v517
        %v520 = vld [vmem:[%s1] sm:$0xf]
        %v521 = vld [vmem:[%s1 + $0x4] sm:$0x1]
        %v522 = vld [vmem:[%s2] sm:$0x1]
        %v524 = vperm.slane %v522, 0
        %526 = vxpose.xlu0.c.b16.start [1/8] %v519, 128
        %527 = vxpose.xlu0.c.b16.cont [2/8] 0, 128
        %528 = vxpose.xlu0.c.b16.cont [3/8] 0, 128
        %529 = vxpose.xlu0.c.b16.cont [4/8] 0, 128
        %530 = vxpose.xlu0.c.b16.cont [5/8] 0, 128
        %531 = vxpose.xlu0.c.b16.cont [6/8] 0, 128
        %532 = vxpose.xlu0.c.b16.cont [7/8] 0, 128
        %533 = vxpose.xlu0.c.b16.end [8/8] 0, 128
        %v534 = vpop.trf.xlu0
        %v535 = vpop.trf.xlu0
        %v536 = vpop.trf.xlu0
        %v537 = vpop.trf.xlu0
        %v538 = vpop.trf.xlu0
        %v539 = vpop.trf.xlu0
        %v540 = vpop.trf.xlu0
        %v541 = vpop.trf.xlu0
        %v544 = vunpack.c.l.b16 %v520
        %v545 = vunpack.c.l.b16 %v521
        %v546 = vpack.c.b16 %v545, %v544
        %vm547 = vcmask 72704
        %v549 = vsel %vm547, %v534, 0
        %v552 = vsel %vm547, %v535, 0
        %v555 = vsel %vm547, %v536, 0
        %v558 = vsel %vm547, %v537, 0
        %v561 = vsel %vm547, %v538, 0
        %v564 = vsel %vm547, %v539, 0
        %v567 = vsel %vm547, %v540, 0
        %v570 = vsel %vm547, %v541, 0
        %vm572 = vcmask 1043456
        %vm573 = vcmask 1044480
        %v574 = vsel %vm572, 4294967295, 65535
        %v575 = vsel %vm573, %v574, 0
        %v577 = vand.u32 %v546, %v575
        %579 = vmatpush.bf16.msra.mxu0 0
        %580 = vmatpush.bf16.msra.mxu0 0
        %581 = vmatpush.bf16.msra.mxu0 0
        %582 = vmatpush.bf16.msra.mxu0 0
        %583 = vmatpush.bf16.msra.mxu0 0
        %584 = vmatpush.bf16.msra.mxu0 0
        %585 = vmatpush.bf16.msra.mxu0 0
        %586 = vmatpush.bf16.msra.mxu0 %v577
        %587 = vmatmul.bf16.gmra.mxu0 %v549
        %v588 = vpop.f32.mrf.mxu0
        %v589 = vadd.f32 %v524, %v588
        %v590 = vpop.f32.mrf.mxu0
        %v591 = vadd.f32 %v524, %v590
        %592 = vmatmul.bf16.gmra.mxu0 %v552
        %v593 = vpop.f32.mrf.mxu0
        %v594 = vadd.f32 %v524, %v593
        %v595 = vpop.f32.mrf.mxu0
        %v596 = vadd.f32 %v524, %v595
        %597 = vmatmul.bf16.gmra.mxu0 %v555
        %v598 = vpop.f32.mrf.mxu0
        %v599 = vadd.f32 %v524, %v598
        %v600 = vpop.f32.mrf.mxu0
        %v601 = vadd.f32 %v524, %v600
        %602 = vmatmul.bf16.gmra.mxu0 %v558
        %v603 = vpop.f32.mrf.mxu0
        %v604 = vadd.f32 %v524, %v603
        %v605 = vpop.f32.mrf.mxu0
        %v606 = vadd.f32 %v524, %v605
        %607 = vmatmul.bf16.gmra.mxu0 %v561
        %v608 = vpop.f32.mrf.mxu0
        %v609 = vadd.f32 %v524, %v608
        %v610 = vpop.f32.mrf.mxu0
        %v611 = vadd.f32 %v524, %v610
        %612 = vmatmul.bf16.gmra.mxu0 %v564
        %v613 = vpop.f32.mrf.mxu0
        %v614 = vadd.f32 %v524, %v613
        %v615 = vpop.f32.mrf.mxu0
        %v616 = vadd.f32 %v524, %v615
        %617 = vmatmul.bf16.gmra.mxu0 %v567
        %v618 = vpop.f32.mrf.mxu0
        %v619 = vadd.f32 %v524, %v618
        %v620 = vpop.f32.mrf.mxu0
        %v621 = vadd.f32 %v524, %v620
        %622 = vmatmul.bf16.gmra.mxu0 %v570
        %v623 = vpop.f32.mrf.mxu0
        %v624 = vadd.f32 %v524, %v623
        %v625 = vpop.f32.mrf.mxu0
        %v626 = vadd.f32 %v524, %v625
        %627 = vdwg.mxu0
        %v628 = vmax.f32 %v589, 0.0
        %v629 = vmax.f32 %v591, 0.0
        %v630 = vmax.f32 %v594, 0.0
        %v631 = vmax.f32 %v596, 0.0
        %v632 = vmax.f32 %v599, 0.0
        %v633 = vmax.f32 %v601, 0.0
        %v634 = vmax.f32 %v604, 0.0
        %v635 = vmax.f32 %v606, 0.0
        %v636 = vmax.f32 %v609, 0.0
        %v637 = vmax.f32 %v611, 0.0
        %v638 = vmax.f32 %v614, 0.0
        %v639 = vmax.f32 %v616, 0.0
        %v640 = vmax.f32 %v619, 0.0
        %v641 = vmax.f32 %v621, 0.0
        %v642 = vmax.f32 %v624, 0.0
        %v643 = vmax.f32 %v626, 0.0
        %v644 = vpack.c.bf16 %v628, %v628
        %v645 = vpack.c.bf16 %v629, %v629
        %v646 = vpack.c.bf16 %v630, %v630
        %v647 = vpack.c.bf16 %v631, %v631
        %v648 = vpack.c.bf16 %v632, %v632
        %v649 = vpack.c.bf16 %v633, %v633
        %v650 = vpack.c.bf16 %v634, %v634
        %v651 = vpack.c.bf16 %v635, %v635
        %v652 = vpack.c.bf16 %v636, %v636
        %v653 = vpack.c.bf16 %v637, %v637
        %v654 = vpack.c.bf16 %v638, %v638
        %v655 = vpack.c.bf16 %v639, %v639
        %v656 = vpack.c.bf16 %v640, %v640
        %v657 = vpack.c.bf16 %v641, %v641
        %v658 = vpack.c.bf16 %v642, %v642
        %v659 = vpack.c.bf16 %v643, %v643
        %vm660 = vcmask 519168
        %661 = vst.msk [vmem:[#allocation2] sm:$0xf] %vm660, %v644
        %662 = vst.msk [vmem:[#allocation2 + $0x4] sm:$0xf] %vm660, %v645
        %663 = vst.msk [vmem:[#allocation2 + $0x8] sm:$0xf] %vm660, %v646
        %664 = vst.msk [vmem:[#allocation2 + $0xc] sm:$0xf] %vm660, %v647
        %665 = vst.msk [vmem:[#allocation2 + $0x10] sm:$0xf] %vm660, %v648
        %666 = vst.msk [vmem:[#allocation2 + $0x14] sm:$0xf] %vm660, %v649
        %667 = vst.msk [vmem:[#allocation2 + $0x18] sm:$0xf] %vm660, %v650
        %668 = vst.msk [vmem:[#allocation2 + $0x1c] sm:$0xf] %vm660, %v651
        %669 = vst.msk [vmem:[#allocation2 + $0x20] sm:$0xf] %vm660, %v652
        %670 = vst.msk [vmem:[#allocation2 + $0x24] sm:$0xf] %vm660, %v653
        %671 = vst.msk [vmem:[#allocation2 + $0x28] sm:$0xf] %vm660, %v654
        %672 = vst.msk [vmem:[#allocation2 + $0x2c] sm:$0xf] %vm660, %v655
        %673 = vst.msk [vmem:[#allocation2 + $0x30] sm:$0xf] %vm660, %v656
        %674 = vst.msk [vmem:[#allocation2 + $0x34] sm:$0xf] %vm660, %v657
        %675 = vst.msk [vmem:[#allocation2 + $0x38] sm:$0xf] %vm660, %v658
        %676 = vst.msk [vmem:[#allocation2 + $0x3c] sm:$0xf] %vm660, %v659
        %s677 = scalar_lea.vmem %s507, 16
        %v678 = vld [vmem:[%s677] sm:$0xff]
        %v679 = vld [vmem:[%s677 + $0x8] sm:$0x1]
        %v680 = vpack.c.bf16 %v679, %v678
        %v681 = vld [vmem:[%s1] sm:$0xf]
        %v682 = vld [vmem:[%s1 + $0x4] sm:$0x1]
        %v683 = vld [vmem:[%s2] sm:$0x1]
        %v685 = vperm.slane %v683, 0
        %687 = vxpose.xlu0.c.b16.start [1/8] %v680, 128
        %688 = vxpose.xlu0.c.b16.cont [2/8] 0, 128
        %689 = vxpose.xlu0.c.b16.cont [3/8] 0, 128
        %690 = vxpose.xlu0.c.b16.cont [4/8] 0, 128
        %691 = vxpose.xlu0.c.b16.cont [5/8] 0, 128
        %692 = vxpose.xlu0.c.b16.cont [6/8] 0, 128
        %693 = vxpose.xlu0.c.b16.cont [7/8] 0, 128
        %694 = vxpose.xlu0.c.b16.end [8/8] 0, 128
        %v695 = vpop.trf.xlu0
        %v696 = vpop.trf.xlu0
        %v697 = vpop.trf.xlu0
        %v698 = vpop.trf.xlu0
        %v699 = vpop.trf.xlu0
        %v700 = vpop.trf.xlu0
        %v701 = vpop.trf.xlu0
        %v702 = vpop.trf.xlu0
        %v705 = vunpack.c.l.b16 %v681
        %v706 = vunpack.c.l.b16 %v682
        %v707 = vpack.c.b16 %v706, %v705
        %v709 = vsel %vm547, %v695, 0
        %v712 = vsel %vm547, %v696, 0
        %v715 = vsel %vm547, %v697, 0
        %v718 = vsel %vm547, %v698, 0
        %v721 = vsel %vm547, %v699, 0
        %v724 = vsel %vm547, %v700, 0
        %v727 = vsel %vm547, %v701, 0
        %v730 = vsel %vm547, %v702, 0
        %v733 = vand.u32 %v707, %v575
        %735 = vmatpush.bf16.msra.mxu0 0
        %736 = vmatpush.bf16.msra.mxu0 0
        %737 = vmatpush.bf16.msra.mxu0 0
        %738 = vmatpush.bf16.msra.mxu0 0
        %739 = vmatpush.bf16.msra.mxu0 0
        %740 = vmatpush.bf16.msra.mxu0 0
        %741 = vmatpush.bf16.msra.mxu0 0
        %742 = vmatpush.bf16.msra.mxu0 %v733
        %743 = vmatmul.bf16.gmra.mxu0 %v709
        %v744 = vpop.f32.mrf.mxu0
        %v745 = vadd.f32 %v685, %v744
        %v746 = vpop.f32.mrf.mxu0
        %v747 = vadd.f32 %v685, %v746
        %748 = vmatmul.bf16.gmra.mxu0 %v712
        %v749 = vpop.f32.mrf.mxu0
        %v750 = vadd.f32 %v685, %v749
        %v751 = vpop.f32.mrf.mxu0
        %v752 = vadd.f32 %v685, %v751
        %753 = vmatmul.bf16.gmra.mxu0 %v715
        %v754 = vpop.f32.mrf.mxu0
        %v755 = vadd.f32 %v685, %v754
        %v756 = vpop.f32.mrf.mxu0
        %v757 = vadd.f32 %v685, %v756
        %758 = vmatmul.bf16.gmra.mxu0 %v718
        %v759 = vpop.f32.mrf.mxu0
        %v760 = vadd.f32 %v685, %v759
        %v761 = vpop.f32.mrf.mxu0
        %v762 = vadd.f32 %v685, %v761
        %763 = vmatmul.bf16.gmra.mxu0 %v721
        %v764 = vpop.f32.mrf.mxu0
        %v765 = vadd.f32 %v685, %v764
        %v766 = vpop.f32.mrf.mxu0
        %v767 = vadd.f32 %v685, %v766
        %768 = vmatmul.bf16.gmra.mxu0 %v724
        %v769 = vpop.f32.mrf.mxu0
        %v770 = vadd.f32 %v685, %v769
        %v771 = vpop.f32.mrf.mxu0
        %v772 = vadd.f32 %v685, %v771
        %773 = vmatmul.bf16.gmra.mxu0 %v727
        %v774 = vpop.f32.mrf.mxu0
        %v775 = vadd.f32 %v685, %v774
        %v776 = vpop.f32.mrf.mxu0
        %v777 = vadd.f32 %v685, %v776
        %778 = vmatmul.bf16.gmra.mxu0 %v730
        %v779 = vpop.f32.mrf.mxu0
        %v780 = vadd.f32 %v685, %v779
        %v781 = vpop.f32.mrf.mxu0
        %v782 = vadd.f32 %v685, %v781
        %783 = vdwg.mxu0
        %v784 = vmax.f32 %v745, 0.0
        %v785 = vmax.f32 %v747, 0.0
        %v786 = vmax.f32 %v750, 0.0
        %v787 = vmax.f32 %v752, 0.0
        %v788 = vmax.f32 %v755, 0.0
        %v789 = vmax.f32 %v757, 0.0
        %v790 = vmax.f32 %v760, 0.0
        %v791 = vmax.f32 %v762, 0.0
        %v792 = vmax.f32 %v765, 0.0
        %v793 = vmax.f32 %v767, 0.0
        %v794 = vmax.f32 %v770, 0.0
        %v795 = vmax.f32 %v772, 0.0
        %v796 = vmax.f32 %v775, 0.0
        %v797 = vmax.f32 %v777, 0.0
        %v798 = vmax.f32 %v780, 0.0
        %v799 = vmax.f32 %v782, 0.0
        %v800 = vpack.c.bf16 %v784, %v784
        %v801 = vpack.c.bf16 %v785, %v785
        %v802 = vpack.c.bf16 %v786, %v786
        %v803 = vpack.c.bf16 %v787, %v787
        %v804 = vpack.c.bf16 %v788, %v788
        %v805 = vpack.c.bf16 %v789, %v789
        %v806 = vpack.c.bf16 %v790, %v790
        %v807 = vpack.c.bf16 %v791, %v791
        %v808 = vpack.c.bf16 %v792, %v792
        %v809 = vpack.c.bf16 %v793, %v793
        %v810 = vpack.c.bf16 %v794, %v794
        %v811 = vpack.c.bf16 %v795, %v795
        %v812 = vpack.c.bf16 %v796, %v796
        %v813 = vpack.c.bf16 %v797, %v797
        %v814 = vpack.c.bf16 %v798, %v798
        %v815 = vpack.c.bf16 %v799, %v799
        %s816 = scalar_lea.vmem [#allocation2], 64
        %817 = vst.msk [vmem:[%s816] sm:$0xf] %vm660, %v800
        %818 = vst.msk [vmem:[%s816 + $0x4] sm:$0xf] %vm660, %v801
        %819 = vst.msk [vmem:[%s816 + $0x8] sm:$0xf] %vm660, %v802
        %820 = vst.msk [vmem:[%s816 + $0xc] sm:$0xf] %vm660, %v803
        %821 = vst.msk [vmem:[%s816 + $0x10] sm:$0xf] %vm660, %v804
        %822 = vst.msk [vmem:[%s816 + $0x14] sm:$0xf] %vm660, %v805
        %823 = vst.msk [vmem:[%s816 + $0x18] sm:$0xf] %vm660, %v806
        %824 = vst.msk [vmem:[%s816 + $0x1c] sm:$0xf] %vm660, %v807
        %825 = vst.msk [vmem:[%s816 + $0x20] sm:$0xf] %vm660, %v808
        %826 = vst.msk [vmem:[%s816 + $0x24] sm:$0xf] %vm660, %v809
        %827 = vst.msk [vmem:[%s816 + $0x28] sm:$0xf] %vm660, %v810
        %828 = vst.msk [vmem:[%s816 + $0x2c] sm:$0xf] %vm660, %v811
        %829 = vst.msk [vmem:[%s816 + $0x30] sm:$0xf] %vm660, %v812
        %830 = vst.msk [vmem:[%s816 + $0x34] sm:$0xf] %vm660, %v813
        %831 = vst.msk [vmem:[%s816 + $0x38] sm:$0xf] %vm660, %v814
        %832 = vst.msk [vmem:[%s816 + $0x3c] sm:$0xf] %vm660, %v815
        %833 = vst [vmem:[#allocation3] sm:$0xff] -inf
        %834 = vst [vmem:[#allocation3 + $0x8] sm:$0xff] -inf
        %v835 = vld [vmem:[#allocation2] sm:$0xf]
        %v836 = vld [vmem:[#allocation2 + $0x4] sm:$0xf]
        %v837 = vld [vmem:[#allocation2 + $0x8] sm:$0xf]
        %v838 = vld [vmem:[#allocation2 + $0xc] sm:$0xf]
        %v839 = vld [vmem:[#allocation2 + $0x10] sm:$0xf]
        %v840 = vld [vmem:[#allocation2 + $0x14] sm:$0xf]
        %v841 = vld [vmem:[#allocation2 + $0x18] sm:$0xf]
        %v842 = vld [vmem:[#allocation2 + $0x1c] sm:$0xf]
        %v843 = vld [vmem:[#allocation2 + $0x20] sm:$0xf]
        %v844 = vld [vmem:[#allocation2 + $0x24] sm:$0xf]
        %v845 = vld [vmem:[#allocation2 + $0x28] sm:$0xf]
        %v846 = vld [vmem:[#allocation2 + $0x2c] sm:$0xf]
        %v847 = vld [vmem:[#allocation2 + $0x30] sm:$0xf]
        %v848 = vld [vmem:[#allocation2 + $0x34] sm:$0xf]
        %v849 = vld [vmem:[#allocation2 + $0x38] sm:$0xf]
        %v850 = vld [vmem:[#allocation2 + $0x3c] sm:$0xf]
        %v851 = vld [vmem:[#allocation2 + $0x40] sm:$0xf]
        %v852 = vld [vmem:[#allocation2 + $0x44] sm:$0xf]
        %v853 = vld [vmem:[#allocation2 + $0x48] sm:$0xf]
        %v854 = vld [vmem:[#allocation2 + $0x4c] sm:$0xf]
        %v855 = vld [vmem:[#allocation2 + $0x50] sm:$0xf]
        %v856 = vld [vmem:[#allocation2 + $0x54] sm:$0xf]
        %v857 = vld [vmem:[#allocation2 + $0x58] sm:$0xf]
        %v858 = vld [vmem:[#allocation2 + $0x5c] sm:$0xf]
        %v859 = vld [vmem:[#allocation2 + $0x60] sm:$0xf]
        %v860 = vld [vmem:[#allocation2 + $0x64] sm:$0xf]
        %v861 = vld [vmem:[#allocation2 + $0x68] sm:$0xf]
        %v862 = vld [vmem:[#allocation2 + $0x6c] sm:$0xf]
        %v863 = vld [vmem:[#allocation2 + $0x70] sm:$0xf]
        %v864 = vld [vmem:[#allocation2 + $0x74] sm:$0xf]
        %v865 = vld [vmem:[#allocation2 + $0x78] sm:$0xf]
        %v866 = vld [vmem:[#allocation2 + $0x7c] sm:$0xf]
        %v867 = vld [vmem:[#allocation4] sm:$0xf]
        %v868 = vld [vmem:[#allocation4 + $0x4] sm:$0xf]
        %v869 = vld [vmem:[#allocation4 + $0x8] sm:$0xf]
        %v870 = vld [vmem:[#allocation4 + $0xc] sm:$0xf]
        %v871 = vld [vmem:[#allocation4 + $0x10] sm:$0xf]
        %v872 = vld [vmem:[#allocation4 + $0x14] sm:$0xf]
        %v873 = vld [vmem:[#allocation4 + $0x18] sm:$0xf]
        %v874 = vld [vmem:[#allocation4 + $0x1c] sm:$0xf]
        %v875 = vld [vmem:[#allocation6] sm:$0x1]
        %v877 = vperm.slane %v875, 0
        %v911 = vunpack.c.l.b16 %v835
        %v912 = vunpack.c.l.b16 %v836
        %v913 = vunpack.c.l.b16 %v837
        %v914 = vunpack.c.l.b16 %v838
        %v915 = vunpack.c.l.b16 %v839
        %v916 = vunpack.c.l.b16 %v840
        %v917 = vunpack.c.l.b16 %v841
        %v918 = vunpack.c.l.b16 %v842
        %v919 = vunpack.c.l.b16 %v843
        %v920 = vunpack.c.l.b16 %v844
        %v921 = vunpack.c.l.b16 %v845
        %v922 = vunpack.c.l.b16 %v846
        %v923 = vunpack.c.l.b16 %v847
        %v924 = vunpack.c.l.b16 %v848
        %v925 = vunpack.c.l.b16 %v849
        %v926 = vunpack.c.l.b16 %v850
        %v927 = vunpack.c.l.b16 %v851
        %v928 = vunpack.c.l.b16 %v852
        %v929 = vunpack.c.l.b16 %v853
        %v930 = vunpack.c.l.b16 %v854
        %v931 = vunpack.c.l.b16 %v855
        %v932 = vunpack.c.l.b16 %v856
        %v933 = vunpack.c.l.b16 %v857
        %v934 = vunpack.c.l.b16 %v858
        %v935 = vunpack.c.l.b16 %v859
        %v936 = vunpack.c.l.b16 %v860
        %v937 = vunpack.c.l.b16 %v861
        %v938 = vunpack.c.l.b16 %v862
        %v939 = vunpack.c.l.b16 %v863
        %v940 = vunpack.c.l.b16 %v864
        %v941 = vunpack.c.l.b16 %v865
        %v942 = vunpack.c.l.b16 %v866
        %v943 = vpack.c.b16 %v912, %v911
        %v944 = vpack.c.b16 %v914, %v913
        %v945 = vpack.c.b16 %v916, %v915
        %v946 = vpack.c.b16 %v918, %v917
        %v947 = vpack.c.b16 %v920, %v919
        %v948 = vpack.c.b16 %v922, %v921
        %v949 = vpack.c.b16 %v924, %v923
        %v950 = vpack.c.b16 %v926, %v925
        %v951 = vpack.c.b16 %v928, %v927
        %v952 = vpack.c.b16 %v930, %v929
        %v953 = vpack.c.b16 %v932, %v931
        %v954 = vpack.c.b16 %v934, %v933
        %v955 = vpack.c.b16 %v936, %v935
        %v956 = vpack.c.b16 %v938, %v937
        %v957 = vpack.c.b16 %v940, %v939
        %v958 = vpack.c.b16 %v942, %v941
        %v967 = vunpack.c.l.b16 %v867
        %v968 = vunpack.c.l.b16 %v868
        %v969 = vunpack.c.l.b16 %v869
        %v970 = vunpack.c.l.b16 %v870
        %v971 = vunpack.c.l.b16 %v871
        %v972 = vunpack.c.l.b16 %v872
        %v973 = vunpack.c.l.b16 %v873
        %v974 = vunpack.c.l.b16 %v874
        %v975 = vpack.c.b16 %v968, %v967
        %v976 = vpack.c.b16 %v970, %v969
        %v977 = vpack.c.b16 %v972, %v971
        %v978 = vpack.c.b16 %v974, %v973
        %vm983 = vcmask 523264
        %v985 = vsel %vm983, %v943, 0
        %v988 = vsel %vm983, %v944, 0
        %v991 = vsel %vm983, %v945, 0
        %v994 = vsel %vm983, %v946, 0
        %v997 = vsel %vm983, %v947, 0
        %v1000 = vsel %vm983, %v948, 0
        %v1003 = vsel %vm983, %v949, 0
        %v1006 = vsel %vm983, %v950, 0
        %v1009 = vsel %vm983, %v951, 0
        %v1012 = vsel %vm983, %v952, 0
        %v1015 = vsel %vm983, %v953, 0
        %v1018 = vsel %vm983, %v954, 0
        %v1021 = vsel %vm983, %v955, 0
        %v1024 = vsel %vm983, %v956, 0
        %v1027 = vsel %vm983, %v957, 0
        %v1030 = vsel %vm983, %v958, 0
        %1032 = vmatpush.bf16.msra.mxu0 0
        %1033 = vmatpush.bf16.msra.mxu0 0
        %1034 = vmatpush.bf16.msra.mxu0 0
        %1035 = vmatpush.bf16.msra.mxu0 0
        %1036 = vmatpush.bf16.msra.mxu0 %v978
        %1037 = vmatpush.bf16.msra.mxu0 %v977
        %1038 = vmatpush.bf16.msra.mxu0 %v976
        %1039 = vmatpush.bf16.msra.mxu0 %v975
        %1040 = vmatmul.bf16.gmra.mxu0 %v985
        %v1041 = vpop.f32.mrf.mxu0
        %v1042 = vadd.f32 %v877, %v1041
        %v1043 = vpop.f32.mrf.mxu0
        %v1044 = vadd.f32 %v877, %v1043
        %1045 = vmatmul.bf16.gmra.mxu0 %v988
        %v1046 = vpop.f32.mrf.mxu0
        %v1047 = vadd.f32 %v877, %v1046
        %v1048 = vpop.f32.mrf.mxu0
        %v1049 = vadd.f32 %v877, %v1048
        %1050 = vmatmul.bf16.gmra.mxu0 %v991
        %v1051 = vpop.f32.mrf.mxu0
        %v1052 = vadd.f32 %v877, %v1051
        %v1053 = vpop.f32.mrf.mxu0
        %v1054 = vadd.f32 %v877, %v1053
        %1055 = vmatmul.bf16.gmra.mxu0 %v994
        %v1056 = vpop.f32.mrf.mxu0
        %v1057 = vadd.f32 %v877, %v1056
        %v1058 = vpop.f32.mrf.mxu0
        %v1059 = vadd.f32 %v877, %v1058
        %1060 = vmatmul.bf16.gmra.mxu0 %v997
        %v1061 = vpop.f32.mrf.mxu0
        %v1062 = vadd.f32 %v877, %v1061
        %v1063 = vpop.f32.mrf.mxu0
        %v1064 = vadd.f32 %v877, %v1063
        %1065 = vmatmul.bf16.gmra.mxu0 %v1000
        %v1066 = vpop.f32.mrf.mxu0
        %v1067 = vadd.f32 %v877, %v1066
        %v1068 = vpop.f32.mrf.mxu0
        %v1069 = vadd.f32 %v877, %v1068
        %1070 = vmatmul.bf16.gmra.mxu0 %v1003
        %v1071 = vpop.f32.mrf.mxu0
        %v1072 = vadd.f32 %v877, %v1071
        %v1073 = vpop.f32.mrf.mxu0
        %v1074 = vadd.f32 %v877, %v1073
        %1075 = vmatmul.bf16.gmra.mxu0 %v1006
        %v1076 = vpop.f32.mrf.mxu0
        %v1077 = vadd.f32 %v877, %v1076
        %v1078 = vpop.f32.mrf.mxu0
        %v1079 = vadd.f32 %v877, %v1078
        %1080 = vmatmul.bf16.gmra.mxu0 %v1009
        %v1081 = vpop.f32.mrf.mxu0
        %v1082 = vadd.f32 %v877, %v1081
        %v1083 = vpop.f32.mrf.mxu0
        %v1084 = vadd.f32 %v877, %v1083
        %1085 = vmatmul.bf16.gmra.mxu0 %v1012
        %v1086 = vpop.f32.mrf.mxu0
        %v1087 = vadd.f32 %v877, %v1086
        %v1088 = vpop.f32.mrf.mxu0
        %v1089 = vadd.f32 %v877, %v1088
        %1090 = vmatmul.bf16.gmra.mxu0 %v1015
        %v1091 = vpop.f32.mrf.mxu0
        %v1092 = vadd.f32 %v877, %v1091
        %v1093 = vpop.f32.mrf.mxu0
        %v1094 = vadd.f32 %v877, %v1093
        %1095 = vmatmul.bf16.gmra.mxu0 %v1018
        %v1096 = vpop.f32.mrf.mxu0
        %v1097 = vadd.f32 %v877, %v1096
        %v1098 = vpop.f32.mrf.mxu0
        %v1099 = vadd.f32 %v877, %v1098
        %1100 = vmatmul.bf16.gmra.mxu0 %v1021
        %v1101 = vpop.f32.mrf.mxu0
        %v1102 = vadd.f32 %v877, %v1101
        %v1103 = vpop.f32.mrf.mxu0
        %v1104 = vadd.f32 %v877, %v1103
        %1105 = vmatmul.bf16.gmra.mxu0 %v1024
        %v1106 = vpop.f32.mrf.mxu0
        %v1107 = vadd.f32 %v877, %v1106
        %v1108 = vpop.f32.mrf.mxu0
        %v1109 = vadd.f32 %v877, %v1108
        %1110 = vmatmul.bf16.gmra.mxu0 %v1027
        %v1111 = vpop.f32.mrf.mxu0
        %v1112 = vadd.f32 %v877, %v1111
        %v1113 = vpop.f32.mrf.mxu0
        %v1114 = vadd.f32 %v877, %v1113
        %1115 = vmatmul.bf16.gmra.mxu0 %v1030
        %v1116 = vpop.f32.mrf.mxu0
        %v1117 = vadd.f32 %v877, %v1116
        %v1118 = vpop.f32.mrf.mxu0
        %v1119 = vadd.f32 %v877, %v1118
        %1120 = vdwg.mxu0
        %v1121 = vmax.f32 %v1042, 0.0
        %v1122 = vmax.f32 %v1044, 0.0
        %v1123 = vmax.f32 %v1047, 0.0
        %v1124 = vmax.f32 %v1049, 0.0
        %v1125 = vmax.f32 %v1052, 0.0
        %v1126 = vmax.f32 %v1054, 0.0
        %v1127 = vmax.f32 %v1057, 0.0
        %v1128 = vmax.f32 %v1059, 0.0
        %v1129 = vmax.f32 %v1062, 0.0
        %v1130 = vmax.f32 %v1064, 0.0
        %v1131 = vmax.f32 %v1067, 0.0
        %v1132 = vmax.f32 %v1069, 0.0
        %v1133 = vmax.f32 %v1072, 0.0
        %v1134 = vmax.f32 %v1074, 0.0
        %v1135 = vmax.f32 %v1077, 0.0
        %v1136 = vmax.f32 %v1079, 0.0
        %v1137 = vmax.f32 %v1082, 0.0
        %v1138 = vmax.f32 %v1084, 0.0
        %v1139 = vmax.f32 %v1087, 0.0
        %v1140 = vmax.f32 %v1089, 0.0
        %v1141 = vmax.f32 %v1092, 0.0
        %v1142 = vmax.f32 %v1094, 0.0
        %v1143 = vmax.f32 %v1097, 0.0
        %v1144 = vmax.f32 %v1099, 0.0
        %v1145 = vmax.f32 %v1102, 0.0
        %v1146 = vmax.f32 %v1104, 0.0
        %v1147 = vmax.f32 %v1107, 0.0
        %v1148 = vmax.f32 %v1109, 0.0
        %v1149 = vmax.f32 %v1112, 0.0
        %v1150 = vmax.f32 %v1114, 0.0
        %v1151 = vmax.f32 %v1117, 0.0
        %v1152 = vmax.f32 %v1119, 0.0
        %v1153 = vpack.c.bf16 %v1122, %v1121
        %v1154 = vpack.c.bf16 %v1124, %v1123
        %v1155 = vpack.c.bf16 %v1126, %v1125
        %v1156 = vpack.c.bf16 %v1128, %v1127
        %v1157 = vpack.c.bf16 %v1130, %v1129
        %v1158 = vpack.c.bf16 %v1132, %v1131
        %v1159 = vpack.c.bf16 %v1134, %v1133
        %v1160 = vpack.c.bf16 %v1136, %v1135
        %v1161 = vpack.c.bf16 %v1138, %v1137
        %v1162 = vpack.c.bf16 %v1140, %v1139
        %v1163 = vpack.c.bf16 %v1142, %v1141
        %v1164 = vpack.c.bf16 %v1144, %v1143
        %v1165 = vpack.c.bf16 %v1146, %v1145
        %v1166 = vpack.c.bf16 %v1148, %v1147
        %v1167 = vpack.c.bf16 %v1150, %v1149
        %v1168 = vpack.c.bf16 %v1152, %v1151
        %v1169 = vld [vmem:[#allocation8] sm:$0xff]
        %v1170 = vld [vmem:[#allocation8 + $0x8] sm:$0xff]
        %v1171 = vld [vmem:[#allocation8 + $0x10] sm:$0xff]
        %v1172 = vld [vmem:[#allocation8 + $0x18] sm:$0xff]
        %v1173 = vld [vmem:[#allocation8 + $0x20] sm:$0xff]
        %v1174 = vld [vmem:[#allocation8 + $0x28] sm:$0xff]
        %v1175 = vld [vmem:[#allocation8 + $0x30] sm:$0xff]
        %v1176 = vld [vmem:[#allocation8 + $0x38] sm:$0xff]
        %v1177 = vld [vmem:[#allocation8 + $0x40] sm:$0xff]
        %v1178 = vld [vmem:[#allocation8 + $0x48] sm:$0xff]
        %v1179 = vld [vmem:[#allocation8 + $0x50] sm:$0xff]
        %v1180 = vld [vmem:[#allocation8 + $0x58] sm:$0xff]
        %v1181 = vld [vmem:[#allocation8 + $0x60] sm:$0xff]
        %v1182 = vld [vmem:[#allocation8 + $0x68] sm:$0xff]
        %v1183 = vld [vmem:[#allocation8 + $0x70] sm:$0xff]
        %v1184 = vld [vmem:[#allocation8 + $0x78] sm:$0xff]
        %v1185 = vld [vmem:[#allocation8 + $0x80] sm:$0xff]
        %v1186 = vld [vmem:[#allocation8 + $0x88] sm:$0xff]
        %v1187 = vld [vmem:[#allocation8 + $0x90] sm:$0xff]
        %v1188 = vld [vmem:[#allocation8 + $0x98] sm:$0xff]
        %v1189 = vld [vmem:[#allocation8 + $0xa0] sm:$0xff]
        %v1190 = vld [vmem:[#allocation8 + $0xa8] sm:$0xff]
        %v1191 = vld [vmem:[#allocation8 + $0xb0] sm:$0xff]
        %v1192 = vld [vmem:[#allocation8 + $0xb8] sm:$0xff]
        %v1193 = vld [vmem:[#allocation8 + $0xc0] sm:$0xff]
        %v1194 = vld [vmem:[#allocation8 + $0xc8] sm:$0xff]
        %v1195 = vld [vmem:[#allocation8 + $0xd0] sm:$0xff]
        %v1196 = vld [vmem:[#allocation8 + $0xd8] sm:$0xff]
        %v1197 = vld [vmem:[#allocation8 + $0xe0] sm:$0xff]
        %v1198 = vld [vmem:[#allocation8 + $0xe8] sm:$0xff]
        %v1199 = vld [vmem:[#allocation8 + $0xf0] sm:$0xff]
        %v1200 = vld [vmem:[#allocation8 + $0xf8] sm:$0xff]
        %v1201 = vld [vmem:[#allocation8 + $0x100] sm:$0xff]
        %v1202 = vld [vmem:[#allocation8 + $0x108] sm:$0xff]
        %v1203 = vld [vmem:[#allocation8 + $0x110] sm:$0xff]
        %v1204 = vld [vmem:[#allocation8 + $0x118] sm:$0xff]
        %v1205 = vld [vmem:[#allocation8 + $0x120] sm:$0xff]
        %v1206 = vld [vmem:[#allocation8 + $0x128] sm:$0xff]
        %v1207 = vld [vmem:[#allocation8 + $0x130] sm:$0xff]
        %v1208 = vld [vmem:[#allocation8 + $0x138] sm:$0xff]
        %v1209 = vld [vmem:[#allocation8 + $0x140] sm:$0xff]
        %v1210 = vld [vmem:[#allocation8 + $0x148] sm:$0xff]
        %v1211 = vld [vmem:[#allocation8 + $0x150] sm:$0xff]
        %v1212 = vld [vmem:[#allocation8 + $0x158] sm:$0xff]
        %v1213 = vld [vmem:[#allocation8 + $0x160] sm:$0xff]
        %v1214 = vld [vmem:[#allocation8 + $0x168] sm:$0xff]
        %v1215 = vld [vmem:[#allocation8 + $0x170] sm:$0xff]
        %v1216 = vld [vmem:[#allocation8 + $0x178] sm:$0xff]
        %v1217 = vld [vmem:[#allocation8 + $0x180] sm:$0xff]
        %v1218 = vld [vmem:[#allocation8 + $0x188] sm:$0xff]
        %v1219 = vld [vmem:[#allocation8 + $0x190] sm:$0xff]
        %v1220 = vld [vmem:[#allocation8 + $0x198] sm:$0xff]
        %v1221 = vld [vmem:[#allocation8 + $0x1a0] sm:$0xff]
        %v1222 = vld [vmem:[#allocation8 + $0x1a8] sm:$0xff]
        %v1223 = vld [vmem:[#allocation8 + $0x1b0] sm:$0xff]
        %v1224 = vld [vmem:[#allocation8 + $0x1b8] sm:$0xff]
        %v1225 = vld [vmem:[#allocation8 + $0x1c0] sm:$0xff]
        %v1226 = vld [vmem:[#allocation8 + $0x1c8] sm:$0xff]
        %v1227 = vld [vmem:[#allocation8 + $0x1d0] sm:$0xff]
        %v1228 = vld [vmem:[#allocation8 + $0x1d8] sm:$0xff]
        %v1229 = vld [vmem:[#allocation8 + $0x1e0] sm:$0xff]
        %v1230 = vld [vmem:[#allocation8 + $0x1e8] sm:$0xff]
        %v1231 = vld [vmem:[#allocation8 + $0x1f0] sm:$0xff]
        %v1232 = vld [vmem:[#allocation8 + $0x1f8] sm:$0xff]
        %v1297 = vunpack.c.l.b16 %v1169
        %v1298 = vunpack.c.h.b16 %v1169
        %v1299 = vunpack.c.l.b16 %v1170
        %v1300 = vunpack.c.h.b16 %v1170
        %v1301 = vunpack.c.l.b16 %v1171
        %v1302 = vunpack.c.h.b16 %v1171
        %v1303 = vunpack.c.l.b16 %v1172
        %v1304 = vunpack.c.h.b16 %v1172
        %v1305 = vunpack.c.l.b16 %v1173
        %v1306 = vunpack.c.h.b16 %v1173
        %v1307 = vunpack.c.l.b16 %v1174
        %v1308 = vunpack.c.h.b16 %v1174
        %v1309 = vunpack.c.l.b16 %v1175
        %v1310 = vunpack.c.h.b16 %v1175
        %v1311 = vunpack.c.l.b16 %v1176
        %v1312 = vunpack.c.h.b16 %v1176
        %v1313 = vunpack.c.l.b16 %v1177
        %v1314 = vunpack.c.h.b16 %v1177
        %v1315 = vunpack.c.l.b16 %v1178
        %v1316 = vunpack.c.h.b16 %v1178
        %v1317 = vunpack.c.l.b16 %v1179
        %v1318 = vunpack.c.h.b16 %v1179
        %v1319 = vunpack.c.l.b16 %v1180
        %v1320 = vunpack.c.h.b16 %v1180
        %v1321 = vunpack.c.l.b16 %v1181
        %v1322 = vunpack.c.h.b16 %v1181
        %v1323 = vunpack.c.l.b16 %v1182
        %v1324 = vunpack.c.h.b16 %v1182
        %v1325 = vunpack.c.l.b16 %v1183
        %v1326 = vunpack.c.h.b16 %v1183
        %v1327 = vunpack.c.l.b16 %v1184
        %v1328 = vunpack.c.h.b16 %v1184
        %v1329 = vunpack.c.l.b16 %v1185
        %v1330 = vunpack.c.h.b16 %v1185
        %v1331 = vunpack.c.l.b16 %v1186
        %v1332 = vunpack.c.h.b16 %v1186
        %v1333 = vunpack.c.l.b16 %v1187
        %v1334 = vunpack.c.h.b16 %v1187
        %v1335 = vunpack.c.l.b16 %v1188
        %v1336 = vunpack.c.h.b16 %v1188
        %v1337 = vunpack.c.l.b16 %v1189
        %v1338 = vunpack.c.h.b16 %v1189
        %v1339 = vunpack.c.l.b16 %v1190
        %v1340 = vunpack.c.h.b16 %v1190
        %v1341 = vunpack.c.l.b16 %v1191
        %v1342 = vunpack.c.h.b16 %v1191
        %v1343 = vunpack.c.l.b16 %v1192
        %v1344 = vunpack.c.h.b16 %v1192
        %v1345 = vunpack.c.l.b16 %v1193
        %v1346 = vunpack.c.h.b16 %v1193
        %v1347 = vunpack.c.l.b16 %v1194
        %v1348 = vunpack.c.h.b16 %v1194
        %v1349 = vunpack.c.l.b16 %v1195
        %v1350 = vunpack.c.h.b16 %v1195
        %v1351 = vunpack.c.l.b16 %v1196
        %v1352 = vunpack.c.h.b16 %v1196
        %v1353 = vunpack.c.l.b16 %v1197
        %v1354 = vunpack.c.h.b16 %v1197
        %v1355 = vunpack.c.l.b16 %v1198
        %v1356 = vunpack.c.h.b16 %v1198
        %v1357 = vunpack.c.l.b16 %v1199
        %v1358 = vunpack.c.h.b16 %v1199
        %v1359 = vunpack.c.l.b16 %v1200
        %v1360 = vunpack.c.h.b16 %v1200
        %v1361 = vunpack.c.l.b16 %v1201
        %v1362 = vunpack.c.h.b16 %v1201
        %v1363 = vunpack.c.l.b16 %v1202
        %v1364 = vunpack.c.h.b16 %v1202
        %v1365 = vunpack.c.l.b16 %v1203
        %v1366 = vunpack.c.h.b16 %v1203
        %v1367 = vunpack.c.l.b16 %v1204
        %v1368 = vunpack.c.h.b16 %v1204
        %v1369 = vunpack.c.l.b16 %v1205
        %v1370 = vunpack.c.h.b16 %v1205
        %v1371 = vunpack.c.l.b16 %v1206
        %v1372 = vunpack.c.h.b16 %v1206
        %v1373 = vunpack.c.l.b16 %v1207
        %v1374 = vunpack.c.h.b16 %v1207
        %v1375 = vunpack.c.l.b16 %v1208
        %v1376 = vunpack.c.h.b16 %v1208
        %v1377 = vunpack.c.l.b16 %v1209
        %v1378 = vunpack.c.h.b16 %v1209
        %v1379 = vunpack.c.l.b16 %v1210
        %v1380 = vunpack.c.h.b16 %v1210
        %v1381 = vunpack.c.l.b16 %v1211
        %v1382 = vunpack.c.h.b16 %v1211
        %v1383 = vunpack.c.l.b16 %v1212
        %v1384 = vunpack.c.h.b16 %v1212
        %v1385 = vunpack.c.l.b16 %v1213
        %v1386 = vunpack.c.h.b16 %v1213
        %v1387 = vunpack.c.l.b16 %v1214
        %v1388 = vunpack.c.h.b16 %v1214
        %v1389 = vunpack.c.l.b16 %v1215
        %v1390 = vunpack.c.h.b16 %v1215
        %v1391 = vunpack.c.l.b16 %v1216
        %v1392 = vunpack.c.h.b16 %v1216
        %v1393 = vunpack.c.l.b16 %v1217
        %v1394 = vunpack.c.h.b16 %v1217
        %v1395 = vunpack.c.l.b16 %v1218
        %v1396 = vunpack.c.h.b16 %v1218
        %v1397 = vunpack.c.l.b16 %v1219
        %v1398 = vunpack.c.h.b16 %v1219
        %v1399 = vunpack.c.l.b16 %v1220
        %v1400 = vunpack.c.h.b16 %v1220
        %v1401 = vunpack.c.l.b16 %v1221
        %v1402 = vunpack.c.h.b16 %v1221
        %v1403 = vunpack.c.l.b16 %v1222
        %v1404 = vunpack.c.h.b16 %v1222
        %v1405 = vunpack.c.l.b16 %v1223
        %v1406 = vunpack.c.h.b16 %v1223
        %v1407 = vunpack.c.l.b16 %v1224
        %v1408 = vunpack.c.h.b16 %v1224
        %v1409 = vunpack.c.l.b16 %v1225
        %v1410 = vunpack.c.h.b16 %v1225
        %v1411 = vunpack.c.l.b16 %v1226
        %v1412 = vunpack.c.h.b16 %v1226
        %v1413 = vunpack.c.l.b16 %v1227
        %v1414 = vunpack.c.h.b16 %v1227
        %v1415 = vunpack.c.l.b16 %v1228
        %v1416 = vunpack.c.h.b16 %v1228
        %v1417 = vunpack.c.l.b16 %v1229
        %v1418 = vunpack.c.h.b16 %v1229
        %v1419 = vunpack.c.l.b16 %v1230
        %v1420 = vunpack.c.h.b16 %v1230
        %v1421 = vunpack.c.l.b16 %v1231
        %v1422 = vunpack.c.h.b16 %v1231
        %v1423 = vunpack.c.l.b16 %v1232
        %v1424 = vunpack.c.h.b16 %v1232
        %v1425 = vpack.c.b16 %v1305, %v1297
        %v1426 = vpack.c.b16 %v1306, %v1298
        %v1427 = vpack.c.b16 %v1307, %v1299
        %v1428 = vpack.c.b16 %v1308, %v1300
        %v1429 = vpack.c.b16 %v1309, %v1301
        %v1430 = vpack.c.b16 %v1310, %v1302
        %v1431 = vpack.c.b16 %v1311, %v1303
        %v1432 = vpack.c.b16 %v1312, %v1304
        %v1433 = vpack.c.b16 %v1321, %v1313
        %v1434 = vpack.c.b16 %v1322, %v1314
        %v1435 = vpack.c.b16 %v1323, %v1315
        %v1436 = vpack.c.b16 %v1324, %v1316
        %v1437 = vpack.c.b16 %v1325, %v1317
        %v1438 = vpack.c.b16 %v1326, %v1318
        %v1439 = vpack.c.b16 %v1327, %v1319
        %v1440 = vpack.c.b16 %v1328, %v1320
        %v1441 = vpack.c.b16 %v1337, %v1329
        %v1442 = vpack.c.b16 %v1338, %v1330
        %v1443 = vpack.c.b16 %v1339, %v1331
        %v1444 = vpack.c.b16 %v1340, %v1332
        %v1445 = vpack.c.b16 %v1341, %v1333
        %v1446 = vpack.c.b16 %v1342, %v1334
        %v1447 = vpack.c.b16 %v1343, %v1335
        %v1448 = vpack.c.b16 %v1344, %v1336
        %v1449 = vpack.c.b16 %v1353, %v1345
        %v1450 = vpack.c.b16 %v1354, %v1346
        %v1451 = vpack.c.b16 %v1355, %v1347
        %v1452 = vpack.c.b16 %v1356, %v1348
        %v1453 = vpack.c.b16 %v1357, %v1349
        %v1454 = vpack.c.b16 %v1358, %v1350
        %v1455 = vpack.c.b16 %v1359, %v1351
        %v1456 = vpack.c.b16 %v1360, %v1352
        %v1457 = vpack.c.b16 %v1369, %v1361
        %v1458 = vpack.c.b16 %v1370, %v1362
        %v1459 = vpack.c.b16 %v1371, %v1363
        %v1460 = vpack.c.b16 %v1372, %v1364
        %v1461 = vpack.c.b16 %v1373, %v1365
        %v1462 = vpack.c.b16 %v1374, %v1366
        %v1463 = vpack.c.b16 %v1375, %v1367
        %v1464 = vpack.c.b16 %v1376, %v1368
        %v1465 = vpack.c.b16 %v1385, %v1377
        %v1466 = vpack.c.b16 %v1386, %v1378
        %v1467 = vpack.c.b16 %v1387, %v1379
        %v1468 = vpack.c.b16 %v1388, %v1380
        %v1469 = vpack.c.b16 %v1389, %v1381
        %v1470 = vpack.c.b16 %v1390, %v1382
        %v1471 = vpack.c.b16 %v1391, %v1383
        %v1472 = vpack.c.b16 %v1392, %v1384
        %v1473 = vpack.c.b16 %v1401, %v1393
        %v1474 = vpack.c.b16 %v1402, %v1394
        %v1475 = vpack.c.b16 %v1403, %v1395
        %v1476 = vpack.c.b16 %v1404, %v1396
        %v1477 = vpack.c.b16 %v1405, %v1397
        %v1478 = vpack.c.b16 %v1406, %v1398
        %v1479 = vpack.c.b16 %v1407, %v1399
        %v1480 = vpack.c.b16 %v1408, %v1400
        %v1481 = vpack.c.b16 %v1417, %v1409
        %v1482 = vpack.c.b16 %v1418, %v1410
        %v1483 = vpack.c.b16 %v1419, %v1411
        %v1484 = vpack.c.b16 %v1420, %v1412
        %v1485 = vpack.c.b16 %v1421, %v1413
        %v1486 = vpack.c.b16 %v1422, %v1414
        %v1487 = vpack.c.b16 %v1423, %v1415
        %v1488 = vpack.c.b16 %v1424, %v1416
        %1553 = vmatpush.bf16.msra.mxu0 %v1481
        %1554 = vmatpush.bf16.msra.mxu0 %v1473
        %1555 = vmatpush.bf16.msra.mxu0 %v1465
        %1556 = vmatpush.bf16.msra.mxu0 %v1457
        %1557 = vmatpush.bf16.msra.mxu0 %v1449
        %1558 = vmatpush.bf16.msra.mxu0 %v1441
        %1559 = vmatpush.bf16.msra.mxu0 %v1433
        %1560 = vmatpush.bf16.msra.mxu0 %v1425
        %1561 = vmatmul.bf16.gmra.mxu0 %v1153
        %v1562 = vpop.f32.mrf.mxu0
        %v1563 = vadd.f32 0.0, %v1562
        %v1564 = vpop.f32.mrf.mxu0
        %v1565 = vadd.f32 0.0, %v1564
        %1566 = vmatmul.bf16.gmra.mxu0 %v1154
        %v1567 = vpop.f32.mrf.mxu0
        %v1568 = vadd.f32 0.0, %v1567
        %v1569 = vpop.f32.mrf.mxu0
        %v1570 = vadd.f32 0.0, %v1569
        %1571 = vmatmul.bf16.gmra.mxu0 %v1155
        %v1572 = vpop.f32.mrf.mxu0
        %v1573 = vadd.f32 0.0, %v1572
        %v1574 = vpop.f32.mrf.mxu0
        %v1575 = vadd.f32 0.0, %v1574
        %1576 = vmatmul.bf16.gmra.mxu0 %v1156
        %v1577 = vpop.f32.mrf.mxu0
        %v1578 = vadd.f32 0.0, %v1577
        %v1579 = vpop.f32.mrf.mxu0
        %v1580 = vadd.f32 0.0, %v1579
        %1581 = vmatmul.bf16.gmra.mxu0 %v1157
        %v1582 = vpop.f32.mrf.mxu0
        %v1583 = vadd.f32 0.0, %v1582
        %v1584 = vpop.f32.mrf.mxu0
        %v1585 = vadd.f32 0.0, %v1584
        %1586 = vmatmul.bf16.gmra.mxu0 %v1158
        %v1587 = vpop.f32.mrf.mxu0
        %v1588 = vadd.f32 0.0, %v1587
        %v1589 = vpop.f32.mrf.mxu0
        %v1590 = vadd.f32 0.0, %v1589
        %1591 = vmatmul.bf16.gmra.mxu0 %v1159
        %v1592 = vpop.f32.mrf.mxu0
        %v1593 = vadd.f32 0.0, %v1592
        %v1594 = vpop.f32.mrf.mxu0
        %v1595 = vadd.f32 0.0, %v1594
        %1596 = vmatmul.bf16.gmra.mxu0 %v1160
        %v1597 = vpop.f32.mrf.mxu0
        %v1598 = vadd.f32 0.0, %v1597
        %v1599 = vpop.f32.mrf.mxu0
        %v1600 = vadd.f32 0.0, %v1599
        %1601 = vmatmul.bf16.gmra.mxu0 %v1161
        %v1602 = vpop.f32.mrf.mxu0
        %v1603 = vadd.f32 0.0, %v1602
        %v1604 = vpop.f32.mrf.mxu0
        %v1605 = vadd.f32 0.0, %v1604
        %1606 = vmatmul.bf16.gmra.mxu0 %v1162
        %v1607 = vpop.f32.mrf.mxu0
        %v1608 = vadd.f32 0.0, %v1607
        %v1609 = vpop.f32.mrf.mxu0
        %v1610 = vadd.f32 0.0, %v1609
        %1611 = vmatmul.bf16.gmra.mxu0 %v1163
        %v1612 = vpop.f32.mrf.mxu0
        %v1613 = vadd.f32 0.0, %v1612
        %v1614 = vpop.f32.mrf.mxu0
        %v1615 = vadd.f32 0.0, %v1614
        %1616 = vmatmul.bf16.gmra.mxu0 %v1164
        %v1617 = vpop.f32.mrf.mxu0
        %v1618 = vadd.f32 0.0, %v1617
        %v1619 = vpop.f32.mrf.mxu0
        %v1620 = vadd.f32 0.0, %v1619
        %1621 = vmatmul.bf16.gmra.mxu0 %v1165
        %v1622 = vpop.f32.mrf.mxu0
        %v1623 = vadd.f32 0.0, %v1622
        %v1624 = vpop.f32.mrf.mxu0
        %v1625 = vadd.f32 0.0, %v1624
        %1626 = vmatmul.bf16.gmra.mxu0 %v1166
        %v1627 = vpop.f32.mrf.mxu0
        %v1628 = vadd.f32 0.0, %v1627
        %v1629 = vpop.f32.mrf.mxu0
        %v1630 = vadd.f32 0.0, %v1629
        %1631 = vmatmul.bf16.gmra.mxu0 %v1167
        %v1632 = vpop.f32.mrf.mxu0
        %v1633 = vadd.f32 0.0, %v1632
        %v1634 = vpop.f32.mrf.mxu0
        %v1635 = vadd.f32 0.0, %v1634
        %1636 = vmatmul.bf16.gmra.mxu0 %v1168
        %v1637 = vpop.f32.mrf.mxu0
        %v1638 = vadd.f32 0.0, %v1637
        %v1639 = vpop.f32.mrf.mxu0
        %v1640 = vadd.f32 0.0, %v1639
        %1641 = vdwg.mxu0
        %1642 = vmatpush.bf16.msra.mxu0 %v1482
        %1643 = vmatpush.bf16.msra.mxu0 %v1474
        %1644 = vmatpush.bf16.msra.mxu0 %v1466
        %1645 = vmatpush.bf16.msra.mxu0 %v1458
        %1646 = vmatpush.bf16.msra.mxu0 %v1450
        %1647 = vmatpush.bf16.msra.mxu0 %v1442
        %1648 = vmatpush.bf16.msra.mxu0 %v1434
        %1649 = vmatpush.bf16.msra.mxu0 %v1426
        %1650 = vmatmul.bf16.gmra.mxu0 %v1153
        %v1651 = vpop.f32.mrf.mxu0
        %v1652 = vadd.f32 0.0, %v1651
        %v1653 = vpop.f32.mrf.mxu0
        %v1654 = vadd.f32 0.0, %v1653
        %1655 = vmatmul.bf16.gmra.mxu0 %v1154
        %v1656 = vpop.f32.mrf.mxu0
        %v1657 = vadd.f32 0.0, %v1656
        %v1658 = vpop.f32.mrf.mxu0
        %v1659 = vadd.f32 0.0, %v1658
        %1660 = vmatmul.bf16.gmra.mxu0 %v1155
        %v1661 = vpop.f32.mrf.mxu0
        %v1662 = vadd.f32 0.0, %v1661
        %v1663 = vpop.f32.mrf.mxu0
        %v1664 = vadd.f32 0.0, %v1663
        %1665 = vmatmul.bf16.gmra.mxu0 %v1156
        %v1666 = vpop.f32.mrf.mxu0
        %v1667 = vadd.f32 0.0, %v1666
        %v1668 = vpop.f32.mrf.mxu0
        %v1669 = vadd.f32 0.0, %v1668
        %1670 = vmatmul.bf16.gmra.mxu0 %v1157
        %v1671 = vpop.f32.mrf.mxu0
        %v1672 = vadd.f32 0.0, %v1671
        %v1673 = vpop.f32.mrf.mxu0
        %v1674 = vadd.f32 0.0, %v1673
        %1675 = vmatmul.bf16.gmra.mxu0 %v1158
        %v1676 = vpop.f32.mrf.mxu0
        %v1677 = vadd.f32 0.0, %v1676
        %v1678 = vpop.f32.mrf.mxu0
        %v1679 = vadd.f32 0.0, %v1678
        %1680 = vmatmul.bf16.gmra.mxu0 %v1159
        %v1681 = vpop.f32.mrf.mxu0
        %v1682 = vadd.f32 0.0, %v1681
        %v1683 = vpop.f32.mrf.mxu0
        %v1684 = vadd.f32 0.0, %v1683
        %1685 = vmatmul.bf16.gmra.mxu0 %v1160
        %v1686 = vpop.f32.mrf.mxu0
        %v1687 = vadd.f32 0.0, %v1686
        %v1688 = vpop.f32.mrf.mxu0
        %v1689 = vadd.f32 0.0, %v1688
        %1690 = vmatmul.bf16.gmra.mxu0 %v1161
        %v1691 = vpop.f32.mrf.mxu0
        %v1692 = vadd.f32 0.0, %v1691
        %v1693 = vpop.f32.mrf.mxu0
        %v1694 = vadd.f32 0.0, %v1693
        %1695 = vmatmul.bf16.gmra.mxu0 %v1162
        %v1696 = vpop.f32.mrf.mxu0
        %v1697 = vadd.f32 0.0, %v1696
        %v1698 = vpop.f32.mrf.mxu0
        %v1699 = vadd.f32 0.0, %v1698
        %1700 = vmatmul.bf16.gmra.mxu0 %v1163
        %v1701 = vpop.f32.mrf.mxu0
        %v1702 = vadd.f32 0.0, %v1701
        %v1703 = vpop.f32.mrf.mxu0
        %v1704 = vadd.f32 0.0, %v1703
        %1705 = vmatmul.bf16.gmra.mxu0 %v1164
        %v1706 = vpop.f32.mrf.mxu0
        %v1707 = vadd.f32 0.0, %v1706
        %v1708 = vpop.f32.mrf.mxu0
        %v1709 = vadd.f32 0.0, %v1708
        %1710 = vmatmul.bf16.gmra.mxu0 %v1165
        %v1711 = vpop.f32.mrf.mxu0
        %v1712 = vadd.f32 0.0, %v1711
        %v1713 = vpop.f32.mrf.mxu0
        %v1714 = vadd.f32 0.0, %v1713
        %1715 = vmatmul.bf16.gmra.mxu0 %v1166
        %v1716 = vpop.f32.mrf.mxu0
        %v1717 = vadd.f32 0.0, %v1716
        %v1718 = vpop.f32.mrf.mxu0
        %v1719 = vadd.f32 0.0, %v1718
        %1720 = vmatmul.bf16.gmra.mxu0 %v1167
        %v1721 = vpop.f32.mrf.mxu0
        %v1722 = vadd.f32 0.0, %v1721
        %v1723 = vpop.f32.mrf.mxu0
        %v1724 = vadd.f32 0.0, %v1723
        %1725 = vmatmul.bf16.gmra.mxu0 %v1168
        %v1726 = vpop.f32.mrf.mxu0
        %v1727 = vadd.f32 0.0, %v1726
        %v1728 = vpop.f32.mrf.mxu0
        %v1729 = vadd.f32 0.0, %v1728
        %1730 = vdwg.mxu0
        %1731 = vmatpush.bf16.msra.mxu0 %v1483
        %1732 = vmatpush.bf16.msra.mxu0 %v1475
        %1733 = vmatpush.bf16.msra.mxu0 %v1467
        %1734 = vmatpush.bf16.msra.mxu0 %v1459
        %1735 = vmatpush.bf16.msra.mxu0 %v1451
        %1736 = vmatpush.bf16.msra.mxu0 %v1443
        %1737 = vmatpush.bf16.msra.mxu0 %v1435
        %1738 = vmatpush.bf16.msra.mxu0 %v1427
        %1739 = vmatmul.bf16.gmra.mxu0 %v1153
        %v1740 = vpop.f32.mrf.mxu0
        %v1741 = vadd.f32 0.0, %v1740
        %v1742 = vpop.f32.mrf.mxu0
        %v1743 = vadd.f32 0.0, %v1742
        %1744 = vmatmul.bf16.gmra.mxu0 %v1154
        %v1745 = vpop.f32.mrf.mxu0
        %v1746 = vadd.f32 0.0, %v1745
        %v1747 = vpop.f32.mrf.mxu0
        %v1748 = vadd.f32 0.0, %v1747
        %1749 = vmatmul.bf16.gmra.mxu0 %v1155
        %v1750 = vpop.f32.mrf.mxu0
        %v1751 = vadd.f32 0.0, %v1750
        %v1752 = vpop.f32.mrf.mxu0
        %v1753 = vadd.f32 0.0, %v1752
        %1754 = vmatmul.bf16.gmra.mxu0 %v1156
        %v1755 = vpop.f32.mrf.mxu0
        %v1756 = vadd.f32 0.0, %v1755
        %v1757 = vpop.f32.mrf.mxu0
        %v1758 = vadd.f32 0.0, %v1757
        %1759 = vmatmul.bf16.gmra.mxu0 %v1157
        %v1760 = vpop.f32.mrf.mxu0
        %v1761 = vadd.f32 0.0, %v1760
        %v1762 = vpop.f32.mrf.mxu0
        %v1763 = vadd.f32 0.0, %v1762
        %1764 = vmatmul.bf16.gmra.mxu0 %v1158
        %v1765 = vpop.f32.mrf.mxu0
        %v1766 = vadd.f32 0.0, %v1765
        %v1767 = vpop.f32.mrf.mxu0
        %v1768 = vadd.f32 0.0, %v1767
        %1769 = vmatmul.bf16.gmra.mxu0 %v1159
        %v1770 = vpop.f32.mrf.mxu0
        %v1771 = vadd.f32 0.0, %v1770
        %v1772 = vpop.f32.mrf.mxu0
        %v1773 = vadd.f32 0.0, %v1772
        %1774 = vmatmul.bf16.gmra.mxu0 %v1160
        %v1775 = vpop.f32.mrf.mxu0
        %v1776 = vadd.f32 0.0, %v1775
        %v1777 = vpop.f32.mrf.mxu0
        %v1778 = vadd.f32 0.0, %v1777
        %1779 = vmatmul.bf16.gmra.mxu0 %v1161
        %v1780 = vpop.f32.mrf.mxu0
        %v1781 = vadd.f32 0.0, %v1780
        %v1782 = vpop.f32.mrf.mxu0
        %v1783 = vadd.f32 0.0, %v1782
        %1784 = vmatmul.bf16.gmra.mxu0 %v1162
        %v1785 = vpop.f32.mrf.mxu0
        %v1786 = vadd.f32 0.0, %v1785
        %v1787 = vpop.f32.mrf.mxu0
        %v1788 = vadd.f32 0.0, %v1787
        %1789 = vmatmul.bf16.gmra.mxu0 %v1163
        %v1790 = vpop.f32.mrf.mxu0
        %v1791 = vadd.f32 0.0, %v1790
        %v1792 = vpop.f32.mrf.mxu0
        %v1793 = vadd.f32 0.0, %v1792
        %1794 = vmatmul.bf16.gmra.mxu0 %v1164
        %v1795 = vpop.f32.mrf.mxu0
        %v1796 = vadd.f32 0.0, %v1795
        %v1797 = vpop.f32.mrf.mxu0
        %v1798 = vadd.f32 0.0, %v1797
        %1799 = vmatmul.bf16.gmra.mxu0 %v1165
        %v1800 = vpop.f32.mrf.mxu0
        %v1801 = vadd.f32 0.0, %v1800
        %v1802 = vpop.f32.mrf.mxu0
        %v1803 = vadd.f32 0.0, %v1802
        %1804 = vmatmul.bf16.gmra.mxu0 %v1166
        %v1805 = vpop.f32.mrf.mxu0
        %v1806 = vadd.f32 0.0, %v1805
        %v1807 = vpop.f32.mrf.mxu0
        %v1808 = vadd.f32 0.0, %v1807
        %1809 = vmatmul.bf16.gmra.mxu0 %v1167
        %v1810 = vpop.f32.mrf.mxu0
        %v1811 = vadd.f32 0.0, %v1810
        %v1812 = vpop.f32.mrf.mxu0
        %v1813 = vadd.f32 0.0, %v1812
        %1814 = vmatmul.bf16.gmra.mxu0 %v1168
        %v1815 = vpop.f32.mrf.mxu0
        %v1816 = vadd.f32 0.0, %v1815
        %v1817 = vpop.f32.mrf.mxu0
        %v1818 = vadd.f32 0.0, %v1817
        %1819 = vdwg.mxu0
        %1820 = vmatpush.bf16.msra.mxu0 %v1484
        %1821 = vmatpush.bf16.msra.mxu0 %v1476
        %1822 = vmatpush.bf16.msra.mxu0 %v1468
        %1823 = vmatpush.bf16.msra.mxu0 %v1460
        %1824 = vmatpush.bf16.msra.mxu0 %v1452
        %1825 = vmatpush.bf16.msra.mxu0 %v1444
        %1826 = vmatpush.bf16.msra.mxu0 %v1436
        %1827 = vmatpush.bf16.msra.mxu0 %v1428
        %1828 = vmatmul.bf16.gmra.mxu0 %v1153
        %v1829 = vpop.f32.mrf.mxu0
        %v1830 = vadd.f32 0.0, %v1829
        %v1831 = vpop.f32.mrf.mxu0
        %v1832 = vadd.f32 0.0, %v1831
        %1833 = vmatmul.bf16.gmra.mxu0 %v1154
        %v1834 = vpop.f32.mrf.mxu0
        %v1835 = vadd.f32 0.0, %v1834
        %v1836 = vpop.f32.mrf.mxu0
        %v1837 = vadd.f32 0.0, %v1836
        %1838 = vmatmul.bf16.gmra.mxu0 %v1155
        %v1839 = vpop.f32.mrf.mxu0
        %v1840 = vadd.f32 0.0, %v1839
        %v1841 = vpop.f32.mrf.mxu0
        %v1842 = vadd.f32 0.0, %v1841
        %1843 = vmatmul.bf16.gmra.mxu0 %v1156
        %v1844 = vpop.f32.mrf.mxu0
        %v1845 = vadd.f32 0.0, %v1844
        %v1846 = vpop.f32.mrf.mxu0
        %v1847 = vadd.f32 0.0, %v1846
        %1848 = vmatmul.bf16.gmra.mxu0 %v1157
        %v1849 = vpop.f32.mrf.mxu0
        %v1850 = vadd.f32 0.0, %v1849
        %v1851 = vpop.f32.mrf.mxu0
        %v1852 = vadd.f32 0.0, %v1851
        %1853 = vmatmul.bf16.gmra.mxu0 %v1158
        %v1854 = vpop.f32.mrf.mxu0
        %v1855 = vadd.f32 0.0, %v1854
        %v1856 = vpop.f32.mrf.mxu0
        %v1857 = vadd.f32 0.0, %v1856
        %1858 = vmatmul.bf16.gmra.mxu0 %v1159
        %v1859 = vpop.f32.mrf.mxu0
        %v1860 = vadd.f32 0.0, %v1859
        %v1861 = vpop.f32.mrf.mxu0
        %v1862 = vadd.f32 0.0, %v1861
        %1863 = vmatmul.bf16.gmra.mxu0 %v1160
        %v1864 = vpop.f32.mrf.mxu0
        %v1865 = vadd.f32 0.0, %v1864
        %v1866 = vpop.f32.mrf.mxu0
        %v1867 = vadd.f32 0.0, %v1866
        %1868 = vmatmul.bf16.gmra.mxu0 %v1161
        %v1869 = vpop.f32.mrf.mxu0
        %v1870 = vadd.f32 0.0, %v1869
        %v1871 = vpop.f32.mrf.mxu0
        %v1872 = vadd.f32 0.0, %v1871
        %1873 = vmatmul.bf16.gmra.mxu0 %v1162
        %v1874 = vpop.f32.mrf.mxu0
        %v1875 = vadd.f32 0.0, %v1874
        %v1876 = vpop.f32.mrf.mxu0
        %v1877 = vadd.f32 0.0, %v1876
        %1878 = vmatmul.bf16.gmra.mxu0 %v1163
        %v1879 = vpop.f32.mrf.mxu0
        %v1880 = vadd.f32 0.0, %v1879
        %v1881 = vpop.f32.mrf.mxu0
        %v1882 = vadd.f32 0.0, %v1881
        %1883 = vmatmul.bf16.gmra.mxu0 %v1164
        %v1884 = vpop.f32.mrf.mxu0
        %v1885 = vadd.f32 0.0, %v1884
        %v1886 = vpop.f32.mrf.mxu0
        %v1887 = vadd.f32 0.0, %v1886
        %1888 = vmatmul.bf16.gmra.mxu0 %v1165
        %v1889 = vpop.f32.mrf.mxu0
        %v1890 = vadd.f32 0.0, %v1889
        %v1891 = vpop.f32.mrf.mxu0
        %v1892 = vadd.f32 0.0, %v1891
        %1893 = vmatmul.bf16.gmra.mxu0 %v1166
        %v1894 = vpop.f32.mrf.mxu0
        %v1895 = vadd.f32 0.0, %v1894
        %v1896 = vpop.f32.mrf.mxu0
        %v1897 = vadd.f32 0.0, %v1896
        %1898 = vmatmul.bf16.gmra.mxu0 %v1167
        %v1899 = vpop.f32.mrf.mxu0
        %v1900 = vadd.f32 0.0, %v1899
        %v1901 = vpop.f32.mrf.mxu0
        %v1902 = vadd.f32 0.0, %v1901
        %1903 = vmatmul.bf16.gmra.mxu0 %v1168
        %v1904 = vpop.f32.mrf.mxu0
        %v1905 = vadd.f32 0.0, %v1904
        %v1906 = vpop.f32.mrf.mxu0
        %v1907 = vadd.f32 0.0, %v1906
        %1908 = vdwg.mxu0
        %1909 = vmatpush.bf16.msra.mxu0 %v1485
        %1910 = vmatpush.bf16.msra.mxu0 %v1477
        %1911 = vmatpush.bf16.msra.mxu0 %v1469
        %1912 = vmatpush.bf16.msra.mxu0 %v1461
        %1913 = vmatpush.bf16.msra.mxu0 %v1453
        %1914 = vmatpush.bf16.msra.mxu0 %v1445
        %1915 = vmatpush.bf16.msra.mxu0 %v1437
        %1916 = vmatpush.bf16.msra.mxu0 %v1429
        %1917 = vmatmul.bf16.gmra.mxu0 %v1153
        %v1918 = vpop.f32.mrf.mxu0
        %v1919 = vadd.f32 0.0, %v1918
        %v1920 = vpop.f32.mrf.mxu0
        %v1921 = vadd.f32 0.0, %v1920
        %1922 = vmatmul.bf16.gmra.mxu0 %v1154
        %v1923 = vpop.f32.mrf.mxu0
        %v1924 = vadd.f32 0.0, %v1923
        %v1925 = vpop.f32.mrf.mxu0
        %v1926 = vadd.f32 0.0, %v1925
        %1927 = vmatmul.bf16.gmra.mxu0 %v1155
        %v1928 = vpop.f32.mrf.mxu0
        %v1929 = vadd.f32 0.0, %v1928
        %v1930 = vpop.f32.mrf.mxu0
        %v1931 = vadd.f32 0.0, %v1930
        %1932 = vmatmul.bf16.gmra.mxu0 %v1156
        %v1933 = vpop.f32.mrf.mxu0
        %v1934 = vadd.f32 0.0, %v1933
        %v1935 = vpop.f32.mrf.mxu0
        %v1936 = vadd.f32 0.0, %v1935
        %1937 = vmatmul.bf16.gmra.mxu0 %v1157
        %v1938 = vpop.f32.mrf.mxu0
        %v1939 = vadd.f32 0.0, %v1938
        %v1940 = vpop.f32.mrf.mxu0
        %v1941 = vadd.f32 0.0, %v1940
        %1942 = vmatmul.bf16.gmra.mxu0 %v1158
        %v1943 = vpop.f32.mrf.mxu0
        %v1944 = vadd.f32 0.0, %v1943
        %v1945 = vpop.f32.mrf.mxu0
        %v1946 = vadd.f32 0.0, %v1945
        %1947 = vmatmul.bf16.gmra.mxu0 %v1159
        %v1948 = vpop.f32.mrf.mxu0
        %v1949 = vadd.f32 0.0, %v1948
        %v1950 = vpop.f32.mrf.mxu0
        %v1951 = vadd.f32 0.0, %v1950
        %1952 = vmatmul.bf16.gmra.mxu0 %v1160
        %v1953 = vpop.f32.mrf.mxu0
        %v1954 = vadd.f32 0.0, %v1953
        %v1955 = vpop.f32.mrf.mxu0
        %v1956 = vadd.f32 0.0, %v1955
        %1957 = vmatmul.bf16.gmra.mxu0 %v1161
        %v1958 = vpop.f32.mrf.mxu0
        %v1959 = vadd.f32 0.0, %v1958
        %v1960 = vpop.f32.mrf.mxu0
        %v1961 = vadd.f32 0.0, %v1960
        %1962 = vmatmul.bf16.gmra.mxu0 %v1162
        %v1963 = vpop.f32.mrf.mxu0
        %v1964 = vadd.f32 0.0, %v1963
        %v1965 = vpop.f32.mrf.mxu0
        %v1966 = vadd.f32 0.0, %v1965
        %1967 = vmatmul.bf16.gmra.mxu0 %v1163
        %v1968 = vpop.f32.mrf.mxu0
        %v1969 = vadd.f32 0.0, %v1968
        %v1970 = vpop.f32.mrf.mxu0
        %v1971 = vadd.f32 0.0, %v1970
        %1972 = vmatmul.bf16.gmra.mxu0 %v1164
        %v1973 = vpop.f32.mrf.mxu0
        %v1974 = vadd.f32 0.0, %v1973
        %v1975 = vpop.f32.mrf.mxu0
        %v1976 = vadd.f32 0.0, %v1975
        %1977 = vmatmul.bf16.gmra.mxu0 %v1165
        %v1978 = vpop.f32.mrf.mxu0
        %v1979 = vadd.f32 0.0, %v1978
        %v1980 = vpop.f32.mrf.mxu0
        %v1981 = vadd.f32 0.0, %v1980
        %1982 = vmatmul.bf16.gmra.mxu0 %v1166
        %v1983 = vpop.f32.mrf.mxu0
        %v1984 = vadd.f32 0.0, %v1983
        %v1985 = vpop.f32.mrf.mxu0
        %v1986 = vadd.f32 0.0, %v1985
        %1987 = vmatmul.bf16.gmra.mxu0 %v1167
        %v1988 = vpop.f32.mrf.mxu0
        %v1989 = vadd.f32 0.0, %v1988
        %v1990 = vpop.f32.mrf.mxu0
        %v1991 = vadd.f32 0.0, %v1990
        %1992 = vmatmul.bf16.gmra.mxu0 %v1168
        %v1993 = vpop.f32.mrf.mxu0
        %v1994 = vadd.f32 0.0, %v1993
        %v1995 = vpop.f32.mrf.mxu0
        %v1996 = vadd.f32 0.0, %v1995
        %1997 = vdwg.mxu0
        %1998 = vmatpush.bf16.msra.mxu0 %v1486
        %1999 = vmatpush.bf16.msra.mxu0 %v1478
        %2000 = vmatpush.bf16.msra.mxu0 %v1470
        %2001 = vmatpush.bf16.msra.mxu0 %v1462
        %2002 = vmatpush.bf16.msra.mxu0 %v1454
        %2003 = vmatpush.bf16.msra.mxu0 %v1446
        %2004 = vmatpush.bf16.msra.mxu0 %v1438
        %2005 = vmatpush.bf16.msra.mxu0 %v1430
        %2006 = vmatmul.bf16.gmra.mxu0 %v1153
        %v2007 = vpop.f32.mrf.mxu0
        %v2008 = vadd.f32 0.0, %v2007
        %v2009 = vpop.f32.mrf.mxu0
        %v2010 = vadd.f32 0.0, %v2009
        %2011 = vmatmul.bf16.gmra.mxu0 %v1154
        %v2012 = vpop.f32.mrf.mxu0
        %v2013 = vadd.f32 0.0, %v2012
        %v2014 = vpop.f32.mrf.mxu0
        %v2015 = vadd.f32 0.0, %v2014
        %2016 = vmatmul.bf16.gmra.mxu0 %v1155
        %v2017 = vpop.f32.mrf.mxu0
        %v2018 = vadd.f32 0.0, %v2017
        %v2019 = vpop.f32.mrf.mxu0
        %v2020 = vadd.f32 0.0, %v2019
        %2021 = vmatmul.bf16.gmra.mxu0 %v1156
        %v2022 = vpop.f32.mrf.mxu0
        %v2023 = vadd.f32 0.0, %v2022
        %v2024 = vpop.f32.mrf.mxu0
        %v2025 = vadd.f32 0.0, %v2024
        %2026 = vmatmul.bf16.gmra.mxu0 %v1157
        %v2027 = vpop.f32.mrf.mxu0
        %v2028 = vadd.f32 0.0, %v2027
        %v2029 = vpop.f32.mrf.mxu0
        %v2030 = vadd.f32 0.0, %v2029
        %2031 = vmatmul.bf16.gmra.mxu0 %v1158
        %v2032 = vpop.f32.mrf.mxu0
        %v2033 = vadd.f32 0.0, %v2032
        %v2034 = vpop.f32.mrf.mxu0
        %v2035 = vadd.f32 0.0, %v2034
        %2036 = vmatmul.bf16.gmra.mxu0 %v1159
        %v2037 = vpop.f32.mrf.mxu0
        %v2038 = vadd.f32 0.0, %v2037
        %v2039 = vpop.f32.mrf.mxu0
        %v2040 = vadd.f32 0.0, %v2039
        %2041 = vmatmul.bf16.gmra.mxu0 %v1160
        %v2042 = vpop.f32.mrf.mxu0
        %v2043 = vadd.f32 0.0, %v2042
        %v2044 = vpop.f32.mrf.mxu0
        %v2045 = vadd.f32 0.0, %v2044
        %2046 = vmatmul.bf16.gmra.mxu0 %v1161
        %v2047 = vpop.f32.mrf.mxu0
        %v2048 = vadd.f32 0.0, %v2047
        %v2049 = vpop.f32.mrf.mxu0
        %v2050 = vadd.f32 0.0, %v2049
        %2051 = vmatmul.bf16.gmra.mxu0 %v1162
        %v2052 = vpop.f32.mrf.mxu0
        %v2053 = vadd.f32 0.0, %v2052
        %v2054 = vpop.f32.mrf.mxu0
        %v2055 = vadd.f32 0.0, %v2054
        %2056 = vmatmul.bf16.gmra.mxu0 %v1163
        %v2057 = vpop.f32.mrf.mxu0
        %v2058 = vadd.f32 0.0, %v2057
        %v2059 = vpop.f32.mrf.mxu0
        %v2060 = vadd.f32 0.0, %v2059
        %2061 = vmatmul.bf16.gmra.mxu0 %v1164
        %v2062 = vpop.f32.mrf.mxu0
        %v2063 = vadd.f32 0.0, %v2062
        %v2064 = vpop.f32.mrf.mxu0
        %v2065 = vadd.f32 0.0, %v2064
        %2066 = vmatmul.bf16.gmra.mxu0 %v1165
        %v2067 = vpop.f32.mrf.mxu0
        %v2068 = vadd.f32 0.0, %v2067
        %v2069 = vpop.f32.mrf.mxu0
        %v2070 = vadd.f32 0.0, %v2069
        %2071 = vmatmul.bf16.gmra.mxu0 %v1166
        %v2072 = vpop.f32.mrf.mxu0
        %v2073 = vadd.f32 0.0, %v2072
        %v2074 = vpop.f32.mrf.mxu0
        %v2075 = vadd.f32 0.0, %v2074
        %2076 = vmatmul.bf16.gmra.mxu0 %v1167
        %v2077 = vpop.f32.mrf.mxu0
        %v2078 = vadd.f32 0.0, %v2077
        %v2079 = vpop.f32.mrf.mxu0
        %v2080 = vadd.f32 0.0, %v2079
        %2081 = vmatmul.bf16.gmra.mxu0 %v1168
        %v2082 = vpop.f32.mrf.mxu0
        %v2083 = vadd.f32 0.0, %v2082
        %v2084 = vpop.f32.mrf.mxu0
        %v2085 = vadd.f32 0.0, %v2084
        %2086 = vdwg.mxu0
        %2087 = vmatpush.bf16.msra.mxu0 %v1487
        %2088 = vmatpush.bf16.msra.mxu0 %v1479
        %2089 = vmatpush.bf16.msra.mxu0 %v1471
        %2090 = vmatpush.bf16.msra.mxu0 %v1463
        %2091 = vmatpush.bf16.msra.mxu0 %v1455
        %2092 = vmatpush.bf16.msra.mxu0 %v1447
        %2093 = vmatpush.bf16.msra.mxu0 %v1439
        %2094 = vmatpush.bf16.msra.mxu0 %v1431
        %2095 = vmatmul.bf16.gmra.mxu0 %v1153
        %v2096 = vpop.f32.mrf.mxu0
        %v2097 = vadd.f32 0.0, %v2096
        %v2098 = vpop.f32.mrf.mxu0
        %v2099 = vadd.f32 0.0, %v2098
        %2100 = vmatmul.bf16.gmra.mxu0 %v1154
        %v2101 = vpop.f32.mrf.mxu0
        %v2102 = vadd.f32 0.0, %v2101
        %v2103 = vpop.f32.mrf.mxu0
        %v2104 = vadd.f32 0.0, %v2103
        %2105 = vmatmul.bf16.gmra.mxu0 %v1155
        %v2106 = vpop.f32.mrf.mxu0
        %v2107 = vadd.f32 0.0, %v2106
        %v2108 = vpop.f32.mrf.mxu0
        %v2109 = vadd.f32 0.0, %v2108
        %2110 = vmatmul.bf16.gmra.mxu0 %v1156
        %v2111 = vpop.f32.mrf.mxu0
        %v2112 = vadd.f32 0.0, %v2111
        %v2113 = vpop.f32.mrf.mxu0
        %v2114 = vadd.f32 0.0, %v2113
        %2115 = vmatmul.bf16.gmra.mxu0 %v1157
        %v2116 = vpop.f32.mrf.mxu0
        %v2117 = vadd.f32 0.0, %v2116
        %v2118 = vpop.f32.mrf.mxu0
        %v2119 = vadd.f32 0.0, %v2118
        %2120 = vmatmul.bf16.gmra.mxu0 %v1158
        %v2121 = vpop.f32.mrf.mxu0
        %v2122 = vadd.f32 0.0, %v2121
        %v2123 = vpop.f32.mrf.mxu0
        %v2124 = vadd.f32 0.0, %v2123
        %2125 = vmatmul.bf16.gmra.mxu0 %v1159
        %v2126 = vpop.f32.mrf.mxu0
        %v2127 = vadd.f32 0.0, %v2126
        %v2128 = vpop.f32.mrf.mxu0
        %v2129 = vadd.f32 0.0, %v2128
        %2130 = vmatmul.bf16.gmra.mxu0 %v1160
        %v2131 = vpop.f32.mrf.mxu0
        %v2132 = vadd.f32 0.0, %v2131
        %v2133 = vpop.f32.mrf.mxu0
        %v2134 = vadd.f32 0.0, %v2133
        %2135 = vmatmul.bf16.gmra.mxu0 %v1161
        %v2136 = vpop.f32.mrf.mxu0
        %v2137 = vadd.f32 0.0, %v2136
        %v2138 = vpop.f32.mrf.mxu0
        %v2139 = vadd.f32 0.0, %v2138
        %2140 = vmatmul.bf16.gmra.mxu0 %v1162
        %v2141 = vpop.f32.mrf.mxu0
        %v2142 = vadd.f32 0.0, %v2141
        %v2143 = vpop.f32.mrf.mxu0
        %v2144 = vadd.f32 0.0, %v2143
        %2145 = vmatmul.bf16.gmra.mxu0 %v1163
        %v2146 = vpop.f32.mrf.mxu0
        %v2147 = vadd.f32 0.0, %v2146
        %v2148 = vpop.f32.mrf.mxu0
        %v2149 = vadd.f32 0.0, %v2148
        %2150 = vmatmul.bf16.gmra.mxu0 %v1164
        %v2151 = vpop.f32.mrf.mxu0
        %v2152 = vadd.f32 0.0, %v2151
        %v2153 = vpop.f32.mrf.mxu0
        %v2154 = vadd.f32 0.0, %v2153
        %2155 = vmatmul.bf16.gmra.mxu0 %v1165
        %v2156 = vpop.f32.mrf.mxu0
        %v2157 = vadd.f32 0.0, %v2156
        %v2158 = vpop.f32.mrf.mxu0
        %v2159 = vadd.f32 0.0, %v2158
        %2160 = vmatmul.bf16.gmra.mxu0 %v1166
        %v2161 = vpop.f32.mrf.mxu0
        %v2162 = vadd.f32 0.0, %v2161
        %v2163 = vpop.f32.mrf.mxu0
        %v2164 = vadd.f32 0.0, %v2163
        %2165 = vmatmul.bf16.gmra.mxu0 %v1167
        %v2166 = vpop.f32.mrf.mxu0
        %v2167 = vadd.f32 0.0, %v2166
        %v2168 = vpop.f32.mrf.mxu0
        %v2169 = vadd.f32 0.0, %v2168
        %2170 = vmatmul.bf16.gmra.mxu0 %v1168
        %v2171 = vpop.f32.mrf.mxu0
        %v2172 = vadd.f32 0.0, %v2171
        %v2173 = vpop.f32.mrf.mxu0
        %v2174 = vadd.f32 0.0, %v2173
        %2175 = vdwg.mxu0
        %2176 = vmatpush.bf16.msra.mxu0 %v1488
        %2177 = vmatpush.bf16.msra.mxu0 %v1480
        %2178 = vmatpush.bf16.msra.mxu0 %v1472
        %2179 = vmatpush.bf16.msra.mxu0 %v1464
        %2180 = vmatpush.bf16.msra.mxu0 %v1456
        %2181 = vmatpush.bf16.msra.mxu0 %v1448
        %2182 = vmatpush.bf16.msra.mxu0 %v1440
        %2183 = vmatpush.bf16.msra.mxu0 %v1432
        %2184 = vmatmul.bf16.gmra.mxu0 %v1153
        %v2185 = vpop.f32.mrf.mxu0
        %v2186 = vadd.f32 0.0, %v2185
        %v2187 = vpop.f32.mrf.mxu0
        %v2188 = vadd.f32 0.0, %v2187
        %2189 = vmatmul.bf16.gmra.mxu0 %v1154
        %v2190 = vpop.f32.mrf.mxu0
        %v2191 = vadd.f32 0.0, %v2190
        %v2192 = vpop.f32.mrf.mxu0
        %v2193 = vadd.f32 0.0, %v2192
        %2194 = vmatmul.bf16.gmra.mxu0 %v1155
        %v2195 = vpop.f32.mrf.mxu0
        %v2196 = vadd.f32 0.0, %v2195
        %v2197 = vpop.f32.mrf.mxu0
        %v2198 = vadd.f32 0.0, %v2197
        %2199 = vmatmul.bf16.gmra.mxu0 %v1156
        %v2200 = vpop.f32.mrf.mxu0
        %v2201 = vadd.f32 0.0, %v2200
        %v2202 = vpop.f32.mrf.mxu0
        %v2203 = vadd.f32 0.0, %v2202
        %2204 = vmatmul.bf16.gmra.mxu0 %v1157
        %v2205 = vpop.f32.mrf.mxu0
        %v2206 = vadd.f32 0.0, %v2205
        %v2207 = vpop.f32.mrf.mxu0
        %v2208 = vadd.f32 0.0, %v2207
        %2209 = vmatmul.bf16.gmra.mxu0 %v1158
        %v2210 = vpop.f32.mrf.mxu0
        %v2211 = vadd.f32 0.0, %v2210
        %v2212 = vpop.f32.mrf.mxu0
        %v2213 = vadd.f32 0.0, %v2212
        %2214 = vmatmul.bf16.gmra.mxu0 %v1159
        %v2215 = vpop.f32.mrf.mxu0
        %v2216 = vadd.f32 0.0, %v2215
        %v2217 = vpop.f32.mrf.mxu0
        %v2218 = vadd.f32 0.0, %v2217
        %2219 = vmatmul.bf16.gmra.mxu0 %v1160
        %v2220 = vpop.f32.mrf.mxu0
        %v2221 = vadd.f32 0.0, %v2220
        %v2222 = vpop.f32.mrf.mxu0
        %v2223 = vadd.f32 0.0, %v2222
        %2224 = vmatmul.bf16.gmra.mxu0 %v1161
        %v2225 = vpop.f32.mrf.mxu0
        %v2226 = vadd.f32 0.0, %v2225
        %v2227 = vpop.f32.mrf.mxu0
        %v2228 = vadd.f32 0.0, %v2227
        %2229 = vmatmul.bf16.gmra.mxu0 %v1162
        %v2230 = vpop.f32.mrf.mxu0
        %v2231 = vadd.f32 0.0, %v2230
        %v2232 = vpop.f32.mrf.mxu0
        %v2233 = vadd.f32 0.0, %v2232
        %2234 = vmatmul.bf16.gmra.mxu0 %v1163
        %v2235 = vpop.f32.mrf.mxu0
        %v2236 = vadd.f32 0.0, %v2235
        %v2237 = vpop.f32.mrf.mxu0
        %v2238 = vadd.f32 0.0, %v2237
        %2239 = vmatmul.bf16.gmra.mxu0 %v1164
        %v2240 = vpop.f32.mrf.mxu0
        %v2241 = vadd.f32 0.0, %v2240
        %v2242 = vpop.f32.mrf.mxu0
        %v2243 = vadd.f32 0.0, %v2242
        %2244 = vmatmul.bf16.gmra.mxu0 %v1165
        %v2245 = vpop.f32.mrf.mxu0
        %v2246 = vadd.f32 0.0, %v2245
        %v2247 = vpop.f32.mrf.mxu0
        %v2248 = vadd.f32 0.0, %v2247
        %2249 = vmatmul.bf16.gmra.mxu0 %v1166
        %v2250 = vpop.f32.mrf.mxu0
        %v2251 = vadd.f32 0.0, %v2250
        %v2252 = vpop.f32.mrf.mxu0
        %v2253 = vadd.f32 0.0, %v2252
        %2254 = vmatmul.bf16.gmra.mxu0 %v1167
        %v2255 = vpop.f32.mrf.mxu0
        %v2256 = vadd.f32 0.0, %v2255
        %v2257 = vpop.f32.mrf.mxu0
        %v2258 = vadd.f32 0.0, %v2257
        %2259 = vmatmul.bf16.gmra.mxu0 %v1168
        %v2260 = vpop.f32.mrf.mxu0
        %v2261 = vadd.f32 0.0, %v2260
        %v2262 = vpop.f32.mrf.mxu0
        %v2263 = vadd.f32 0.0, %v2262
        %2264 = vdwg.mxu0
        %v2265 = vmax.f32 %v1563, %v1565
        %v2266 = vmax.f32 %v2265, %v1568
        %v2267 = vmax.f32 %v2266, %v1570
        %v2268 = vmax.f32 %v2267, %v1573
        %v2269 = vmax.f32 %v2268, %v1575
        %v2270 = vmax.f32 %v2269, %v1578
        %v2271 = vmax.f32 %v2270, %v1580
        %v2272 = vmax.f32 %v2271, %v1583
        %v2273 = vmax.f32 %v2272, %v1585
        %v2274 = vmax.f32 %v2273, %v1588
        %v2275 = vmax.f32 %v2274, %v1590
        %v2276 = vmax.f32 %v2275, %v1593
        %v2277 = vmax.f32 %v2276, %v1595
        %v2278 = vmax.f32 %v2277, %v1598
        %v2279 = vmax.f32 %v2278, %v1600
        %v2280 = vrot.slane %v2279, 4
        %v2281 = vmax.f32 %v2279, %v2280
        %v2282 = vrot.slane %v2281, 2
        %v2283 = vmax.f32 %v2281, %v2282
        %v2284 = vrot.slane %v2283, 1
        %v2285 = vmax.f32 %v2283, %v2284
        %v2286 = vmax.f32 %v1652, %v1654
        %v2287 = vmax.f32 %v2286, %v1657
        %v2288 = vmax.f32 %v2287, %v1659
        %v2289 = vmax.f32 %v2288, %v1662
        %v2290 = vmax.f32 %v2289, %v1664
        %v2291 = vmax.f32 %v2290, %v1667
        %v2292 = vmax.f32 %v2291, %v1669
        %v2293 = vmax.f32 %v2292, %v1672
        %v2294 = vmax.f32 %v2293, %v1674
        %v2295 = vmax.f32 %v2294, %v1677
        %v2296 = vmax.f32 %v2295, %v1679
        %v2297 = vmax.f32 %v2296, %v1682
        %v2298 = vmax.f32 %v2297, %v1684
        %v2299 = vmax.f32 %v2298, %v1687
        %v2300 = vmax.f32 %v2299, %v1689
        %v2301 = vrot.slane %v2300, 4
        %v2302 = vmax.f32 %v2300, %v2301
        %v2303 = vrot.slane %v2302, 2
        %v2304 = vmax.f32 %v2302, %v2303
        %v2305 = vrot.slane %v2304, 1
        %v2306 = vmax.f32 %v2304, %v2305
        %v2307 = vmax.f32 %v1741, %v1743
        %v2308 = vmax.f32 %v2307, %v1746
        %v2309 = vmax.f32 %v2308, %v1748
        %v2310 = vmax.f32 %v2309, %v1751
        %v2311 = vmax.f32 %v2310, %v1753
        %v2312 = vmax.f32 %v2311, %v1756
        %v2313 = vmax.f32 %v2312, %v1758
        %v2314 = vmax.f32 %v2313, %v1761
        %v2315 = vmax.f32 %v2314, %v1763
        %v2316 = vmax.f32 %v2315, %v1766
        %v2317 = vmax.f32 %v2316, %v1768
        %v2318 = vmax.f32 %v2317, %v1771
        %v2319 = vmax.f32 %v2318, %v1773
        %v2320 = vmax.f32 %v2319, %v1776
        %v2321 = vmax.f32 %v2320, %v1778
        %v2322 = vrot.slane %v2321, 4
        %v2323 = vmax.f32 %v2321, %v2322
        %v2324 = vrot.slane %v2323, 2
        %v2325 = vmax.f32 %v2323, %v2324
        %v2326 = vrot.slane %v2325, 1
        %v2327 = vmax.f32 %v2325, %v2326
        %v2328 = vmax.f32 %v1830, %v1832
        %v2329 = vmax.f32 %v2328, %v1835
        %v2330 = vmax.f32 %v2329, %v1837
        %v2331 = vmax.f32 %v2330, %v1840
        %v2332 = vmax.f32 %v2331, %v1842
        %v2333 = vmax.f32 %v2332, %v1845
        %v2334 = vmax.f32 %v2333, %v1847
        %v2335 = vmax.f32 %v2334, %v1850
        %v2336 = vmax.f32 %v2335, %v1852
        %v2337 = vmax.f32 %v2336, %v1855
        %v2338 = vmax.f32 %v2337, %v1857
        %v2339 = vmax.f32 %v2338, %v1860
        %v2340 = vmax.f32 %v2339, %v1862
        %v2341 = vmax.f32 %v2340, %v1865
        %v2342 = vmax.f32 %v2341, %v1867
        %v2343 = vrot.slane %v2342, 4
        %v2344 = vmax.f32 %v2342, %v2343
        %v2345 = vrot.slane %v2344, 2
        %v2346 = vmax.f32 %v2344, %v2345
        %v2347 = vrot.slane %v2346, 1
        %v2348 = vmax.f32 %v2346, %v2347
        %v2349 = vmax.f32 %v1919, %v1921
        %v2350 = vmax.f32 %v2349, %v1924
        %v2351 = vmax.f32 %v2350, %v1926
        %v2352 = vmax.f32 %v2351, %v1929
        %v2353 = vmax.f32 %v2352, %v1931
        %v2354 = vmax.f32 %v2353, %v1934
        %v2355 = vmax.f32 %v2354, %v1936
        %v2356 = vmax.f32 %v2355, %v1939
        %v2357 = vmax.f32 %v2356, %v1941
        %v2358 = vmax.f32 %v2357, %v1944
        %v2359 = vmax.f32 %v2358, %v1946
        %v2360 = vmax.f32 %v2359, %v1949
        %v2361 = vmax.f32 %v2360, %v1951
        %v2362 = vmax.f32 %v2361, %v1954
        %v2363 = vmax.f32 %v2362, %v1956
        %v2364 = vrot.slane %v2363, 4
        %v2365 = vmax.f32 %v2363, %v2364
        %v2366 = vrot.slane %v2365, 2
        %v2367 = vmax.f32 %v2365, %v2366
        %v2368 = vrot.slane %v2367, 1
        %v2369 = vmax.f32 %v2367, %v2368
        %v2370 = vmax.f32 %v2008, %v2010
        %v2371 = vmax.f32 %v2370, %v2013
        %v2372 = vmax.f32 %v2371, %v2015
        %v2373 = vmax.f32 %v2372, %v2018
        %v2374 = vmax.f32 %v2373, %v2020
        %v2375 = vmax.f32 %v2374, %v2023
        %v2376 = vmax.f32 %v2375, %v2025
        %v2377 = vmax.f32 %v2376, %v2028
        %v2378 = vmax.f32 %v2377, %v2030
        %v2379 = vmax.f32 %v2378, %v2033
        %v2380 = vmax.f32 %v2379, %v2035
        %v2381 = vmax.f32 %v2380, %v2038
        %v2382 = vmax.f32 %v2381, %v2040
        %v2383 = vmax.f32 %v2382, %v2043
        %v2384 = vmax.f32 %v2383, %v2045
        %v2385 = vrot.slane %v2384, 4
        %v2386 = vmax.f32 %v2384, %v2385
        %v2387 = vrot.slane %v2386, 2
        %v2388 = vmax.f32 %v2386, %v2387
        %v2389 = vrot.slane %v2388, 1
        %v2390 = vmax.f32 %v2388, %v2389
        %v2391 = vmax.f32 %v2097, %v2099
        %v2392 = vmax.f32 %v2391, %v2102
        %v2393 = vmax.f32 %v2392, %v2104
        %v2394 = vmax.f32 %v2393, %v2107
        %v2395 = vmax.f32 %v2394, %v2109
        %v2396 = vmax.f32 %v2395, %v2112
        %v2397 = vmax.f32 %v2396, %v2114
        %v2398 = vmax.f32 %v2397, %v2117
        %v2399 = vmax.f32 %v2398, %v2119
        %v2400 = vmax.f32 %v2399, %v2122
        %v2401 = vmax.f32 %v2400, %v2124
        %v2402 = vmax.f32 %v2401, %v2127
        %v2403 = vmax.f32 %v2402, %v2129
        %v2404 = vmax.f32 %v2403, %v2132
        %v2405 = vmax.f32 %v2404, %v2134
        %v2406 = vrot.slane %v2405, 4
        %v2407 = vmax.f32 %v2405, %v2406
        %v2408 = vrot.slane %v2407, 2
        %v2409 = vmax.f32 %v2407, %v2408
        %v2410 = vrot.slane %v2409, 1
        %v2411 = vmax.f32 %v2409, %v2410
        %v2412 = vmax.f32 %v2186, %v2188
        %v2413 = vmax.f32 %v2412, %v2191
        %v2414 = vmax.f32 %v2413, %v2193
        %v2415 = vmax.f32 %v2414, %v2196
        %v2416 = vmax.f32 %v2415, %v2198
        %v2417 = vmax.f32 %v2416, %v2201
        %v2418 = vmax.f32 %v2417, %v2203
        %v2419 = vmax.f32 %v2418, %v2206
        %v2420 = vmax.f32 %v2419, %v2208
        %v2421 = vmax.f32 %v2420, %v2211
        %v2422 = vmax.f32 %v2421, %v2213
        %v2423 = vmax.f32 %v2422, %v2216
        %v2424 = vmax.f32 %v2423, %v2218
        %v2425 = vmax.f32 %v2424, %v2221
        %v2426 = vmax.f32 %v2425, %v2223
        %v2427 = vrot.slane %v2426, 4
        %v2428 = vmax.f32 %v2426, %v2427
        %v2429 = vrot.slane %v2428, 2
        %v2430 = vmax.f32 %v2428, %v2429
        %v2431 = vrot.slane %v2430, 1
        %v2432 = vmax.f32 %v2430, %v2431
        %v2433 = vld [vmem:[#allocation3] ss:$2 sm:$0xff]
        %v2442 = vrot.slane %v2306, 7
        %v2443 = vrot.slane %v2327, 6
        %v2444 = vrot.slane %v2348, 5
        %v2445 = vrot.slane %v2369, 4
        %v2446 = vrot.slane %v2390, 3
        %v2447 = vrot.slane %v2411, 2
        %v2448 = vrot.slane %v2432, 1
        %vm2449 = vcmask 1040384
        %v2450 = vsel %vm2449, %v2285, %v2442
        %vm2451 = vcmask 1042434
        %v2452 = vsel %vm2451, %v2443, %v2444
        %vm2453 = vcmask 1041408
        %v2454 = vsel %vm2453, %v2450, %v2452
        %vm2455 = vcmask 1044484
        %v2456 = vsel %vm2455, %v2445, %v2446
        %vm2457 = vcmask 1046534
        %v2458 = vsel %vm2457, %v2447, %v2448
        %vm2459 = vcmask 1045508
        %v2460 = vsel %vm2459, %v2456, %v2458
        %v2461 = vsel %vm572, %v2454, %v2460
        %v2463 = vmax.f32 %v2433, %v2461
        %2464 = vst [vmem:[#allocation3] ss:$2 sm:$0xff] %v2463
        %v2465 = vmax.f32 %v1603, %v1605
        %v2466 = vmax.f32 %v2465, %v1608
        %v2467 = vmax.f32 %v2466, %v1610
        %v2468 = vmax.f32 %v2467, %v1613
        %v2469 = vmax.f32 %v2468, %v1615
        %v2470 = vmax.f32 %v2469, %v1618
        %v2471 = vmax.f32 %v2470, %v1620
        %v2472 = vmax.f32 %v2471, %v1623
        %v2473 = vmax.f32 %v2472, %v1625
        %v2474 = vmax.f32 %v2473, %v1628
        %v2475 = vmax.f32 %v2474, %v1630
        %v2476 = vmax.f32 %v2475, %v1633
        %v2477 = vmax.f32 %v2476, %v1635
        %v2478 = vmax.f32 %v2477, %v1638
        %v2479 = vmax.f32 %v2478, %v1640
        %v2480 = vrot.slane %v2479, 4
        %v2481 = vmax.f32 %v2479, %v2480
        %v2482 = vrot.slane %v2481, 2
        %v2483 = vmax.f32 %v2481, %v2482
        %v2484 = vrot.slane %v2483, 1
        %v2485 = vmax.f32 %v2483, %v2484
        %v2486 = vmax.f32 %v1692, %v1694
        %v2487 = vmax.f32 %v2486, %v1697
        %v2488 = vmax.f32 %v2487, %v1699
        %v2489 = vmax.f32 %v2488, %v1702
        %v2490 = vmax.f32 %v2489, %v1704
        %v2491 = vmax.f32 %v2490, %v1707
        %v2492 = vmax.f32 %v2491, %v1709
        %v2493 = vmax.f32 %v2492, %v1712
        %v2494 = vmax.f32 %v2493, %v1714
        %v2495 = vmax.f32 %v2494, %v1717
        %v2496 = vmax.f32 %v2495, %v1719
        %v2497 = vmax.f32 %v2496, %v1722
        %v2498 = vmax.f32 %v2497, %v1724
        %v2499 = vmax.f32 %v2498, %v1727
        %v2500 = vmax.f32 %v2499, %v1729
        %v2501 = vrot.slane %v2500, 4
        %v2502 = vmax.f32 %v2500, %v2501
        %v2503 = vrot.slane %v2502, 2
        %v2504 = vmax.f32 %v2502, %v2503
        %v2505 = vrot.slane %v2504, 1
        %v2506 = vmax.f32 %v2504, %v2505
        %v2507 = vmax.f32 %v1781, %v1783
        %v2508 = vmax.f32 %v2507, %v1786
        %v2509 = vmax.f32 %v2508, %v1788
        %v2510 = vmax.f32 %v2509, %v1791
        %v2511 = vmax.f32 %v2510, %v1793
        %v2512 = vmax.f32 %v2511, %v1796
        %v2513 = vmax.f32 %v2512, %v1798
        %v2514 = vmax.f32 %v2513, %v1801
        %v2515 = vmax.f32 %v2514, %v1803
        %v2516 = vmax.f32 %v2515, %v1806
        %v2517 = vmax.f32 %v2516, %v1808
        %v2518 = vmax.f32 %v2517, %v1811
        %v2519 = vmax.f32 %v2518, %v1813
        %v2520 = vmax.f32 %v2519, %v1816
        %v2521 = vmax.f32 %v2520, %v1818
        %v2522 = vrot.slane %v2521, 4
        %v2523 = vmax.f32 %v2521, %v2522
        %v2524 = vrot.slane %v2523, 2
        %v2525 = vmax.f32 %v2523, %v2524
        %v2526 = vrot.slane %v2525, 1
        %v2527 = vmax.f32 %v2525, %v2526
        %v2528 = vmax.f32 %v1870, %v1872
        %v2529 = vmax.f32 %v2528, %v1875
        %v2530 = vmax.f32 %v2529, %v1877
        %v2531 = vmax.f32 %v2530, %v1880
        %v2532 = vmax.f32 %v2531, %v1882
        %v2533 = vmax.f32 %v2532, %v1885
        %v2534 = vmax.f32 %v2533, %v1887
        %v2535 = vmax.f32 %v2534, %v1890
        %v2536 = vmax.f32 %v2535, %v1892
        %v2537 = vmax.f32 %v2536, %v1895
        %v2538 = vmax.f32 %v2537, %v1897
        %v2539 = vmax.f32 %v2538, %v1900
        %v2540 = vmax.f32 %v2539, %v1902
        %v2541 = vmax.f32 %v2540, %v1905
        %v2542 = vmax.f32 %v2541, %v1907
        %v2543 = vrot.slane %v2542, 4
        %v2544 = vmax.f32 %v2542, %v2543
        %v2545 = vrot.slane %v2544, 2
        %v2546 = vmax.f32 %v2544, %v2545
        %v2547 = vrot.slane %v2546, 1
        %v2548 = vmax.f32 %v2546, %v2547
        %v2549 = vmax.f32 %v1959, %v1961
        %v2550 = vmax.f32 %v2549, %v1964
        %v2551 = vmax.f32 %v2550, %v1966
        %v2552 = vmax.f32 %v2551, %v1969
        %v2553 = vmax.f32 %v2552, %v1971
        %v2554 = vmax.f32 %v2553, %v1974
        %v2555 = vmax.f32 %v2554, %v1976
        %v2556 = vmax.f32 %v2555, %v1979
        %v2557 = vmax.f32 %v2556, %v1981
        %v2558 = vmax.f32 %v2557, %v1984
        %v2559 = vmax.f32 %v2558, %v1986
        %v2560 = vmax.f32 %v2559, %v1989
        %v2561 = vmax.f32 %v2560, %v1991
        %v2562 = vmax.f32 %v2561, %v1994
        %v2563 = vmax.f32 %v2562, %v1996
        %v2564 = vrot.slane %v2563, 4
        %v2565 = vmax.f32 %v2563, %v2564
        %v2566 = vrot.slane %v2565, 2
        %v2567 = vmax.f32 %v2565, %v2566
        %v2568 = vrot.slane %v2567, 1
        %v2569 = vmax.f32 %v2567, %v2568
        %v2570 = vmax.f32 %v2048, %v2050
        %v2571 = vmax.f32 %v2570, %v2053
        %v2572 = vmax.f32 %v2571, %v2055
        %v2573 = vmax.f32 %v2572, %v2058
        %v2574 = vmax.f32 %v2573, %v2060
        %v2575 = vmax.f32 %v2574, %v2063
        %v2576 = vmax.f32 %v2575, %v2065
        %v2577 = vmax.f32 %v2576, %v2068
        %v2578 = vmax.f32 %v2577, %v2070
        %v2579 = vmax.f32 %v2578, %v2073
        %v2580 = vmax.f32 %v2579, %v2075
        %v2581 = vmax.f32 %v2580, %v2078
        %v2582 = vmax.f32 %v2581, %v2080
        %v2583 = vmax.f32 %v2582, %v2083
        %v2584 = vmax.f32 %v2583, %v2085
        %v2585 = vrot.slane %v2584, 4
        %v2586 = vmax.f32 %v2584, %v2585
        %v2587 = vrot.slane %v2586, 2
        %v2588 = vmax.f32 %v2586, %v2587
        %v2589 = vrot.slane %v2588, 1
        %v2590 = vmax.f32 %v2588, %v2589
        %v2591 = vmax.f32 %v2137, %v2139
        %v2592 = vmax.f32 %v2591, %v2142
        %v2593 = vmax.f32 %v2592, %v2144
        %v2594 = vmax.f32 %v2593, %v2147
        %v2595 = vmax.f32 %v2594, %v2149
        %v2596 = vmax.f32 %v2595, %v2152
        %v2597 = vmax.f32 %v2596, %v2154
        %v2598 = vmax.f32 %v2597, %v2157
        %v2599 = vmax.f32 %v2598, %v2159
        %v2600 = vmax.f32 %v2599, %v2162
        %v2601 = vmax.f32 %v2600, %v2164
        %v2602 = vmax.f32 %v2601, %v2167
        %v2603 = vmax.f32 %v2602, %v2169
        %v2604 = vmax.f32 %v2603, %v2172
        %v2605 = vmax.f32 %v2604, %v2174
        %v2606 = vrot.slane %v2605, 4
        %v2607 = vmax.f32 %v2605, %v2606
        %v2608 = vrot.slane %v2607, 2
        %v2609 = vmax.f32 %v2607, %v2608
        %v2610 = vrot.slane %v2609, 1
        %v2611 = vmax.f32 %v2609, %v2610
        %v2612 = vmax.f32 %v2226, %v2228
        %v2613 = vmax.f32 %v2612, %v2231
        %v2614 = vmax.f32 %v2613, %v2233
        %v2615 = vmax.f32 %v2614, %v2236
        %v2616 = vmax.f32 %v2615, %v2238
        %v2617 = vmax.f32 %v2616, %v2241
        %v2618 = vmax.f32 %v2617, %v2243
        %v2619 = vmax.f32 %v2618, %v2246
        %v2620 = vmax.f32 %v2619, %v2248
        %v2621 = vmax.f32 %v2620, %v2251
        %v2622 = vmax.f32 %v2621, %v2253
        %v2623 = vmax.f32 %v2622, %v2256
        %v2624 = vmax.f32 %v2623, %v2258
        %v2625 = vmax.f32 %v2624, %v2261
        %v2626 = vmax.f32 %v2625, %v2263
        %v2627 = vrot.slane %v2626, 4
        %v2628 = vmax.f32 %v2626, %v2627
        %v2629 = vrot.slane %v2628, 2
        %v2630 = vmax.f32 %v2628, %v2629
        %v2631 = vrot.slane %v2630, 1
        %v2632 = vmax.f32 %v2630, %v2631
        %s2633 = scalar_lea.vmem [#allocation3], 1
        %v2634 = vld [vmem:[%s2633] ss:$2 sm:$0xff]
        %v2643 = vrot.slane %v2506, 7
        %v2644 = vrot.slane %v2527, 6
        %v2645 = vrot.slane %v2548, 5
        %v2646 = vrot.slane %v2569, 4
        %v2647 = vrot.slane %v2590, 3
        %v2648 = vrot.slane %v2611, 2
        %v2649 = vrot.slane %v2632, 1
        %v2650 = vsel %vm2449, %v2485, %v2643
        %v2651 = vsel %vm2451, %v2644, %v2645
        %v2652 = vsel %vm2453, %v2650, %v2651
        %v2653 = vsel %vm2455, %v2646, %v2647
        %v2654 = vsel %vm2457, %v2648, %v2649
        %v2655 = vsel %vm2459, %v2653, %v2654
        %v2656 = vsel %vm572, %v2652, %v2655
        %v2658 = vmax.f32 %v2634, %v2656
        %2659 = vst [vmem:[%s2633] ss:$2 sm:$0xff] %v2658
        %v2660 = vld [vmem:[#allocation3] sm:$0xff]
        %v2661 = vld [vmem:[#allocation3 + $0x8] sm:$0xff]
        %v2662 = vld [vmem:[%s6] sm:$0xff]
        %v2664 = vperm.slane %v2662, 0
        %v2665 = vperm.slane %v2662, 1
        %v2666 = vperm.slane %v2662, 2
        %v2667 = vperm.slane %v2662, 3
        %v2668 = vperm.slane %v2662, 4
        %v2669 = vperm.slane %v2662, 5
        %v2670 = vperm.slane %v2662, 6
        %v2671 = vperm.slane %v2662, 7
        %v2672 = vrot.slane %v2665, 6
        %v2673 = vrot.slane %v2666, 4
        %v2674 = vrot.slane %v2667, 2
        %v2675 = vrot.slane %v2669, 6
        %v2676 = vrot.slane %v2670, 4
        %v2677 = vrot.slane %v2671, 2
        %v2678 = vsel %vm2453, %v2664, %v2672
        %v2679 = vsel %vm2459, %v2673, %v2674
        %v2680 = vsel %vm572, %v2678, %v2679
        %v2681 = vsel %vm2453, %v2668, %v2675
        %v2682 = vsel %vm2459, %v2676, %v2677
        %v2683 = vsel %vm572, %v2681, %v2682
        %v2686 = vadd.f32 %v2660, %v2680
        %v2687 = vadd.f32 %v2661, %v2683
        %2690 = vst [vmem:[#allocation1] ss:$4 sm:$0xff] %v2686
        %s2691 = scalar_lea.vmem [#allocation1], 32
        %2692 = vst [vmem:[%s2691] ss:$4 sm:$0xff] %v2687
        %v2693 = vld.sshfl [vmem:[#allocation1] sm:$0xff pattern:$0x73625140]
        %v2694 = vld.sshfl [vmem:[#allocation1 + $0x8] sm:$0xff pattern:$0x73625140]
        %v2695 = vld.sshfl [vmem:[#allocation1 + $0x10] sm:$0xff pattern:$0x73625140]
        %v2696 = vld.sshfl [vmem:[#allocation1 + $0x18] sm:$0xff pattern:$0x73625140]
        %v2697 = vld.sshfl [vmem:[#allocation1 + $0x20] sm:$0xff pattern:$0x73625140]
        %v2698 = vld.sshfl [vmem:[#allocation1 + $0x28] sm:$0xff pattern:$0x73625140]
        %v2699 = vld.sshfl [vmem:[#allocation1 + $0x30] sm:$0xff pattern:$0x73625140]
        %v2700 = vld.sshfl [vmem:[#allocation1 + $0x38] sm:$0xff pattern:$0x73625140]
        %v2709 = vpack.c.bf16 %v2693, %v2693
        %v2710 = vpack.c.bf16 %v2694, %v2694
        %v2711 = vpack.c.bf16 %v2695, %v2695
        %v2712 = vpack.c.bf16 %v2696, %v2696
        %v2713 = vpack.c.bf16 %v2697, %v2697
        %v2714 = vpack.c.bf16 %v2698, %v2698
        %v2715 = vpack.c.bf16 %v2699, %v2699
        %v2716 = vpack.c.bf16 %v2700, %v2700
        %v2717 = vld [vmem:[#allocation9] sm:$0xff]
        %v2718 = vld [vmem:[#allocation9 + $0x8] sm:$0xff]
        %v2719 = vld [vmem:[#allocation9 + $0x10] sm:$0xff]
        %v2720 = vld [vmem:[#allocation9 + $0x18] sm:$0xff]
        %v2721 = vld [vmem:[#allocation9 + $0x20] sm:$0xff]
        %v2722 = vld [vmem:[#allocation9 + $0x28] sm:$0xff]
        %v2723 = vld [vmem:[#allocation9 + $0x30] sm:$0xff]
        %v2724 = vld [vmem:[#allocation9 + $0x38] sm:$0xff]
        %v2725 = vld [vmem:[#allocation9 + $0x40] sm:$0xff]
        %v2726 = vld [vmem:[#allocation9 + $0x48] sm:$0xff]
        %v2727 = vld [vmem:[#allocation9 + $0x50] sm:$0xff]
        %v2728 = vld [vmem:[#allocation9 + $0x58] sm:$0xff]
        %v2729 = vld [vmem:[#allocation9 + $0x60] sm:$0xff]
        %v2730 = vld [vmem:[#allocation9 + $0x68] sm:$0xff]
        %v2731 = vld [vmem:[#allocation9 + $0x70] sm:$0xff]
        %v2732 = vld [vmem:[#allocation9 + $0x78] sm:$0xff]
        %v2733 = vld [vmem:[#allocation9 + $0x80] sm:$0xff]
        %v2734 = vld [vmem:[#allocation9 + $0x88] sm:$0xff]
        %v2735 = vld [vmem:[#allocation9 + $0x90] sm:$0xff]
        %v2736 = vld [vmem:[#allocation9 + $0x98] sm:$0xff]
        %v2737 = vld [vmem:[#allocation9 + $0xa0] sm:$0xff]
        %v2738 = vld [vmem:[#allocation9 + $0xa8] sm:$0xff]
        %v2739 = vld [vmem:[#allocation9 + $0xb0] sm:$0xff]
        %v2740 = vld [vmem:[#allocation9 + $0xb8] sm:$0xff]
        %v2741 = vld [vmem:[#allocation9 + $0xc0] sm:$0xff]
        %v2742 = vld [vmem:[#allocation9 + $0xc8] sm:$0xff]
        %v2743 = vld [vmem:[#allocation9 + $0xd0] sm:$0xff]
        %v2744 = vld [vmem:[#allocation9 + $0xd8] sm:$0xff]
        %v2745 = vld [vmem:[#allocation9 + $0xe0] sm:$0xff]
        %v2746 = vld [vmem:[#allocation9 + $0xe8] sm:$0xff]
        %v2747 = vld [vmem:[#allocation9 + $0xf0] sm:$0xff]
        %v2748 = vld [vmem:[#allocation9 + $0xf8] sm:$0xff]
        %v2749 = vld [vmem:[#allocation9 + $0x100] sm:$0xff]
        %v2750 = vld [vmem:[#allocation9 + $0x108] sm:$0xff]
        %v2751 = vld [vmem:[#allocation9 + $0x110] sm:$0xff]
        %v2752 = vld [vmem:[#allocation9 + $0x118] sm:$0xff]
        %v2753 = vld [vmem:[#allocation9 + $0x120] sm:$0xff]
        %v2754 = vld [vmem:[#allocation9 + $0x128] sm:$0xff]
        %v2755 = vld [vmem:[#allocation9 + $0x130] sm:$0xff]
        %v2756 = vld [vmem:[#allocation9 + $0x138] sm:$0xff]
        %v2757 = vld [vmem:[#allocation9 + $0x140] sm:$0xff]
        %v2758 = vld [vmem:[#allocation9 + $0x148] sm:$0xff]
        %v2759 = vld [vmem:[#allocation9 + $0x150] sm:$0xff]
        %v2760 = vld [vmem:[#allocation9 + $0x158] sm:$0xff]
        %v2761 = vld [vmem:[#allocation9 + $0x160] sm:$0xff]
        %v2762 = vld [vmem:[#allocation9 + $0x168] sm:$0xff]
        %v2763 = vld [vmem:[#allocation9 + $0x170] sm:$0xff]
        %v2764 = vld [vmem:[#allocation9 + $0x178] sm:$0xff]
        %v2765 = vld [vmem:[#allocation9 + $0x180] sm:$0xff]
        %v2766 = vld [vmem:[#allocation9 + $0x188] sm:$0xff]
        %v2767 = vld [vmem:[#allocation9 + $0x190] sm:$0xff]
        %v2768 = vld [vmem:[#allocation9 + $0x198] sm:$0xff]
        %v2769 = vld [vmem:[#allocation9 + $0x1a0] sm:$0xff]
        %v2770 = vld [vmem:[#allocation9 + $0x1a8] sm:$0xff]
        %v2771 = vld [vmem:[#allocation9 + $0x1b0] sm:$0xff]
        %v2772 = vld [vmem:[#allocation9 + $0x1b8] sm:$0xff]
        %v2773 = vld [vmem:[#allocation9 + $0x1c0] sm:$0xff]
        %v2774 = vld [vmem:[#allocation9 + $0x1c8] sm:$0xff]
        %v2775 = vld [vmem:[#allocation9 + $0x1d0] sm:$0xff]
        %v2776 = vld [vmem:[#allocation9 + $0x1d8] sm:$0xff]
        %v2777 = vld [vmem:[#allocation9 + $0x1e0] sm:$0xff]
        %v2778 = vld [vmem:[#allocation9 + $0x1e8] sm:$0xff]
        %v2779 = vld [vmem:[#allocation9 + $0x1f0] sm:$0xff]
        %v2780 = vld [vmem:[#allocation9 + $0x1f8] sm:$0xff]
        %v2781 = vld [vmem:[#allocation9 + $0x200] sm:$0xff]
        %v2782 = vld [vmem:[#allocation9 + $0x208] sm:$0xff]
        %v2783 = vld [vmem:[#allocation9 + $0x210] sm:$0xff]
        %v2784 = vld [vmem:[#allocation9 + $0x218] sm:$0xff]
        %v2785 = vld [vmem:[#allocation9 + $0x220] sm:$0xff]
        %v2786 = vld [vmem:[#allocation9 + $0x228] sm:$0xff]
        %v2787 = vld [vmem:[#allocation9 + $0x230] sm:$0xff]
        %v2788 = vld [vmem:[#allocation9 + $0x238] sm:$0xff]
        %v2789 = vld [vmem:[#allocation9 + $0x240] sm:$0xff]
        %v2790 = vld [vmem:[#allocation9 + $0x248] sm:$0xff]
        %v2791 = vld [vmem:[#allocation9 + $0x250] sm:$0xff]
        %v2792 = vld [vmem:[#allocation9 + $0x258] sm:$0xff]
        %v2793 = vld [vmem:[#allocation9 + $0x260] sm:$0xff]
        %v2794 = vld [vmem:[#allocation9 + $0x268] sm:$0xff]
        %v2795 = vld [vmem:[#allocation9 + $0x270] sm:$0xff]
        %v2796 = vld [vmem:[#allocation9 + $0x278] sm:$0xff]
        %v2797 = vld [vmem:[#allocation9 + $0x280] sm:$0xff]
        %v2798 = vld [vmem:[#allocation9 + $0x288] sm:$0xff]
        %v2799 = vld [vmem:[#allocation9 + $0x290] sm:$0xff]
        %v2800 = vld [vmem:[#allocation9 + $0x298] sm:$0xff]
        %v2801 = vld [vmem:[#allocation9 + $0x2a0] sm:$0xff]
        %v2802 = vld [vmem:[#allocation9 + $0x2a8] sm:$0xff]
        %v2803 = vld [vmem:[#allocation9 + $0x2b0] sm:$0xff]
        %v2804 = vld [vmem:[#allocation9 + $0x2b8] sm:$0xff]
        %v2805 = vld [vmem:[#allocation9 + $0x2c0] sm:$0xff]
        %v2806 = vld [vmem:[#allocation9 + $0x2c8] sm:$0xff]
        %v2807 = vld [vmem:[#allocation9 + $0x2d0] sm:$0xff]
        %v2808 = vld [vmem:[#allocation9 + $0x2d8] sm:$0xff]
        %v2809 = vld [vmem:[#allocation9 + $0x2e0] sm:$0xff]
        %v2810 = vld [vmem:[#allocation9 + $0x2e8] sm:$0xff]
        %v2811 = vld [vmem:[#allocation9 + $0x2f0] sm:$0xff]
        %v2812 = vld [vmem:[#allocation9 + $0x2f8] sm:$0xff]
        %v2813 = vld [vmem:[#allocation9 + $0x300] sm:$0xff]
        %v2814 = vld [vmem:[#allocation9 + $0x308] sm:$0xff]
        %v2815 = vld [vmem:[#allocation9 + $0x310] sm:$0xff]
        %v2816 = vld [vmem:[#allocation9 + $0x318] sm:$0xff]
        %v2817 = vld [vmem:[#allocation9 + $0x320] sm:$0xff]
        %v2818 = vld [vmem:[#allocation9 + $0x328] sm:$0xff]
        %v2819 = vld [vmem:[#allocation9 + $0x330] sm:$0xff]
        %v2820 = vld [vmem:[#allocation9 + $0x338] sm:$0xff]
        %v2821 = vld [vmem:[#allocation9 + $0x340] sm:$0xff]
        %v2822 = vld [vmem:[#allocation9 + $0x348] sm:$0xff]
        %v2823 = vld [vmem:[#allocation9 + $0x350] sm:$0xff]
        %v2824 = vld [vmem:[#allocation9 + $0x358] sm:$0xff]
        %v2825 = vld [vmem:[#allocation9 + $0x360] sm:$0xff]
        %v2826 = vld [vmem:[#allocation9 + $0x368] sm:$0xff]
        %v2827 = vld [vmem:[#allocation9 + $0x370] sm:$0xff]
        %v2828 = vld [vmem:[#allocation9 + $0x378] sm:$0xff]
        %v2829 = vld [vmem:[#allocation9 + $0x380] sm:$0xff]
        %v2830 = vld [vmem:[#allocation9 + $0x388] sm:$0xff]
        %v2831 = vld [vmem:[#allocation9 + $0x390] sm:$0xff]
        %v2832 = vld [vmem:[#allocation9 + $0x398] sm:$0xff]
        %v2833 = vld [vmem:[#allocation9 + $0x3a0] sm:$0xff]
        %v2834 = vld [vmem:[#allocation9 + $0x3a8] sm:$0xff]
        %v2835 = vld [vmem:[#allocation9 + $0x3b0] sm:$0xff]
        %v2836 = vld [vmem:[#allocation9 + $0x3b8] sm:$0xff]
        %v2837 = vld [vmem:[#allocation9 + $0x3c0] sm:$0xff]
        %v2838 = vld [vmem:[#allocation9 + $0x3c8] sm:$0xff]
        %v2839 = vld [vmem:[#allocation9 + $0x3d0] sm:$0xff]
        %v2840 = vld [vmem:[#allocation9 + $0x3d8] sm:$0xff]
        %v2841 = vld [vmem:[#allocation9 + $0x3e0] sm:$0xff]
        %v2842 = vld [vmem:[#allocation9 + $0x3e8] sm:$0xff]
        %v2843 = vld [vmem:[#allocation9 + $0x3f0] sm:$0xff]
        %v2844 = vld [vmem:[#allocation9 + $0x3f8] sm:$0xff]
        %v2845 = vld [vmem:[#allocation11] sm:$0x3]
        %v2847 = vperm.slane %v2845, 0
        %v2848 = vperm.slane %v2845, 1
        %v2979 = vunpack.c.l.b16 %v2717
        %v2980 = vunpack.c.h.b16 %v2717
        %v2981 = vunpack.c.l.b16 %v2718
        %v2982 = vunpack.c.h.b16 %v2718
        %v2983 = vunpack.c.l.b16 %v2719
        %v2984 = vunpack.c.h.b16 %v2719
        %v2985 = vunpack.c.l.b16 %v2720
        %v2986 = vunpack.c.h.b16 %v2720
        %v2987 = vunpack.c.l.b16 %v2721
        %v2988 = vunpack.c.h.b16 %v2721
        %v2989 = vunpack.c.l.b16 %v2722
        %v2990 = vunpack.c.h.b16 %v2722
        %v2991 = vunpack.c.l.b16 %v2723
        %v2992 = vunpack.c.h.b16 %v2723
        %v2993 = vunpack.c.l.b16 %v2724
        %v2994 = vunpack.c.h.b16 %v2724
        %v2995 = vunpack.c.l.b16 %v2725
        %v2996 = vunpack.c.h.b16 %v2725
        %v2997 = vunpack.c.l.b16 %v2726
        %v2998 = vunpack.c.h.b16 %v2726
        %v2999 = vunpack.c.l.b16 %v2727
        %v3000 = vunpack.c.h.b16 %v2727
        %v3001 = vunpack.c.l.b16 %v2728
        %v3002 = vunpack.c.h.b16 %v2728
        %v3003 = vunpack.c.l.b16 %v2729
        %v3004 = vunpack.c.h.b16 %v2729
        %v3005 = vunpack.c.l.b16 %v2730
        %v3006 = vunpack.c.h.b16 %v2730
        %v3007 = vunpack.c.l.b16 %v2731
        %v3008 = vunpack.c.h.b16 %v2731
        %v3009 = vunpack.c.l.b16 %v2732
        %v3010 = vunpack.c.h.b16 %v2732
        %v3011 = vunpack.c.l.b16 %v2733
        %v3012 = vunpack.c.h.b16 %v2733
        %v3013 = vunpack.c.l.b16 %v2734
        %v3014 = vunpack.c.h.b16 %v2734
        %v3015 = vunpack.c.l.b16 %v2735
        %v3016 = vunpack.c.h.b16 %v2735
        %v3017 = vunpack.c.l.b16 %v2736
        %v3018 = vunpack.c.h.b16 %v2736
        %v3019 = vunpack.c.l.b16 %v2737
        %v3020 = vunpack.c.h.b16 %v2737
        %v3021 = vunpack.c.l.b16 %v2738
        %v3022 = vunpack.c.h.b16 %v2738
        %v3023 = vunpack.c.l.b16 %v2739
        %v3024 = vunpack.c.h.b16 %v2739
        %v3025 = vunpack.c.l.b16 %v2740
        %v3026 = vunpack.c.h.b16 %v2740
        %v3027 = vunpack.c.l.b16 %v2741
        %v3028 = vunpack.c.h.b16 %v2741
        %v3029 = vunpack.c.l.b16 %v2742
        %v3030 = vunpack.c.h.b16 %v2742
        %v3031 = vunpack.c.l.b16 %v2743
        %v3032 = vunpack.c.h.b16 %v2743
        %v3033 = vunpack.c.l.b16 %v2744
        %v3034 = vunpack.c.h.b16 %v2744
        %v3035 = vunpack.c.l.b16 %v2745
        %v3036 = vunpack.c.h.b16 %v2745
        %v3037 = vunpack.c.l.b16 %v2746
        %v3038 = vunpack.c.h.b16 %v2746
        %v3039 = vunpack.c.l.b16 %v2747
        %v3040 = vunpack.c.h.b16 %v2747
        %v3041 = vunpack.c.l.b16 %v2748
        %v3042 = vunpack.c.h.b16 %v2748
        %v3043 = vunpack.c.l.b16 %v2749
        %v3044 = vunpack.c.h.b16 %v2749
        %v3045 = vunpack.c.l.b16 %v2750
        %v3046 = vunpack.c.h.b16 %v2750
        %v3047 = vunpack.c.l.b16 %v2751
        %v3048 = vunpack.c.h.b16 %v2751
        %v3049 = vunpack.c.l.b16 %v2752
        %v3050 = vunpack.c.h.b16 %v2752
        %v3051 = vunpack.c.l.b16 %v2753
        %v3052 = vunpack.c.h.b16 %v2753
        %v3053 = vunpack.c.l.b16 %v2754
        %v3054 = vunpack.c.h.b16 %v2754
        %v3055 = vunpack.c.l.b16 %v2755
        %v3056 = vunpack.c.h.b16 %v2755
        %v3057 = vunpack.c.l.b16 %v2756
        %v3058 = vunpack.c.h.b16 %v2756
        %v3059 = vunpack.c.l.b16 %v2757
        %v3060 = vunpack.c.h.b16 %v2757
        %v3061 = vunpack.c.l.b16 %v2758
        %v3062 = vunpack.c.h.b16 %v2758
        %v3063 = vunpack.c.l.b16 %v2759
        %v3064 = vunpack.c.h.b16 %v2759
        %v3065 = vunpack.c.l.b16 %v2760
        %v3066 = vunpack.c.h.b16 %v2760
        %v3067 = vunpack.c.l.b16 %v2761
        %v3068 = vunpack.c.h.b16 %v2761
        %v3069 = vunpack.c.l.b16 %v2762
        %v3070 = vunpack.c.h.b16 %v2762
        %v3071 = vunpack.c.l.b16 %v2763
        %v3072 = vunpack.c.h.b16 %v2763
        %v3073 = vunpack.c.l.b16 %v2764
        %v3074 = vunpack.c.h.b16 %v2764
        %v3075 = vunpack.c.l.b16 %v2765
        %v3076 = vunpack.c.h.b16 %v2765
        %v3077 = vunpack.c.l.b16 %v2766
        %v3078 = vunpack.c.h.b16 %v2766
        %v3079 = vunpack.c.l.b16 %v2767
        %v3080 = vunpack.c.h.b16 %v2767
        %v3081 = vunpack.c.l.b16 %v2768
        %v3082 = vunpack.c.h.b16 %v2768
        %v3083 = vunpack.c.l.b16 %v2769
        %v3084 = vunpack.c.h.b16 %v2769
        %v3085 = vunpack.c.l.b16 %v2770
        %v3086 = vunpack.c.h.b16 %v2770
        %v3087 = vunpack.c.l.b16 %v2771
        %v3088 = vunpack.c.h.b16 %v2771
        %v3089 = vunpack.c.l.b16 %v2772
        %v3090 = vunpack.c.h.b16 %v2772
        %v3091 = vunpack.c.l.b16 %v2773
        %v3092 = vunpack.c.h.b16 %v2773
        %v3093 = vunpack.c.l.b16 %v2774
        %v3094 = vunpack.c.h.b16 %v2774
        %v3095 = vunpack.c.l.b16 %v2775
        %v3096 = vunpack.c.h.b16 %v2775
        %v3097 = vunpack.c.l.b16 %v2776
        %v3098 = vunpack.c.h.b16 %v2776
        %v3099 = vunpack.c.l.b16 %v2777
        %v3100 = vunpack.c.h.b16 %v2777
        %v3101 = vunpack.c.l.b16 %v2778
        %v3102 = vunpack.c.h.b16 %v2778
        %v3103 = vunpack.c.l.b16 %v2779
        %v3104 = vunpack.c.h.b16 %v2779
        %v3105 = vunpack.c.l.b16 %v2780
        %v3106 = vunpack.c.h.b16 %v2780
        %v3107 = vunpack.c.l.b16 %v2781
        %v3108 = vunpack.c.h.b16 %v2781
        %v3109 = vunpack.c.l.b16 %v2782
        %v3110 = vunpack.c.h.b16 %v2782
        %v3111 = vunpack.c.l.b16 %v2783
        %v3112 = vunpack.c.h.b16 %v2783
        %v3113 = vunpack.c.l.b16 %v2784
        %v3114 = vunpack.c.h.b16 %v2784
        %v3115 = vunpack.c.l.b16 %v2785
        %v3116 = vunpack.c.h.b16 %v2785
        %v3117 = vunpack.c.l.b16 %v2786
        %v3118 = vunpack.c.h.b16 %v2786
        %v3119 = vunpack.c.l.b16 %v2787
        %v3120 = vunpack.c.h.b16 %v2787
        %v3121 = vunpack.c.l.b16 %v2788
        %v3122 = vunpack.c.h.b16 %v2788
        %v3123 = vunpack.c.l.b16 %v2789
        %v3124 = vunpack.c.h.b16 %v2789
        %v3125 = vunpack.c.l.b16 %v2790
        %v3126 = vunpack.c.h.b16 %v2790
        %v3127 = vunpack.c.l.b16 %v2791
        %v3128 = vunpack.c.h.b16 %v2791
        %v3129 = vunpack.c.l.b16 %v2792
        %v3130 = vunpack.c.h.b16 %v2792
        %v3131 = vunpack.c.l.b16 %v2793
        %v3132 = vunpack.c.h.b16 %v2793
        %v3133 = vunpack.c.l.b16 %v2794
        %v3134 = vunpack.c.h.b16 %v2794
        %v3135 = vunpack.c.l.b16 %v2795
        %v3136 = vunpack.c.h.b16 %v2795
        %v3137 = vunpack.c.l.b16 %v2796
        %v3138 = vunpack.c.h.b16 %v2796
        %v3139 = vunpack.c.l.b16 %v2797
        %v3140 = vunpack.c.h.b16 %v2797
        %v3141 = vunpack.c.l.b16 %v2798
        %v3142 = vunpack.c.h.b16 %v2798
        %v3143 = vunpack.c.l.b16 %v2799
        %v3144 = vunpack.c.h.b16 %v2799
        %v3145 = vunpack.c.l.b16 %v2800
        %v3146 = vunpack.c.h.b16 %v2800
        %v3147 = vunpack.c.l.b16 %v2801
        %v3148 = vunpack.c.h.b16 %v2801
        %v3149 = vunpack.c.l.b16 %v2802
        %v3150 = vunpack.c.h.b16 %v2802
        %v3151 = vunpack.c.l.b16 %v2803
        %v3152 = vunpack.c.h.b16 %v2803
        %v3153 = vunpack.c.l.b16 %v2804
        %v3154 = vunpack.c.h.b16 %v2804
        %v3155 = vunpack.c.l.b16 %v2805
        %v3156 = vunpack.c.h.b16 %v2805
        %v3157 = vunpack.c.l.b16 %v2806
        %v3158 = vunpack.c.h.b16 %v2806
        %v3159 = vunpack.c.l.b16 %v2807
        %v3160 = vunpack.c.h.b16 %v2807
        %v3161 = vunpack.c.l.b16 %v2808
        %v3162 = vunpack.c.h.b16 %v2808
        %v3163 = vunpack.c.l.b16 %v2809
        %v3164 = vunpack.c.h.b16 %v2809
        %v3165 = vunpack.c.l.b16 %v2810
        %v3166 = vunpack.c.h.b16 %v2810
        %v3167 = vunpack.c.l.b16 %v2811
        %v3168 = vunpack.c.h.b16 %v2811
        %v3169 = vunpack.c.l.b16 %v2812
        %v3170 = vunpack.c.h.b16 %v2812
        %v3171 = vunpack.c.l.b16 %v2813
        %v3172 = vunpack.c.h.b16 %v2813
        %v3173 = vunpack.c.l.b16 %v2814
        %v3174 = vunpack.c.h.b16 %v2814
        %v3175 = vunpack.c.l.b16 %v2815
        %v3176 = vunpack.c.h.b16 %v2815
        %v3177 = vunpack.c.l.b16 %v2816
        %v3178 = vunpack.c.h.b16 %v2816
        %v3179 = vunpack.c.l.b16 %v2817
        %v3180 = vunpack.c.h.b16 %v2817
        %v3181 = vunpack.c.l.b16 %v2818
        %v3182 = vunpack.c.h.b16 %v2818
        %v3183 = vunpack.c.l.b16 %v2819
        %v3184 = vunpack.c.h.b16 %v2819
        %v3185 = vunpack.c.l.b16 %v2820
        %v3186 = vunpack.c.h.b16 %v2820
        %v3187 = vunpack.c.l.b16 %v2821
        %v3188 = vunpack.c.h.b16 %v2821
        %v3189 = vunpack.c.l.b16 %v2822
        %v3190 = vunpack.c.h.b16 %v2822
        %v3191 = vunpack.c.l.b16 %v2823
        %v3192 = vunpack.c.h.b16 %v2823
        %v3193 = vunpack.c.l.b16 %v2824
        %v3194 = vunpack.c.h.b16 %v2824
        %v3195 = vunpack.c.l.b16 %v2825
        %v3196 = vunpack.c.h.b16 %v2825
        %v3197 = vunpack.c.l.b16 %v2826
        %v3198 = vunpack.c.h.b16 %v2826
        %v3199 = vunpack.c.l.b16 %v2827
        %v3200 = vunpack.c.h.b16 %v2827
        %v3201 = vunpack.c.l.b16 %v2828
        %v3202 = vunpack.c.h.b16 %v2828
        %v3203 = vunpack.c.l.b16 %v2829
        %v3204 = vunpack.c.h.b16 %v2829
        %v3205 = vunpack.c.l.b16 %v2830
        %v3206 = vunpack.c.h.b16 %v2830
        %v3207 = vunpack.c.l.b16 %v2831
        %v3208 = vunpack.c.h.b16 %v2831
        %v3209 = vunpack.c.l.b16 %v2832
        %v3210 = vunpack.c.h.b16 %v2832
        %v3211 = vunpack.c.l.b16 %v2833
        %v3212 = vunpack.c.h.b16 %v2833
        %v3213 = vunpack.c.l.b16 %v2834
        %v3214 = vunpack.c.h.b16 %v2834
        %v3215 = vunpack.c.l.b16 %v2835
        %v3216 = vunpack.c.h.b16 %v2835
        %v3217 = vunpack.c.l.b16 %v2836
        %v3218 = vunpack.c.h.b16 %v2836
        %v3219 = vunpack.c.l.b16 %v2837
        %v3220 = vunpack.c.h.b16 %v2837
        %v3221 = vunpack.c.l.b16 %v2838
        %v3222 = vunpack.c.h.b16 %v2838
        %v3223 = vunpack.c.l.b16 %v2839
        %v3224 = vunpack.c.h.b16 %v2839
        %v3225 = vunpack.c.l.b16 %v2840
        %v3226 = vunpack.c.h.b16 %v2840
        %v3227 = vunpack.c.l.b16 %v2841
        %v3228 = vunpack.c.h.b16 %v2841
        %v3229 = vunpack.c.l.b16 %v2842
        %v3230 = vunpack.c.h.b16 %v2842
        %v3231 = vunpack.c.l.b16 %v2843
        %v3232 = vunpack.c.h.b16 %v2843
        %v3233 = vunpack.c.l.b16 %v2844
        %v3234 = vunpack.c.h.b16 %v2844
        %v3235 = vpack.c.b16 %v2981, %v2979
        %v3236 = vpack.c.b16 %v2982, %v2980
        %v3237 = vpack.c.b16 %v2985, %v2983
        %v3238 = vpack.c.b16 %v2986, %v2984
        %v3239 = vpack.c.b16 %v2989, %v2987
        %v3240 = vpack.c.b16 %v2990, %v2988
        %v3241 = vpack.c.b16 %v2993, %v2991
        %v3242 = vpack.c.b16 %v2994, %v2992
        %v3243 = vpack.c.b16 %v2997, %v2995
        %v3244 = vpack.c.b16 %v2998, %v2996
        %v3245 = vpack.c.b16 %v3001, %v2999
        %v3246 = vpack.c.b16 %v3002, %v3000
        %v3247 = vpack.c.b16 %v3005, %v3003
        %v3248 = vpack.c.b16 %v3006, %v3004
        %v3249 = vpack.c.b16 %v3009, %v3007
        %v3250 = vpack.c.b16 %v3010, %v3008
        %v3251 = vpack.c.b16 %v3013, %v3011
        %v3252 = vpack.c.b16 %v3014, %v3012
        %v3253 = vpack.c.b16 %v3017, %v3015
        %v3254 = vpack.c.b16 %v3018, %v3016
        %v3255 = vpack.c.b16 %v3021, %v3019
        %v3256 = vpack.c.b16 %v3022, %v3020
        %v3257 = vpack.c.b16 %v3025, %v3023
        %v3258 = vpack.c.b16 %v3026, %v3024
        %v3259 = vpack.c.b16 %v3029, %v3027
        %v3260 = vpack.c.b16 %v3030, %v3028
        %v3261 = vpack.c.b16 %v3033, %v3031
        %v3262 = vpack.c.b16 %v3034, %v3032
        %v3263 = vpack.c.b16 %v3037, %v3035
        %v3264 = vpack.c.b16 %v3038, %v3036
        %v3265 = vpack.c.b16 %v3041, %v3039
        %v3266 = vpack.c.b16 %v3042, %v3040
        %v3267 = vpack.c.b16 %v3045, %v3043
        %v3268 = vpack.c.b16 %v3046, %v3044
        %v3269 = vpack.c.b16 %v3049, %v3047
        %v3270 = vpack.c.b16 %v3050, %v3048
        %v3271 = vpack.c.b16 %v3053, %v3051
        %v3272 = vpack.c.b16 %v3054, %v3052
        %v3273 = vpack.c.b16 %v3057, %v3055
        %v3274 = vpack.c.b16 %v3058, %v3056
        %v3275 = vpack.c.b16 %v3061, %v3059
        %v3276 = vpack.c.b16 %v3062, %v3060
        %v3277 = vpack.c.b16 %v3065, %v3063
        %v3278 = vpack.c.b16 %v3066, %v3064
        %v3279 = vpack.c.b16 %v3069, %v3067
        %v3280 = vpack.c.b16 %v3070, %v3068
        %v3281 = vpack.c.b16 %v3073, %v3071
        %v3282 = vpack.c.b16 %v3074, %v3072
        %v3283 = vpack.c.b16 %v3077, %v3075
        %v3284 = vpack.c.b16 %v3078, %v3076
        %v3285 = vpack.c.b16 %v3081, %v3079
        %v3286 = vpack.c.b16 %v3082, %v3080
        %v3287 = vpack.c.b16 %v3085, %v3083
        %v3288 = vpack.c.b16 %v3086, %v3084
        %v3289 = vpack.c.b16 %v3089, %v3087
        %v3290 = vpack.c.b16 %v3090, %v3088
        %v3291 = vpack.c.b16 %v3093, %v3091
        %v3292 = vpack.c.b16 %v3094, %v3092
        %v3293 = vpack.c.b16 %v3097, %v3095
        %v3294 = vpack.c.b16 %v3098, %v3096
        %v3295 = vpack.c.b16 %v3101, %v3099
        %v3296 = vpack.c.b16 %v3102, %v3100
        %v3297 = vpack.c.b16 %v3105, %v3103
        %v3298 = vpack.c.b16 %v3106, %v3104
        %v3299 = vpack.c.b16 %v3109, %v3107
        %v3300 = vpack.c.b16 %v3110, %v3108
        %v3301 = vpack.c.b16 %v3113, %v3111
        %v3302 = vpack.c.b16 %v3114, %v3112
        %v3303 = vpack.c.b16 %v3117, %v3115
        %v3304 = vpack.c.b16 %v3118, %v3116
        %v3305 = vpack.c.b16 %v3121, %v3119
        %v3306 = vpack.c.b16 %v3122, %v3120
        %v3307 = vpack.c.b16 %v3125, %v3123
        %v3308 = vpack.c.b16 %v3126, %v3124
        %v3309 = vpack.c.b16 %v3129, %v3127
        %v3310 = vpack.c.b16 %v3130, %v3128
        %v3311 = vpack.c.b16 %v3133, %v3131
        %v3312 = vpack.c.b16 %v3134, %v3132
        %v3313 = vpack.c.b16 %v3137, %v3135
        %v3314 = vpack.c.b16 %v3138, %v3136
        %v3315 = vpack.c.b16 %v3141, %v3139
        %v3316 = vpack.c.b16 %v3142, %v3140
        %v3317 = vpack.c.b16 %v3145, %v3143
        %v3318 = vpack.c.b16 %v3146, %v3144
        %v3319 = vpack.c.b16 %v3149, %v3147
        %v3320 = vpack.c.b16 %v3150, %v3148
        %v3321 = vpack.c.b16 %v3153, %v3151
        %v3322 = vpack.c.b16 %v3154, %v3152
        %v3323 = vpack.c.b16 %v3157, %v3155
        %v3324 = vpack.c.b16 %v3158, %v3156
        %v3325 = vpack.c.b16 %v3161, %v3159
        %v3326 = vpack.c.b16 %v3162, %v3160
        %v3327 = vpack.c.b16 %v3165, %v3163
        %v3328 = vpack.c.b16 %v3166, %v3164
        %v3329 = vpack.c.b16 %v3169, %v3167
        %v3330 = vpack.c.b16 %v3170, %v3168
        %v3331 = vpack.c.b16 %v3173, %v3171
        %v3332 = vpack.c.b16 %v3174, %v3172
        %v3333 = vpack.c.b16 %v3177, %v3175
        %v3334 = vpack.c.b16 %v3178, %v3176
        %v3335 = vpack.c.b16 %v3181, %v3179
        %v3336 = vpack.c.b16 %v3182, %v3180
        %v3337 = vpack.c.b16 %v3185, %v3183
        %v3338 = vpack.c.b16 %v3186, %v3184
        %v3339 = vpack.c.b16 %v3189, %v3187
        %v3340 = vpack.c.b16 %v3190, %v3188
        %v3341 = vpack.c.b16 %v3193, %v3191
        %v3342 = vpack.c.b16 %v3194, %v3192
        %v3343 = vpack.c.b16 %v3197, %v3195
        %v3344 = vpack.c.b16 %v3198, %v3196
        %v3345 = vpack.c.b16 %v3201, %v3199
        %v3346 = vpack.c.b16 %v3202, %v3200
        %v3347 = vpack.c.b16 %v3205, %v3203
        %v3348 = vpack.c.b16 %v3206, %v3204
        %v3349 = vpack.c.b16 %v3209, %v3207
        %v3350 = vpack.c.b16 %v3210, %v3208
        %v3351 = vpack.c.b16 %v3213, %v3211
        %v3352 = vpack.c.b16 %v3214, %v3212
        %v3353 = vpack.c.b16 %v3217, %v3215
        %v3354 = vpack.c.b16 %v3218, %v3216
        %v3355 = vpack.c.b16 %v3221, %v3219
        %v3356 = vpack.c.b16 %v3222, %v3220
        %v3357 = vpack.c.b16 %v3225, %v3223
        %v3358 = vpack.c.b16 %v3226, %v3224
        %v3359 = vpack.c.b16 %v3229, %v3227
        %v3360 = vpack.c.b16 %v3230, %v3228
        %v3361 = vpack.c.b16 %v3233, %v3231
        %v3362 = vpack.c.b16 %v3234, %v3232
        %3491 = vmatpush.bf16.msra.mxu0 %v3249
        %3492 = vmatpush.bf16.msra.mxu0 %v3247
        %3493 = vmatpush.bf16.msra.mxu0 %v3245
        %3494 = vmatpush.bf16.msra.mxu0 %v3243
        %3495 = vmatpush.bf16.msra.mxu0 %v3241
        %3496 = vmatpush.bf16.msra.mxu0 %v3239
        %3497 = vmatpush.bf16.msra.mxu0 %v3237
        %3498 = vmatpush.bf16.msra.mxu0 %v3235
        %3499 = vmatmul.bf16.gmra.mxu0 %v2709
        %v3500 = vpop.f32.mrf.mxu0
        %v3501 = vadd.f32 %v2847, %v3500
        %v3502 = vpop.f32.mrf.mxu0
        %3503 = vdwg.mxu0
        %3504 = vmatpush.bf16.msra.mxu0 %v3265
        %3505 = vmatpush.bf16.msra.mxu0 %v3263
        %3506 = vmatpush.bf16.msra.mxu0 %v3261
        %3507 = vmatpush.bf16.msra.mxu0 %v3259
        %3508 = vmatpush.bf16.msra.mxu0 %v3257
        %3509 = vmatpush.bf16.msra.mxu0 %v3255
        %3510 = vmatpush.bf16.msra.mxu0 %v3253
        %3511 = vmatpush.bf16.msra.mxu0 %v3251
        %3512 = vmatmul.bf16.gmra.mxu0 %v2710
        %v3513 = vpop.f32.mrf.mxu0
        %v3514 = vadd.f32 %v3501, %v3513
        %v3515 = vpop.f32.mrf.mxu0
        %3516 = vdwg.mxu0
        %3517 = vmatpush.bf16.msra.mxu0 %v3281
        %3518 = vmatpush.bf16.msra.mxu0 %v3279
        %3519 = vmatpush.bf16.msra.mxu0 %v3277
        %3520 = vmatpush.bf16.msra.mxu0 %v3275
        %3521 = vmatpush.bf16.msra.mxu0 %v3273
        %3522 = vmatpush.bf16.msra.mxu0 %v3271
        %3523 = vmatpush.bf16.msra.mxu0 %v3269
        %3524 = vmatpush.bf16.msra.mxu0 %v3267
        %3525 = vmatmul.bf16.gmra.mxu0 %v2711
        %v3526 = vpop.f32.mrf.mxu0
        %v3527 = vadd.f32 %v3514, %v3526
        %v3528 = vpop.f32.mrf.mxu0
        %3529 = vdwg.mxu0
        %3530 = vmatpush.bf16.msra.mxu0 %v3297
        %3531 = vmatpush.bf16.msra.mxu0 %v3295
        %3532 = vmatpush.bf16.msra.mxu0 %v3293
        %3533 = vmatpush.bf16.msra.mxu0 %v3291
        %3534 = vmatpush.bf16.msra.mxu0 %v3289
        %3535 = vmatpush.bf16.msra.mxu0 %v3287
        %3536 = vmatpush.bf16.msra.mxu0 %v3285
        %3537 = vmatpush.bf16.msra.mxu0 %v3283
        %3538 = vmatmul.bf16.gmra.mxu0 %v2712
        %v3539 = vpop.f32.mrf.mxu0
        %v3540 = vadd.f32 %v3527, %v3539
        %v3541 = vpop.f32.mrf.mxu0
        %3542 = vdwg.mxu0
        %3543 = vmatpush.bf16.msra.mxu0 %v3313
        %3544 = vmatpush.bf16.msra.mxu0 %v3311
        %3545 = vmatpush.bf16.msra.mxu0 %v3309
        %3546 = vmatpush.bf16.msra.mxu0 %v3307
        %3547 = vmatpush.bf16.msra.mxu0 %v3305
        %3548 = vmatpush.bf16.msra.mxu0 %v3303
        %3549 = vmatpush.bf16.msra.mxu0 %v3301
        %3550 = vmatpush.bf16.msra.mxu0 %v3299
        %3551 = vmatmul.bf16.gmra.mxu0 %v2713
        %v3552 = vpop.f32.mrf.mxu0
        %v3553 = vadd.f32 %v3540, %v3552
        %v3554 = vpop.f32.mrf.mxu0
        %3555 = vdwg.mxu0
        %3556 = vmatpush.bf16.msra.mxu0 %v3329
        %3557 = vmatpush.bf16.msra.mxu0 %v3327
        %3558 = vmatpush.bf16.msra.mxu0 %v3325
        %3559 = vmatpush.bf16.msra.mxu0 %v3323
        %3560 = vmatpush.bf16.msra.mxu0 %v3321
        %3561 = vmatpush.bf16.msra.mxu0 %v3319
        %3562 = vmatpush.bf16.msra.mxu0 %v3317
        %3563 = vmatpush.bf16.msra.mxu0 %v3315
        %3564 = vmatmul.bf16.gmra.mxu0 %v2714
        %v3565 = vpop.f32.mrf.mxu0
        %v3566 = vadd.f32 %v3553, %v3565
        %v3567 = vpop.f32.mrf.mxu0
        %3568 = vdwg.mxu0
        %3569 = vmatpush.bf16.msra.mxu0 %v3345
        %3570 = vmatpush.bf16.msra.mxu0 %v3343
        %3571 = vmatpush.bf16.msra.mxu0 %v3341
        %3572 = vmatpush.bf16.msra.mxu0 %v3339
        %3573 = vmatpush.bf16.msra.mxu0 %v3337
        %3574 = vmatpush.bf16.msra.mxu0 %v3335
        %3575 = vmatpush.bf16.msra.mxu0 %v3333
        %3576 = vmatpush.bf16.msra.mxu0 %v3331
        %3577 = vmatmul.bf16.gmra.mxu0 %v2715
        %v3578 = vpop.f32.mrf.mxu0
        %v3579 = vadd.f32 %v3566, %v3578
        %v3580 = vpop.f32.mrf.mxu0
        %3581 = vdwg.mxu0
        %3582 = vmatpush.bf16.msra.mxu0 %v3361
        %3583 = vmatpush.bf16.msra.mxu0 %v3359
        %3584 = vmatpush.bf16.msra.mxu0 %v3357
        %3585 = vmatpush.bf16.msra.mxu0 %v3355
        %3586 = vmatpush.bf16.msra.mxu0 %v3353
        %3587 = vmatpush.bf16.msra.mxu0 %v3351
        %3588 = vmatpush.bf16.msra.mxu0 %v3349
        %3589 = vmatpush.bf16.msra.mxu0 %v3347
        %3590 = vmatmul.bf16.gmra.mxu0 %v2716
        %v3591 = vpop.f32.mrf.mxu0
        %v3592 = vadd.f32 %v3579, %v3591
        %v3593 = vpop.f32.mrf.mxu0
        %3594 = vdwg.mxu0
        %3595 = vmatpush.bf16.msra.mxu0 %v3250
        %3596 = vmatpush.bf16.msra.mxu0 %v3248
        %3597 = vmatpush.bf16.msra.mxu0 %v3246
        %3598 = vmatpush.bf16.msra.mxu0 %v3244
        %3599 = vmatpush.bf16.msra.mxu0 %v3242
        %3600 = vmatpush.bf16.msra.mxu0 %v3240
        %3601 = vmatpush.bf16.msra.mxu0 %v3238
        %3602 = vmatpush.bf16.msra.mxu0 %v3236
        %3603 = vmatmul.bf16.gmra.mxu0 %v2709
        %v3604 = vpop.f32.mrf.mxu0
        %v3605 = vadd.f32 %v2848, %v3604
        %v3606 = vpop.f32.mrf.mxu0
        %3607 = vdwg.mxu0
        %3608 = vmatpush.bf16.msra.mxu0 %v3266
        %3609 = vmatpush.bf16.msra.mxu0 %v3264
        %3610 = vmatpush.bf16.msra.mxu0 %v3262
        %3611 = vmatpush.bf16.msra.mxu0 %v3260
        %3612 = vmatpush.bf16.msra.mxu0 %v3258
        %3613 = vmatpush.bf16.msra.mxu0 %v3256
        %3614 = vmatpush.bf16.msra.mxu0 %v3254
        %3615 = vmatpush.bf16.msra.mxu0 %v3252
        %3616 = vmatmul.bf16.gmra.mxu0 %v2710
        %v3617 = vpop.f32.mrf.mxu0
        %v3618 = vadd.f32 %v3605, %v3617
        %v3619 = vpop.f32.mrf.mxu0
        %3620 = vdwg.mxu0
        %3621 = vmatpush.bf16.msra.mxu0 %v3282
        %3622 = vmatpush.bf16.msra.mxu0 %v3280
        %3623 = vmatpush.bf16.msra.mxu0 %v3278
        %3624 = vmatpush.bf16.msra.mxu0 %v3276
        %3625 = vmatpush.bf16.msra.mxu0 %v3274
        %3626 = vmatpush.bf16.msra.mxu0 %v3272
        %3627 = vmatpush.bf16.msra.mxu0 %v3270
        %3628 = vmatpush.bf16.msra.mxu0 %v3268
        %3629 = vmatmul.bf16.gmra.mxu0 %v2711
        %v3630 = vpop.f32.mrf.mxu0
        %v3631 = vadd.f32 %v3618, %v3630
        %v3632 = vpop.f32.mrf.mxu0
        %3633 = vdwg.mxu0
        %3634 = vmatpush.bf16.msra.mxu0 %v3298
        %3635 = vmatpush.bf16.msra.mxu0 %v3296
        %3636 = vmatpush.bf16.msra.mxu0 %v3294
        %3637 = vmatpush.bf16.msra.mxu0 %v3292
        %3638 = vmatpush.bf16.msra.mxu0 %v3290
        %3639 = vmatpush.bf16.msra.mxu0 %v3288
        %3640 = vmatpush.bf16.msra.mxu0 %v3286
        %3641 = vmatpush.bf16.msra.mxu0 %v3284
        %3642 = vmatmul.bf16.gmra.mxu0 %v2712
        %v3643 = vpop.f32.mrf.mxu0
        %v3644 = vadd.f32 %v3631, %v3643
        %v3645 = vpop.f32.mrf.mxu0
        %3646 = vdwg.mxu0
        %3647 = vmatpush.bf16.msra.mxu0 %v3314
        %3648 = vmatpush.bf16.msra.mxu0 %v3312
        %3649 = vmatpush.bf16.msra.mxu0 %v3310
        %3650 = vmatpush.bf16.msra.mxu0 %v3308
        %3651 = vmatpush.bf16.msra.mxu0 %v3306
        %3652 = vmatpush.bf16.msra.mxu0 %v3304
        %3653 = vmatpush.bf16.msra.mxu0 %v3302
        %3654 = vmatpush.bf16.msra.mxu0 %v3300
        %3655 = vmatmul.bf16.gmra.mxu0 %v2713
        %v3656 = vpop.f32.mrf.mxu0
        %v3657 = vadd.f32 %v3644, %v3656
        %v3658 = vpop.f32.mrf.mxu0
        %3659 = vdwg.mxu0
        %3660 = vmatpush.bf16.msra.mxu0 %v3330
        %3661 = vmatpush.bf16.msra.mxu0 %v3328
        %3662 = vmatpush.bf16.msra.mxu0 %v3326
        %3663 = vmatpush.bf16.msra.mxu0 %v3324
        %3664 = vmatpush.bf16.msra.mxu0 %v3322
        %3665 = vmatpush.bf16.msra.mxu0 %v3320
        %3666 = vmatpush.bf16.msra.mxu0 %v3318
        %3667 = vmatpush.bf16.msra.mxu0 %v3316
        %3668 = vmatmul.bf16.gmra.mxu0 %v2714
        %v3669 = vpop.f32.mrf.mxu0
        %v3670 = vadd.f32 %v3657, %v3669
        %v3671 = vpop.f32.mrf.mxu0
        %3672 = vdwg.mxu0
        %3673 = vmatpush.bf16.msra.mxu0 %v3346
        %3674 = vmatpush.bf16.msra.mxu0 %v3344
        %3675 = vmatpush.bf16.msra.mxu0 %v3342
        %3676 = vmatpush.bf16.msra.mxu0 %v3340
        %3677 = vmatpush.bf16.msra.mxu0 %v3338
        %3678 = vmatpush.bf16.msra.mxu0 %v3336
        %3679 = vmatpush.bf16.msra.mxu0 %v3334
        %3680 = vmatpush.bf16.msra.mxu0 %v3332
        %3681 = vmatmul.bf16.gmra.mxu0 %v2715
        %v3682 = vpop.f32.mrf.mxu0
        %v3683 = vadd.f32 %v3670, %v3682
        %v3684 = vpop.f32.mrf.mxu0
        %3685 = vdwg.mxu0
        %3686 = vmatpush.bf16.msra.mxu0 %v3362
        %3687 = vmatpush.bf16.msra.mxu0 %v3360
        %3688 = vmatpush.bf16.msra.mxu0 %v3358
        %3689 = vmatpush.bf16.msra.mxu0 %v3356
        %3690 = vmatpush.bf16.msra.mxu0 %v3354
        %3691 = vmatpush.bf16.msra.mxu0 %v3352
        %3692 = vmatpush.bf16.msra.mxu0 %v3350
        %3693 = vmatpush.bf16.msra.mxu0 %v3348
        %3694 = vmatmul.bf16.gmra.mxu0 %v2716
        %v3695 = vpop.f32.mrf.mxu0
        %v3696 = vadd.f32 %v3683, %v3695
        %v3697 = vpop.f32.mrf.mxu0
        %3698 = vdwg.mxu0
        %v3701 = vrot.slane %v3696, 7
        %v3702 = vsel %vm2449, %v3592, %v3701
        %vm3703 = vcmask 1041409
        %v3704 = vsel %vm3703, %v3592, %v3701
        %v3705 = vrot.slane %v3704, 1
        %v3706 = vld [vmem:[#allocation2] sm:$0xf]
        %v3707 = vld [vmem:[#allocation2 + $0x4] sm:$0xf]
        %v3708 = vld [vmem:[#allocation2 + $0x8] sm:$0xf]
        %v3709 = vld [vmem:[#allocation2 + $0xc] sm:$0xf]
        %v3710 = vld [vmem:[#allocation2 + $0x10] sm:$0xf]
        %v3711 = vld [vmem:[#allocation2 + $0x14] sm:$0xf]
        %v3712 = vld [vmem:[#allocation2 + $0x18] sm:$0xf]
        %v3713 = vld [vmem:[#allocation2 + $0x1c] sm:$0xf]
        %v3714 = vld [vmem:[#allocation2 + $0x20] sm:$0xf]
        %v3715 = vld [vmem:[#allocation2 + $0x24] sm:$0xf]
        %v3716 = vld [vmem:[#allocation2 + $0x28] sm:$0xf]
        %v3717 = vld [vmem:[#allocation2 + $0x2c] sm:$0xf]
        %v3718 = vld [vmem:[#allocation2 + $0x30] sm:$0xf]
        %v3719 = vld [vmem:[#allocation2 + $0x34] sm:$0xf]
        %v3720 = vld [vmem:[#allocation2 + $0x38] sm:$0xf]
        %v3721 = vld [vmem:[#allocation2 + $0x3c] sm:$0xf]
        %v3722 = vld [vmem:[#allocation2 + $0x40] sm:$0xf]
        %v3723 = vld [vmem:[#allocation2 + $0x44] sm:$0xf]
        %v3724 = vld [vmem:[#allocation2 + $0x48] sm:$0xf]
        %v3725 = vld [vmem:[#allocation2 + $0x4c] sm:$0xf]
        %v3726 = vld [vmem:[#allocation2 + $0x50] sm:$0xf]
        %v3727 = vld [vmem:[#allocation2 + $0x54] sm:$0xf]
        %v3728 = vld [vmem:[#allocation2 + $0x58] sm:$0xf]
        %v3729 = vld [vmem:[#allocation2 + $0x5c] sm:$0xf]
        %v3730 = vld [vmem:[#allocation2 + $0x60] sm:$0xf]
        %v3731 = vld [vmem:[#allocation2 + $0x64] sm:$0xf]
        %v3732 = vld [vmem:[#allocation2 + $0x68] sm:$0xf]
        %v3733 = vld [vmem:[#allocation2 + $0x6c] sm:$0xf]
        %v3734 = vld [vmem:[#allocation2 + $0x70] sm:$0xf]
        %v3735 = vld [vmem:[#allocation2 + $0x74] sm:$0xf]
        %v3736 = vld [vmem:[#allocation2 + $0x78] sm:$0xf]
        %v3737 = vld [vmem:[#allocation2 + $0x7c] sm:$0xf]
        %v3738 = vld [vmem:[%s8] sm:$0xff]
        %v3739 = vld [vmem:[%s8 + $0x8] sm:$0xff]
        %v3740 = vld [vmem:[%s8 + $0x10] sm:$0xff]
        %v3741 = vld [vmem:[%s8 + $0x18] sm:$0xff]
        %v3742 = vld [vmem:[%s8 + $0x20] sm:$0xff]
        %v3743 = vld [vmem:[%s8 + $0x28] sm:$0xff]
        %v3744 = vld [vmem:[%s8 + $0x30] sm:$0xff]
        %v3745 = vld [vmem:[%s8 + $0x38] sm:$0xff]
        %v3778 = vunpack.c.l.b16 %v3706
        %v3779 = vunpack.c.l.b16 %v3707
        %v3780 = vunpack.c.l.b16 %v3708
        %v3781 = vunpack.c.l.b16 %v3709
        %v3782 = vunpack.c.l.b16 %v3710
        %v3783 = vunpack.c.l.b16 %v3711
        %v3784 = vunpack.c.l.b16 %v3712
        %v3785 = vunpack.c.l.b16 %v3713
        %v3786 = vunpack.c.l.b16 %v3714
        %v3787 = vunpack.c.l.b16 %v3715
        %v3788 = vunpack.c.l.b16 %v3716
        %v3789 = vunpack.c.l.b16 %v3717
        %v3790 = vunpack.c.l.b16 %v3718
        %v3791 = vunpack.c.l.b16 %v3719
        %v3792 = vunpack.c.l.b16 %v3720
        %v3793 = vunpack.c.l.b16 %v3721
        %v3794 = vunpack.c.l.b16 %v3722
        %v3795 = vunpack.c.l.b16 %v3723
        %v3796 = vunpack.c.l.b16 %v3724
        %v3797 = vunpack.c.l.b16 %v3725
        %v3798 = vunpack.c.l.b16 %v3726
        %v3799 = vunpack.c.l.b16 %v3727
        %v3800 = vunpack.c.l.b16 %v3728
        %v3801 = vunpack.c.l.b16 %v3729
        %v3802 = vunpack.c.l.b16 %v3730
        %v3803 = vunpack.c.l.b16 %v3731
        %v3804 = vunpack.c.l.b16 %v3732
        %v3805 = vunpack.c.l.b16 %v3733
        %v3806 = vunpack.c.l.b16 %v3734
        %v3807 = vunpack.c.l.b16 %v3735
        %v3808 = vunpack.c.l.b16 %v3736
        %v3809 = vunpack.c.l.b16 %v3737
        %v3810 = vpack.c.b16 %v3779, %v3778
        %v3811 = vpack.c.b16 %v3781, %v3780
        %v3812 = vpack.c.b16 %v3783, %v3782
        %v3813 = vpack.c.b16 %v3785, %v3784
        %v3814 = vpack.c.b16 %v3787, %v3786
        %v3815 = vpack.c.b16 %v3789, %v3788
        %v3816 = vpack.c.b16 %v3791, %v3790
        %v3817 = vpack.c.b16 %v3793, %v3792
        %v3818 = vpack.c.b16 %v3795, %v3794
        %v3819 = vpack.c.b16 %v3797, %v3796
        %v3820 = vpack.c.b16 %v3799, %v3798
        %v3821 = vpack.c.b16 %v3801, %v3800
        %v3822 = vpack.c.b16 %v3803, %v3802
        %v3823 = vpack.c.b16 %v3805, %v3804
        %v3824 = vpack.c.b16 %v3807, %v3806
        %v3825 = vpack.c.b16 %v3809, %v3808
        %v3834 = vunpack.c.l.b16 %v3738
        %v3835 = vunpack.c.h.b16 %v3738
        %v3836 = vunpack.c.l.b16 %v3739
        %v3837 = vunpack.c.h.b16 %v3739
        %v3838 = vunpack.c.l.b16 %v3740
        %v3839 = vunpack.c.h.b16 %v3740
        %v3840 = vunpack.c.l.b16 %v3741
        %v3841 = vunpack.c.h.b16 %v3741
        %v3842 = vunpack.c.l.b16 %v3742
        %v3843 = vunpack.c.h.b16 %v3742
        %v3844 = vunpack.c.l.b16 %v3743
        %v3845 = vunpack.c.h.b16 %v3743
        %v3846 = vunpack.c.l.b16 %v3744
        %v3847 = vunpack.c.h.b16 %v3744
        %v3848 = vunpack.c.l.b16 %v3745
        %v3849 = vunpack.c.h.b16 %v3745
        %v3850 = vpack.c.b16 %v3836, %v3834
        %v3851 = vpack.c.b16 %v3837, %v3835
        %v3852 = vpack.c.b16 %v3840, %v3838
        %v3853 = vpack.c.b16 %v3841, %v3839
        %v3854 = vpack.c.b16 %v3844, %v3842
        %v3855 = vpack.c.b16 %v3845, %v3843
        %v3856 = vpack.c.b16 %v3848, %v3846
        %v3857 = vpack.c.b16 %v3849, %v3847
        %v3867 = vsel %vm983, %v3810, 0
        %v3870 = vsel %vm983, %v3811, 0
        %v3873 = vsel %vm983, %v3812, 0
        %v3876 = vsel %vm983, %v3813, 0
        %v3879 = vsel %vm983, %v3814, 0
        %v3882 = vsel %vm983, %v3815, 0
        %v3885 = vsel %vm983, %v3816, 0
        %v3888 = vsel %vm983, %v3817, 0
        %v3891 = vsel %vm983, %v3818, 0
        %v3894 = vsel %vm983, %v3819, 0
        %v3897 = vsel %vm983, %v3820, 0
        %v3900 = vsel %vm983, %v3821, 0
        %v3903 = vsel %vm983, %v3822, 0
        %v3906 = vsel %vm983, %v3823, 0
        %v3909 = vsel %vm983, %v3824, 0
        %v3912 = vsel %vm983, %v3825, 0
        %3914 = vmatpush.bf16.msra.mxu0 0
        %3915 = vmatpush.bf16.msra.mxu0 0
        %3916 = vmatpush.bf16.msra.mxu0 0
        %3917 = vmatpush.bf16.msra.mxu0 0
        %3918 = vmatpush.bf16.msra.mxu0 %v3856
        %3919 = vmatpush.bf16.msra.mxu0 %v3854
        %3920 = vmatpush.bf16.msra.mxu0 %v3852
        %3921 = vmatpush.bf16.msra.mxu0 %v3850
        %3922 = vmatmul.bf16.gmra.mxu0 %v3867
        %v3923 = vpop.f32.mrf.mxu0
        %v3924 = vadd.f32 0.0, %v3923
        %v3925 = vpop.f32.mrf.mxu0
        %v3926 = vadd.f32 0.0, %v3925
        %3927 = vmatmul.bf16.gmra.mxu0 %v3870
        %v3928 = vpop.f32.mrf.mxu0
        %v3929 = vadd.f32 0.0, %v3928
        %v3930 = vpop.f32.mrf.mxu0
        %v3931 = vadd.f32 0.0, %v3930
        %3932 = vmatmul.bf16.gmra.mxu0 %v3873
        %v3933 = vpop.f32.mrf.mxu0
        %v3934 = vadd.f32 0.0, %v3933
        %v3935 = vpop.f32.mrf.mxu0
        %v3936 = vadd.f32 0.0, %v3935
        %3937 = vmatmul.bf16.gmra.mxu0 %v3876
        %v3938 = vpop.f32.mrf.mxu0
        %v3939 = vadd.f32 0.0, %v3938
        %v3940 = vpop.f32.mrf.mxu0
        %v3941 = vadd.f32 0.0, %v3940
        %3942 = vmatmul.bf16.gmra.mxu0 %v3879
        %v3943 = vpop.f32.mrf.mxu0
        %v3944 = vadd.f32 0.0, %v3943
        %v3945 = vpop.f32.mrf.mxu0
        %v3946 = vadd.f32 0.0, %v3945
        %3947 = vmatmul.bf16.gmra.mxu0 %v3882
        %v3948 = vpop.f32.mrf.mxu0
        %v3949 = vadd.f32 0.0, %v3948
        %v3950 = vpop.f32.mrf.mxu0
        %v3951 = vadd.f32 0.0, %v3950
        %3952 = vmatmul.bf16.gmra.mxu0 %v3885
        %v3953 = vpop.f32.mrf.mxu0
        %v3954 = vadd.f32 0.0, %v3953
        %v3955 = vpop.f32.mrf.mxu0
        %v3956 = vadd.f32 0.0, %v3955
        %3957 = vmatmul.bf16.gmra.mxu0 %v3888
        %v3958 = vpop.f32.mrf.mxu0
        %v3959 = vadd.f32 0.0, %v3958
        %v3960 = vpop.f32.mrf.mxu0
        %v3961 = vadd.f32 0.0, %v3960
        %3962 = vmatmul.bf16.gmra.mxu0 %v3891
        %v3963 = vpop.f32.mrf.mxu0
        %v3964 = vadd.f32 0.0, %v3963
        %v3965 = vpop.f32.mrf.mxu0
        %v3966 = vadd.f32 0.0, %v3965
        %3967 = vmatmul.bf16.gmra.mxu0 %v3894
        %v3968 = vpop.f32.mrf.mxu0
        %v3969 = vadd.f32 0.0, %v3968
        %v3970 = vpop.f32.mrf.mxu0
        %v3971 = vadd.f32 0.0, %v3970
        %3972 = vmatmul.bf16.gmra.mxu0 %v3897
        %v3973 = vpop.f32.mrf.mxu0
        %v3974 = vadd.f32 0.0, %v3973
        %v3975 = vpop.f32.mrf.mxu0
        %v3976 = vadd.f32 0.0, %v3975
        %3977 = vmatmul.bf16.gmra.mxu0 %v3900
        %v3978 = vpop.f32.mrf.mxu0
        %v3979 = vadd.f32 0.0, %v3978
        %v3980 = vpop.f32.mrf.mxu0
        %v3981 = vadd.f32 0.0, %v3980
        %3982 = vmatmul.bf16.gmra.mxu0 %v3903
        %v3983 = vpop.f32.mrf.mxu0
        %v3984 = vadd.f32 0.0, %v3983
        %v3985 = vpop.f32.mrf.mxu0
        %v3986 = vadd.f32 0.0, %v3985
        %3987 = vmatmul.bf16.gmra.mxu0 %v3906
        %v3988 = vpop.f32.mrf.mxu0
        %v3989 = vadd.f32 0.0, %v3988
        %v3990 = vpop.f32.mrf.mxu0
        %v3991 = vadd.f32 0.0, %v3990
        %3992 = vmatmul.bf16.gmra.mxu0 %v3909
        %v3993 = vpop.f32.mrf.mxu0
        %v3994 = vadd.f32 0.0, %v3993
        %v3995 = vpop.f32.mrf.mxu0
        %v3996 = vadd.f32 0.0, %v3995
        %3997 = vmatmul.bf16.gmra.mxu0 %v3912
        %v3998 = vpop.f32.mrf.mxu0
        %v3999 = vadd.f32 0.0, %v3998
        %v4000 = vpop.f32.mrf.mxu0
        %v4001 = vadd.f32 0.0, %v4000
        %4002 = vdwg.mxu0
        %4003 = vmatpush.bf16.msra.mxu0 0
        %4004 = vmatpush.bf16.msra.mxu0 0
        %4005 = vmatpush.bf16.msra.mxu0 0
        %4006 = vmatpush.bf16.msra.mxu0 0
        %4007 = vmatpush.bf16.msra.mxu0 %v3857
        %4008 = vmatpush.bf16.msra.mxu0 %v3855
        %4009 = vmatpush.bf16.msra.mxu0 %v3853
        %4010 = vmatpush.bf16.msra.mxu0 %v3851
        %4011 = vmatmul.bf16.gmra.mxu0 %v3867
        %v4012 = vpop.f32.mrf.mxu0
        %v4013 = vadd.f32 0.0, %v4012
        %v4014 = vpop.f32.mrf.mxu0
        %v4015 = vadd.f32 0.0, %v4014
        %4016 = vmatmul.bf16.gmra.mxu0 %v3870
        %v4017 = vpop.f32.mrf.mxu0
        %v4018 = vadd.f32 0.0, %v4017
        %v4019 = vpop.f32.mrf.mxu0
        %v4020 = vadd.f32 0.0, %v4019
        %4021 = vmatmul.bf16.gmra.mxu0 %v3873
        %v4022 = vpop.f32.mrf.mxu0
        %v4023 = vadd.f32 0.0, %v4022
        %v4024 = vpop.f32.mrf.mxu0
        %v4025 = vadd.f32 0.0, %v4024
        %4026 = vmatmul.bf16.gmra.mxu0 %v3876
        %v4027 = vpop.f32.mrf.mxu0
        %v4028 = vadd.f32 0.0, %v4027
        %v4029 = vpop.f32.mrf.mxu0
        %v4030 = vadd.f32 0.0, %v4029
        %4031 = vmatmul.bf16.gmra.mxu0 %v3879
        %v4032 = vpop.f32.mrf.mxu0
        %v4033 = vadd.f32 0.0, %v4032
        %v4034 = vpop.f32.mrf.mxu0
        %v4035 = vadd.f32 0.0, %v4034
        %4036 = vmatmul.bf16.gmra.mxu0 %v3882
        %v4037 = vpop.f32.mrf.mxu0
        %v4038 = vadd.f32 0.0, %v4037
        %v4039 = vpop.f32.mrf.mxu0
        %v4040 = vadd.f32 0.0, %v4039
        %4041 = vmatmul.bf16.gmra.mxu0 %v3885
        %v4042 = vpop.f32.mrf.mxu0
        %v4043 = vadd.f32 0.0, %v4042
        %v4044 = vpop.f32.mrf.mxu0
        %v4045 = vadd.f32 0.0, %v4044
        %4046 = vmatmul.bf16.gmra.mxu0 %v3888
        %v4047 = vpop.f32.mrf.mxu0
        %v4048 = vadd.f32 0.0, %v4047
        %v4049 = vpop.f32.mrf.mxu0
        %v4050 = vadd.f32 0.0, %v4049
        %4051 = vmatmul.bf16.gmra.mxu0 %v3891
        %v4052 = vpop.f32.mrf.mxu0
        %v4053 = vadd.f32 0.0, %v4052
        %v4054 = vpop.f32.mrf.mxu0
        %v4055 = vadd.f32 0.0, %v4054
        %4056 = vmatmul.bf16.gmra.mxu0 %v3894
        %v4057 = vpop.f32.mrf.mxu0
        %v4058 = vadd.f32 0.0, %v4057
        %v4059 = vpop.f32.mrf.mxu0
        %v4060 = vadd.f32 0.0, %v4059
        %4061 = vmatmul.bf16.gmra.mxu0 %v3897
        %v4062 = vpop.f32.mrf.mxu0
        %v4063 = vadd.f32 0.0, %v4062
        %v4064 = vpop.f32.mrf.mxu0
        %v4065 = vadd.f32 0.0, %v4064
        %4066 = vmatmul.bf16.gmra.mxu0 %v3900
        %v4067 = vpop.f32.mrf.mxu0
        %v4068 = vadd.f32 0.0, %v4067
        %v4069 = vpop.f32.mrf.mxu0
        %v4070 = vadd.f32 0.0, %v4069
        %4071 = vmatmul.bf16.gmra.mxu0 %v3903
        %v4072 = vpop.f32.mrf.mxu0
        %v4073 = vadd.f32 0.0, %v4072
        %v4074 = vpop.f32.mrf.mxu0
        %v4075 = vadd.f32 0.0, %v4074
        %4076 = vmatmul.bf16.gmra.mxu0 %v3906
        %v4077 = vpop.f32.mrf.mxu0
        %v4078 = vadd.f32 0.0, %v4077
        %v4079 = vpop.f32.mrf.mxu0
        %v4080 = vadd.f32 0.0, %v4079
        %4081 = vmatmul.bf16.gmra.mxu0 %v3909
        %v4082 = vpop.f32.mrf.mxu0
        %v4083 = vadd.f32 0.0, %v4082
        %v4084 = vpop.f32.mrf.mxu0
        %v4085 = vadd.f32 0.0, %v4084
        %4086 = vmatmul.bf16.gmra.mxu0 %v3912
        %v4087 = vpop.f32.mrf.mxu0
        %v4088 = vadd.f32 0.0, %v4087
        %v4089 = vpop.f32.mrf.mxu0
        %v4090 = vadd.f32 0.0, %v4089
        %4091 = vdwg.mxu0
        %v4092 = vperm.slane %v3702, 0
        %v4093 = vperm.slane %v3702, 1
        %v4094 = vperm.slane %v3705, 0
        %v4095 = vperm.slane %v3705, 1
        %v4100 = vadd.f32 %v3924, %v4092
        %v4101 = vadd.f32 %v4013, %v4093
        %v4102 = vadd.f32 %v3926, %v4092
        %v4103 = vadd.f32 %v4015, %v4093
        %v4104 = vadd.f32 %v3929, %v4092
        %v4105 = vadd.f32 %v4018, %v4093
        %v4106 = vadd.f32 %v3931, %v4092
        %v4107 = vadd.f32 %v4020, %v4093
        %v4108 = vadd.f32 %v3934, %v4092
        %v4109 = vadd.f32 %v4023, %v4093
        %v4110 = vadd.f32 %v3936, %v4092
        %v4111 = vadd.f32 %v4025, %v4093
        %v4112 = vadd.f32 %v3939, %v4092
        %v4113 = vadd.f32 %v4028, %v4093
        %v4114 = vadd.f32 %v3941, %v4092
        %v4115 = vadd.f32 %v4030, %v4093
        %v4116 = vadd.f32 %v3944, %v4092
        %v4117 = vadd.f32 %v4033, %v4093
        %v4118 = vadd.f32 %v3946, %v4092
        %v4119 = vadd.f32 %v4035, %v4093
        %v4120 = vadd.f32 %v3949, %v4092
        %v4121 = vadd.f32 %v4038, %v4093
        %v4122 = vadd.f32 %v3951, %v4092
        %v4123 = vadd.f32 %v4040, %v4093
        %v4124 = vadd.f32 %v3954, %v4092
        %v4125 = vadd.f32 %v4043, %v4093
        %v4126 = vadd.f32 %v3956, %v4092
        %v4127 = vadd.f32 %v4045, %v4093
        %v4128 = vadd.f32 %v3959, %v4092
        %v4129 = vadd.f32 %v4048, %v4093
        %v4130 = vadd.f32 %v3961, %v4092
        %v4131 = vadd.f32 %v4050, %v4093
        %v4132 = vadd.f32 %v3964, %v4094
        %v4133 = vadd.f32 %v4053, %v4095
        %v4134 = vadd.f32 %v3966, %v4094
        %v4135 = vadd.f32 %v4055, %v4095
        %v4136 = vadd.f32 %v3969, %v4094
        %v4137 = vadd.f32 %v4058, %v4095
        %v4138 = vadd.f32 %v3971, %v4094
        %v4139 = vadd.f32 %v4060, %v4095
        %v4140 = vadd.f32 %v3974, %v4094
        %v4141 = vadd.f32 %v4063, %v4095
        %v4142 = vadd.f32 %v3976, %v4094
        %v4143 = vadd.f32 %v4065, %v4095
        %v4144 = vadd.f32 %v3979, %v4094
        %v4145 = vadd.f32 %v4068, %v4095
        %v4146 = vadd.f32 %v3981, %v4094
        %v4147 = vadd.f32 %v4070, %v4095
        %v4148 = vadd.f32 %v3984, %v4094
        %v4149 = vadd.f32 %v4073, %v4095
        %v4150 = vadd.f32 %v3986, %v4094
        %v4151 = vadd.f32 %v4075, %v4095
        %v4152 = vadd.f32 %v3989, %v4094
        %v4153 = vadd.f32 %v4078, %v4095
        %v4154 = vadd.f32 %v3991, %v4094
        %v4155 = vadd.f32 %v4080, %v4095
        %v4156 = vadd.f32 %v3994, %v4094
        %v4157 = vadd.f32 %v4083, %v4095
        %v4158 = vadd.f32 %v3996, %v4094
        %v4159 = vadd.f32 %v4085, %v4095
        %v4160 = vadd.f32 %v3999, %v4094
        %v4161 = vadd.f32 %v4088, %v4095
        %v4162 = vadd.f32 %v4001, %v4094
        %v4163 = vadd.f32 %v4090, %v4095
        %v4164 = vmax.f32 %v4100, 0.0
        %v4165 = vmax.f32 %v4101, 0.0
        %v4166 = vmax.f32 %v4102, 0.0
        %v4167 = vmax.f32 %v4103, 0.0
        %v4168 = vmax.f32 %v4104, 0.0
        %v4169 = vmax.f32 %v4105, 0.0
        %v4170 = vmax.f32 %v4106, 0.0
        %v4171 = vmax.f32 %v4107, 0.0
        %v4172 = vmax.f32 %v4108, 0.0
        %v4173 = vmax.f32 %v4109, 0.0
        %v4174 = vmax.f32 %v4110, 0.0
        %v4175 = vmax.f32 %v4111, 0.0
        %v4176 = vmax.f32 %v4112, 0.0
        %v4177 = vmax.f32 %v4113, 0.0
        %v4178 = vmax.f32 %v4114, 0.0
        %v4179 = vmax.f32 %v4115, 0.0
        %v4180 = vmax.f32 %v4116, 0.0
        %v4181 = vmax.f32 %v4117, 0.0
        %v4182 = vmax.f32 %v4118, 0.0
        %v4183 = vmax.f32 %v4119, 0.0
        %v4184 = vmax.f32 %v4120, 0.0
        %v4185 = vmax.f32 %v4121, 0.0
        %v4186 = vmax.f32 %v4122, 0.0
        %v4187 = vmax.f32 %v4123, 0.0
        %v4188 = vmax.f32 %v4124, 0.0
        %v4189 = vmax.f32 %v4125, 0.0
        %v4190 = vmax.f32 %v4126, 0.0
        %v4191 = vmax.f32 %v4127, 0.0
        %v4192 = vmax.f32 %v4128, 0.0
        %v4193 = vmax.f32 %v4129, 0.0
        %v4194 = vmax.f32 %v4130, 0.0
        %v4195 = vmax.f32 %v4131, 0.0
        %v4196 = vmax.f32 %v4132, 0.0
        %v4197 = vmax.f32 %v4133, 0.0
        %v4198 = vmax.f32 %v4134, 0.0
        %v4199 = vmax.f32 %v4135, 0.0
        %v4200 = vmax.f32 %v4136, 0.0
        %v4201 = vmax.f32 %v4137, 0.0
        %v4202 = vmax.f32 %v4138, 0.0
        %v4203 = vmax.f32 %v4139, 0.0
        %v4204 = vmax.f32 %v4140, 0.0
        %v4205 = vmax.f32 %v4141, 0.0
        %v4206 = vmax.f32 %v4142, 0.0
        %v4207 = vmax.f32 %v4143, 0.0
        %v4208 = vmax.f32 %v4144, 0.0
        %v4209 = vmax.f32 %v4145, 0.0
        %v4210 = vmax.f32 %v4146, 0.0
        %v4211 = vmax.f32 %v4147, 0.0
        %v4212 = vmax.f32 %v4148, 0.0
        %v4213 = vmax.f32 %v4149, 0.0
        %v4214 = vmax.f32 %v4150, 0.0
        %v4215 = vmax.f32 %v4151, 0.0
        %v4216 = vmax.f32 %v4152, 0.0
        %v4217 = vmax.f32 %v4153, 0.0
        %v4218 = vmax.f32 %v4154, 0.0
        %v4219 = vmax.f32 %v4155, 0.0
        %v4220 = vmax.f32 %v4156, 0.0
        %v4221 = vmax.f32 %v4157, 0.0
        %v4222 = vmax.f32 %v4158, 0.0
        %v4223 = vmax.f32 %v4159, 0.0
        %v4224 = vmax.f32 %v4160, 0.0
        %v4225 = vmax.f32 %v4161, 0.0
        %v4226 = vmax.f32 %v4162, 0.0
        %v4227 = vmax.f32 %v4163, 0.0
        %v4228 = vpack.c.bf16 %v4166, %v4164
        %v4229 = vpack.c.bf16 %v4167, %v4165
        %v4230 = vpack.c.bf16 %v4170, %v4168
        %v4231 = vpack.c.bf16 %v4171, %v4169
        %v4232 = vpack.c.bf16 %v4174, %v4172
        %v4233 = vpack.c.bf16 %v4175, %v4173
        %v4234 = vpack.c.bf16 %v4178, %v4176
        %v4235 = vpack.c.bf16 %v4179, %v4177
        %v4236 = vpack.c.bf16 %v4182, %v4180
        %v4237 = vpack.c.bf16 %v4183, %v4181
        %v4238 = vpack.c.bf16 %v4186, %v4184
        %v4239 = vpack.c.bf16 %v4187, %v4185
        %v4240 = vpack.c.bf16 %v4190, %v4188
        %v4241 = vpack.c.bf16 %v4191, %v4189
        %v4242 = vpack.c.bf16 %v4194, %v4192
        %v4243 = vpack.c.bf16 %v4195, %v4193
        %v4244 = vpack.c.bf16 %v4198, %v4196
        %v4245 = vpack.c.bf16 %v4199, %v4197
        %v4246 = vpack.c.bf16 %v4202, %v4200
        %v4247 = vpack.c.bf16 %v4203, %v4201
        %v4248 = vpack.c.bf16 %v4206, %v4204
        %v4249 = vpack.c.bf16 %v4207, %v4205
        %v4250 = vpack.c.bf16 %v4210, %v4208
        %v4251 = vpack.c.bf16 %v4211, %v4209
        %v4252 = vpack.c.bf16 %v4214, %v4212
        %v4253 = vpack.c.bf16 %v4215, %v4213
        %v4254 = vpack.c.bf16 %v4218, %v4216
        %v4255 = vpack.c.bf16 %v4219, %v4217
        %v4256 = vpack.c.bf16 %v4222, %v4220
        %v4257 = vpack.c.bf16 %v4223, %v4221
        %v4258 = vpack.c.bf16 %v4226, %v4224
        %v4259 = vpack.c.bf16 %v4227, %v4225
        %v4260 = vld [vmem:[%s10] sm:$0xf]
        %v4261 = vld [vmem:[%s10 + $0x4] sm:$0xf]
        %v4262 = vld [vmem:[%s10 + $0x8] sm:$0xf]
        %v4263 = vld [vmem:[%s10 + $0xc] sm:$0xf]
        %v4264 = vld [vmem:[%s10 + $0x10] sm:$0xf]
        %v4265 = vld [vmem:[%s10 + $0x14] sm:$0xf]
        %v4266 = vld [vmem:[%s10 + $0x18] sm:$0xf]
        %v4267 = vld [vmem:[%s10 + $0x1c] sm:$0xf]
        %v4268 = vld [vmem:[%s10 + $0x20] sm:$0xf]
        %v4269 = vld [vmem:[%s10 + $0x24] sm:$0xf]
        %v4270 = vld [vmem:[%s10 + $0x28] sm:$0xf]
        %v4271 = vld [vmem:[%s10 + $0x2c] sm:$0xf]
        %v4272 = vld [vmem:[%s10 + $0x30] sm:$0xf]
        %v4273 = vld [vmem:[%s10 + $0x34] sm:$0xf]
        %v4274 = vld [vmem:[%s10 + $0x38] sm:$0xf]
        %v4275 = vld [vmem:[%s10 + $0x3c] sm:$0xf]
        %v4276 = vld [vmem:[%s10 + $0x40] sm:$0xf]
        %v4277 = vld [vmem:[%s10 + $0x44] sm:$0xf]
        %v4278 = vld [vmem:[%s10 + $0x48] sm:$0xf]
        %v4279 = vld [vmem:[%s10 + $0x4c] sm:$0xf]
        %v4280 = vld [vmem:[%s10 + $0x50] sm:$0xf]
        %v4281 = vld [vmem:[%s10 + $0x54] sm:$0xf]
        %v4282 = vld [vmem:[%s10 + $0x58] sm:$0xf]
        %v4283 = vld [vmem:[%s10 + $0x5c] sm:$0xf]
        %v4284 = vld [vmem:[%s10 + $0x60] sm:$0xf]
        %v4285 = vld [vmem:[%s10 + $0x64] sm:$0xf]
        %v4286 = vld [vmem:[%s10 + $0x68] sm:$0xf]
        %v4287 = vld [vmem:[%s10 + $0x6c] sm:$0xf]
        %v4288 = vld [vmem:[%s10 + $0x70] sm:$0xf]
        %v4289 = vld [vmem:[%s10 + $0x74] sm:$0xf]
        %v4290 = vld [vmem:[%s10 + $0x78] sm:$0xf]
        %v4291 = vld [vmem:[%s10 + $0x7c] sm:$0xf]
        %v4292 = vld [vmem:[#allocation12] sm:$0x1]
        %v4294 = vperm.slane %v4292, 0
        %v4328 = vunpack.c.l.b16 %v4260
        %v4329 = vunpack.c.l.b16 %v4261
        %v4330 = vunpack.c.l.b16 %v4262
        %v4331 = vunpack.c.l.b16 %v4263
        %v4332 = vunpack.c.l.b16 %v4264
        %v4333 = vunpack.c.l.b16 %v4265
        %v4334 = vunpack.c.l.b16 %v4266
        %v4335 = vunpack.c.l.b16 %v4267
        %v4336 = vunpack.c.l.b16 %v4268
        %v4337 = vunpack.c.l.b16 %v4269
        %v4338 = vunpack.c.l.b16 %v4270
        %v4339 = vunpack.c.l.b16 %v4271
        %v4340 = vunpack.c.l.b16 %v4272
        %v4341 = vunpack.c.l.b16 %v4273
        %v4342 = vunpack.c.l.b16 %v4274
        %v4343 = vunpack.c.l.b16 %v4275
        %v4344 = vunpack.c.l.b16 %v4276
        %v4345 = vunpack.c.l.b16 %v4277
        %v4346 = vunpack.c.l.b16 %v4278
        %v4347 = vunpack.c.l.b16 %v4279
        %v4348 = vunpack.c.l.b16 %v4280
        %v4349 = vunpack.c.l.b16 %v4281
        %v4350 = vunpack.c.l.b16 %v4282
        %v4351 = vunpack.c.l.b16 %v4283
        %v4352 = vunpack.c.l.b16 %v4284
        %v4353 = vunpack.c.l.b16 %v4285
        %v4354 = vunpack.c.l.b16 %v4286
        %v4355 = vunpack.c.l.b16 %v4287
        %v4356 = vunpack.c.l.b16 %v4288
        %v4357 = vunpack.c.l.b16 %v4289
        %v4358 = vunpack.c.l.b16 %v4290
        %v4359 = vunpack.c.l.b16 %v4291
        %v4360 = vpack.c.b16 %v4329, %v4328
        %v4361 = vpack.c.b16 %v4331, %v4330
        %v4362 = vpack.c.b16 %v4333, %v4332
        %v4363 = vpack.c.b16 %v4335, %v4334
        %v4364 = vpack.c.b16 %v4337, %v4336
        %v4365 = vpack.c.b16 %v4339, %v4338
        %v4366 = vpack.c.b16 %v4341, %v4340
        %v4367 = vpack.c.b16 %v4343, %v4342
        %v4368 = vpack.c.b16 %v4345, %v4344
        %v4369 = vpack.c.b16 %v4347, %v4346
        %v4370 = vpack.c.b16 %v4349, %v4348
        %v4371 = vpack.c.b16 %v4351, %v4350
        %v4372 = vpack.c.b16 %v4353, %v4352
        %v4373 = vpack.c.b16 %v4355, %v4354
        %v4374 = vpack.c.b16 %v4357, %v4356
        %v4375 = vpack.c.b16 %v4359, %v4358
        %4392 = vmatpush.bf16.msra.mxu0 %v4367
        %4393 = vmatpush.bf16.msra.mxu0 %v4366
        %4394 = vmatpush.bf16.msra.mxu0 %v4365
        %4395 = vmatpush.bf16.msra.mxu0 %v4364
        %4396 = vmatpush.bf16.msra.mxu0 %v4363
        %4397 = vmatpush.bf16.msra.mxu0 %v4362
        %4398 = vmatpush.bf16.msra.mxu0 %v4361
        %4399 = vmatpush.bf16.msra.mxu0 %v4360
        %4400 = vmatmul.bf16.gmra.mxu0 %v4228
        %v4401 = vpop.f32.mrf.mxu0
        %v4402 = vadd.f32 %v4294, %v4401
        %v4403 = vpop.f32.mrf.mxu0
        %v4404 = vadd.f32 %v4294, %v4403
        %4405 = vmatmul.bf16.gmra.mxu0 %v4230
        %v4406 = vpop.f32.mrf.mxu0
        %v4407 = vadd.f32 %v4294, %v4406
        %v4408 = vpop.f32.mrf.mxu0
        %v4409 = vadd.f32 %v4294, %v4408
        %4410 = vmatmul.bf16.gmra.mxu0 %v4232
        %v4411 = vpop.f32.mrf.mxu0
        %v4412 = vadd.f32 %v4294, %v4411
        %v4413 = vpop.f32.mrf.mxu0
        %v4414 = vadd.f32 %v4294, %v4413
        %4415 = vmatmul.bf16.gmra.mxu0 %v4234
        %v4416 = vpop.f32.mrf.mxu0
        %v4417 = vadd.f32 %v4294, %v4416
        %v4418 = vpop.f32.mrf.mxu0
        %v4419 = vadd.f32 %v4294, %v4418
        %4420 = vmatmul.bf16.gmra.mxu0 %v4236
        %v4421 = vpop.f32.mrf.mxu0
        %v4422 = vadd.f32 %v4294, %v4421
        %v4423 = vpop.f32.mrf.mxu0
        %v4424 = vadd.f32 %v4294, %v4423
        %4425 = vmatmul.bf16.gmra.mxu0 %v4238
        %v4426 = vpop.f32.mrf.mxu0
        %v4427 = vadd.f32 %v4294, %v4426
        %v4428 = vpop.f32.mrf.mxu0
        %v4429 = vadd.f32 %v4294, %v4428
        %4430 = vmatmul.bf16.gmra.mxu0 %v4240
        %v4431 = vpop.f32.mrf.mxu0
        %v4432 = vadd.f32 %v4294, %v4431
        %v4433 = vpop.f32.mrf.mxu0
        %v4434 = vadd.f32 %v4294, %v4433
        %4435 = vmatmul.bf16.gmra.mxu0 %v4242
        %v4436 = vpop.f32.mrf.mxu0
        %v4437 = vadd.f32 %v4294, %v4436
        %v4438 = vpop.f32.mrf.mxu0
        %v4439 = vadd.f32 %v4294, %v4438
        %4440 = vmatmul.bf16.gmra.mxu0 %v4244
        %v4441 = vpop.f32.mrf.mxu0
        %v4442 = vadd.f32 %v4294, %v4441
        %v4443 = vpop.f32.mrf.mxu0
        %v4444 = vadd.f32 %v4294, %v4443
        %4445 = vmatmul.bf16.gmra.mxu0 %v4246
        %v4446 = vpop.f32.mrf.mxu0
        %v4447 = vadd.f32 %v4294, %v4446
        %v4448 = vpop.f32.mrf.mxu0
        %v4449 = vadd.f32 %v4294, %v4448
        %4450 = vmatmul.bf16.gmra.mxu0 %v4248
        %v4451 = vpop.f32.mrf.mxu0
        %v4452 = vadd.f32 %v4294, %v4451
        %v4453 = vpop.f32.mrf.mxu0
        %v4454 = vadd.f32 %v4294, %v4453
        %4455 = vmatmul.bf16.gmra.mxu0 %v4250
        %v4456 = vpop.f32.mrf.mxu0
        %v4457 = vadd.f32 %v4294, %v4456
        %v4458 = vpop.f32.mrf.mxu0
        %v4459 = vadd.f32 %v4294, %v4458
        %4460 = vmatmul.bf16.gmra.mxu0 %v4252
        %v4461 = vpop.f32.mrf.mxu0
        %v4462 = vadd.f32 %v4294, %v4461
        %v4463 = vpop.f32.mrf.mxu0
        %v4464 = vadd.f32 %v4294, %v4463
        %4465 = vmatmul.bf16.gmra.mxu0 %v4254
        %v4466 = vpop.f32.mrf.mxu0
        %v4467 = vadd.f32 %v4294, %v4466
        %v4468 = vpop.f32.mrf.mxu0
        %v4469 = vadd.f32 %v4294, %v4468
        %4470 = vmatmul.bf16.gmra.mxu0 %v4256
        %v4471 = vpop.f32.mrf.mxu0
        %v4472 = vadd.f32 %v4294, %v4471
        %v4473 = vpop.f32.mrf.mxu0
        %v4474 = vadd.f32 %v4294, %v4473
        %4475 = vmatmul.bf16.gmra.mxu0 %v4258
        %v4476 = vpop.f32.mrf.mxu0
        %v4477 = vadd.f32 %v4294, %v4476
        %v4478 = vpop.f32.mrf.mxu0
        %v4479 = vadd.f32 %v4294, %v4478
        %4480 = vdwg.mxu0
        %4481 = vmatpush.bf16.msra.mxu0 %v4375
        %4482 = vmatpush.bf16.msra.mxu0 %v4374
        %4483 = vmatpush.bf16.msra.mxu0 %v4373
        %4484 = vmatpush.bf16.msra.mxu0 %v4372
        %4485 = vmatpush.bf16.msra.mxu0 %v4371
        %4486 = vmatpush.bf16.msra.mxu0 %v4370
        %4487 = vmatpush.bf16.msra.mxu0 %v4369
        %4488 = vmatpush.bf16.msra.mxu0 %v4368
        %4489 = vmatmul.bf16.gmra.mxu0 %v4229
        %v4490 = vpop.f32.mrf.mxu0
        %v4491 = vadd.f32 %v4402, %v4490
        %v4492 = vpop.f32.mrf.mxu0
        %v4493 = vadd.f32 %v4404, %v4492
        %4494 = vmatmul.bf16.gmra.mxu0 %v4231
        %v4495 = vpop.f32.mrf.mxu0
        %v4496 = vadd.f32 %v4407, %v4495
        %v4497 = vpop.f32.mrf.mxu0
        %v4498 = vadd.f32 %v4409, %v4497
        %4499 = vmatmul.bf16.gmra.mxu0 %v4233
        %v4500 = vpop.f32.mrf.mxu0
        %v4501 = vadd.f32 %v4412, %v4500
        %v4502 = vpop.f32.mrf.mxu0
        %v4503 = vadd.f32 %v4414, %v4502
        %4504 = vmatmul.bf16.gmra.mxu0 %v4235
        %v4505 = vpop.f32.mrf.mxu0
        %v4506 = vadd.f32 %v4417, %v4505
        %v4507 = vpop.f32.mrf.mxu0
        %v4508 = vadd.f32 %v4419, %v4507
        %4509 = vmatmul.bf16.gmra.mxu0 %v4237
        %v4510 = vpop.f32.mrf.mxu0
        %v4511 = vadd.f32 %v4422, %v4510
        %v4512 = vpop.f32.mrf.mxu0
        %v4513 = vadd.f32 %v4424, %v4512
        %4514 = vmatmul.bf16.gmra.mxu0 %v4239
        %v4515 = vpop.f32.mrf.mxu0
        %v4516 = vadd.f32 %v4427, %v4515
        %v4517 = vpop.f32.mrf.mxu0
        %v4518 = vadd.f32 %v4429, %v4517
        %4519 = vmatmul.bf16.gmra.mxu0 %v4241
        %v4520 = vpop.f32.mrf.mxu0
        %v4521 = vadd.f32 %v4432, %v4520
        %v4522 = vpop.f32.mrf.mxu0
        %v4523 = vadd.f32 %v4434, %v4522
        %4524 = vmatmul.bf16.gmra.mxu0 %v4243
        %v4525 = vpop.f32.mrf.mxu0
        %v4526 = vadd.f32 %v4437, %v4525
        %v4527 = vpop.f32.mrf.mxu0
        %v4528 = vadd.f32 %v4439, %v4527
        %4529 = vmatmul.bf16.gmra.mxu0 %v4245
        %v4530 = vpop.f32.mrf.mxu0
        %v4531 = vadd.f32 %v4442, %v4530
        %v4532 = vpop.f32.mrf.mxu0
        %v4533 = vadd.f32 %v4444, %v4532
        %4534 = vmatmul.bf16.gmra.mxu0 %v4247
        %v4535 = vpop.f32.mrf.mxu0
        %v4536 = vadd.f32 %v4447, %v4535
        %v4537 = vpop.f32.mrf.mxu0
        %v4538 = vadd.f32 %v4449, %v4537
        %4539 = vmatmul.bf16.gmra.mxu0 %v4249
        %v4540 = vpop.f32.mrf.mxu0
        %v4541 = vadd.f32 %v4452, %v4540
        %v4542 = vpop.f32.mrf.mxu0
        %v4543 = vadd.f32 %v4454, %v4542
        %4544 = vmatmul.bf16.gmra.mxu0 %v4251
        %v4545 = vpop.f32.mrf.mxu0
        %v4546 = vadd.f32 %v4457, %v4545
        %v4547 = vpop.f32.mrf.mxu0
        %v4548 = vadd.f32 %v4459, %v4547
        %4549 = vmatmul.bf16.gmra.mxu0 %v4253
        %v4550 = vpop.f32.mrf.mxu0
        %v4551 = vadd.f32 %v4462, %v4550
        %v4552 = vpop.f32.mrf.mxu0
        %v4553 = vadd.f32 %v4464, %v4552
        %4554 = vmatmul.bf16.gmra.mxu0 %v4255
        %v4555 = vpop.f32.mrf.mxu0
        %v4556 = vadd.f32 %v4467, %v4555
        %v4557 = vpop.f32.mrf.mxu0
        %v4558 = vadd.f32 %v4469, %v4557
        %4559 = vmatmul.bf16.gmra.mxu0 %v4257
        %v4560 = vpop.f32.mrf.mxu0
        %v4561 = vadd.f32 %v4472, %v4560
        %v4562 = vpop.f32.mrf.mxu0
        %v4563 = vadd.f32 %v4474, %v4562
        %4564 = vmatmul.bf16.gmra.mxu0 %v4259
        %v4565 = vpop.f32.mrf.mxu0
        %v4566 = vadd.f32 %v4477, %v4565
        %v4567 = vpop.f32.mrf.mxu0
        %v4568 = vadd.f32 %v4479, %v4567
        %4569 = vdwg.mxu0
        %4570 = vmax.xlane.f32.xlu0 %v4491
        %v4571 = vpop.xlane.xlu0 %4570
        %4572 = vmax.xlane.f32.xlu0 %v4493
        %v4573 = vpop.xlane.xlu0 %4572
        %4574 = vmax.xlane.f32.xlu0 %v4496
        %v4575 = vpop.xlane.xlu0 %4574
        %4576 = vmax.xlane.f32.xlu0 %v4498
        %v4577 = vpop.xlane.xlu0 %4576
        %4578 = vmax.xlane.f32.xlu0 %v4501
        %v4579 = vpop.xlane.xlu0 %4578
        %4580 = vmax.xlane.f32.xlu0 %v4503
        %v4581 = vpop.xlane.xlu0 %4580
        %4582 = vmax.xlane.f32.xlu0 %v4506
        %v4583 = vpop.xlane.xlu0 %4582
        %4584 = vmax.xlane.f32.xlu0 %v4508
        %v4585 = vpop.xlane.xlu0 %4584
        %4586 = vmax.xlane.f32.xlu0 %v4511
        %v4587 = vpop.xlane.xlu0 %4586
        %4588 = vmax.xlane.f32.xlu0 %v4513
        %v4589 = vpop.xlane.xlu0 %4588
        %4590 = vmax.xlane.f32.xlu0 %v4516
        %v4591 = vpop.xlane.xlu0 %4590
        %4592 = vmax.xlane.f32.xlu0 %v4518
        %v4593 = vpop.xlane.xlu0 %4592
        %4594 = vmax.xlane.f32.xlu0 %v4521
        %v4595 = vpop.xlane.xlu0 %4594
        %4596 = vmax.xlane.f32.xlu0 %v4523
        %v4597 = vpop.xlane.xlu0 %4596
        %4598 = vmax.xlane.f32.xlu0 %v4526
        %v4599 = vpop.xlane.xlu0 %4598
        %4600 = vmax.xlane.f32.xlu0 %v4528
        %v4601 = vpop.xlane.xlu0 %4600
        %4602 = vmax.xlane.f32.xlu0 %v4531
        %v4603 = vpop.xlane.xlu0 %4602
        %4604 = vmax.xlane.f32.xlu0 %v4533
        %v4605 = vpop.xlane.xlu0 %4604
        %4606 = vmax.xlane.f32.xlu0 %v4536
        %v4607 = vpop.xlane.xlu0 %4606
        %4608 = vmax.xlane.f32.xlu0 %v4538
        %v4609 = vpop.xlane.xlu0 %4608
        %4610 = vmax.xlane.f32.xlu0 %v4541
        %v4611 = vpop.xlane.xlu0 %4610
        %4612 = vmax.xlane.f32.xlu0 %v4543
        %v4613 = vpop.xlane.xlu0 %4612
        %4614 = vmax.xlane.f32.xlu0 %v4546
        %v4615 = vpop.xlane.xlu0 %4614
        %4616 = vmax.xlane.f32.xlu0 %v4548
        %v4617 = vpop.xlane.xlu0 %4616
        %4618 = vmax.xlane.f32.xlu0 %v4551
        %v4619 = vpop.xlane.xlu0 %4618
        %4620 = vmax.xlane.f32.xlu0 %v4553
        %v4621 = vpop.xlane.xlu0 %4620
        %4622 = vmax.xlane.f32.xlu0 %v4556
        %v4623 = vpop.xlane.xlu0 %4622
        %4624 = vmax.xlane.f32.xlu0 %v4558
        %v4625 = vpop.xlane.xlu0 %4624
        %4626 = vmax.xlane.f32.xlu0 %v4561
        %v4627 = vpop.xlane.xlu0 %4626
        %4628 = vmax.xlane.f32.xlu0 %v4563
        %v4629 = vpop.xlane.xlu0 %4628
        %4630 = vmax.xlane.f32.xlu0 %v4566
        %v4631 = vpop.xlane.xlu0 %4630
        %4632 = vmax.xlane.f32.xlu0 %v4568
        %v4633 = vpop.xlane.xlu0 %4632
        %v4634 = vsub.f32 %v4491, %v4571
        %v4635 = vsub.f32 %v4493, %v4573
        %v4636 = vsub.f32 %v4496, %v4575
        %v4637 = vsub.f32 %v4498, %v4577
        %v4638 = vsub.f32 %v4501, %v4579
        %v4639 = vsub.f32 %v4503, %v4581
        %v4640 = vsub.f32 %v4506, %v4583
        %v4641 = vsub.f32 %v4508, %v4585
        %v4642 = vsub.f32 %v4511, %v4587
        %v4643 = vsub.f32 %v4513, %v4589
        %v4644 = vsub.f32 %v4516, %v4591
        %v4645 = vsub.f32 %v4518, %v4593
        %v4646 = vsub.f32 %v4521, %v4595
        %v4647 = vsub.f32 %v4523, %v4597
        %v4648 = vsub.f32 %v4526, %v4599
        %v4649 = vsub.f32 %v4528, %v4601
        %v4650 = vsub.f32 %v4531, %v4603
        %v4651 = vsub.f32 %v4533, %v4605
        %v4652 = vsub.f32 %v4536, %v4607
        %v4653 = vsub.f32 %v4538, %v4609
        %v4654 = vsub.f32 %v4541, %v4611
        %v4655 = vsub.f32 %v4543, %v4613
        %v4656 = vsub.f32 %v4546, %v4615
        %v4657 = vsub.f32 %v4548, %v4617
        %v4658 = vsub.f32 %v4551, %v4619
        %v4659 = vsub.f32 %v4553, %v4621
        %v4660 = vsub.f32 %v4556, %v4623
        %v4661 = vsub.f32 %v4558, %v4625
        %v4662 = vsub.f32 %v4561, %v4627
        %v4663 = vsub.f32 %v4563, %v4629
        %v4664 = vsub.f32 %v4566, %v4631
        %v4665 = vsub.f32 %v4568, %v4633
        %v4666 = vmul.f32 %v4634, 1.442695
        %v4667 = vpow.pop %v4666
        %v4668 = vmul.f32 %v4635, 1.442695
        %v4669 = vpow.pop %v4668
        %v4670 = vmul.f32 %v4636, 1.442695
        %v4671 = vpow.pop %v4670
        %v4672 = vmul.f32 %v4637, 1.442695
        %v4673 = vpow.pop %v4672
        %v4674 = vmul.f32 %v4638, 1.442695
        %v4675 = vpow.pop %v4674
        %v4676 = vmul.f32 %v4639, 1.442695
        %v4677 = vpow.pop %v4676
        %v4678 = vmul.f32 %v4640, 1.442695
        %v4679 = vpow.pop %v4678
        %v4680 = vmul.f32 %v4641, 1.442695
        %v4681 = vpow.pop %v4680
        %v4682 = vmul.f32 %v4642, 1.442695
        %v4683 = vpow.pop %v4682
        %v4684 = vmul.f32 %v4643, 1.442695
        %v4685 = vpow.pop %v4684
        %v4686 = vmul.f32 %v4644, 1.442695
        %v4687 = vpow.pop %v4686
        %v4688 = vmul.f32 %v4645, 1.442695
        %v4689 = vpow.pop %v4688
        %v4690 = vmul.f32 %v4646, 1.442695
        %v4691 = vpow.pop %v4690
        %v4692 = vmul.f32 %v4647, 1.442695
        %v4693 = vpow.pop %v4692
        %v4694 = vmul.f32 %v4648, 1.442695
        %v4695 = vpow.pop %v4694
        %v4696 = vmul.f32 %v4649, 1.442695
        %v4697 = vpow.pop %v4696
        %v4698 = vmul.f32 %v4650, 1.442695
        %v4699 = vpow.pop %v4698
        %v4700 = vmul.f32 %v4651, 1.442695
        %v4701 = vpow.pop %v4700
        %v4702 = vmul.f32 %v4652, 1.442695
        %v4703 = vpow.pop %v4702
        %v4704 = vmul.f32 %v4653, 1.442695
        %v4705 = vpow.pop %v4704
        %v4706 = vmul.f32 %v4654, 1.442695
        %v4707 = vpow.pop %v4706
        %v4708 = vmul.f32 %v4655, 1.442695
        %v4709 = vpow.pop %v4708
        %v4710 = vmul.f32 %v4656, 1.442695
        %v4711 = vpow.pop %v4710
        %v4712 = vmul.f32 %v4657, 1.442695
        %v4713 = vpow.pop %v4712
        %v4714 = vmul.f32 %v4658, 1.442695
        %v4715 = vpow.pop %v4714
        %v4716 = vmul.f32 %v4659, 1.442695
        %v4717 = vpow.pop %v4716
        %v4718 = vmul.f32 %v4660, 1.442695
        %v4719 = vpow.pop %v4718
        %v4720 = vmul.f32 %v4661, 1.442695
        %v4721 = vpow.pop %v4720
        %v4722 = vmul.f32 %v4662, 1.442695
        %v4723 = vpow.pop %v4722
        %v4724 = vmul.f32 %v4663, 1.442695
        %v4725 = vpow.pop %v4724
        %v4726 = vmul.f32 %v4664, 1.442695
        %v4727 = vpow.pop %v4726
        %v4728 = vmul.f32 %v4665, 1.442695
        %v4729 = vpow.pop %v4728
        %4730 = vadd.xlane.f32.xlu0 %v4667
        %v4731 = vpop.xlane.xlu0 %4730
        %4732 = vadd.xlane.f32.xlu0 %v4669
        %v4733 = vpop.xlane.xlu0 %4732
        %4734 = vadd.xlane.f32.xlu0 %v4671
        %v4735 = vpop.xlane.xlu0 %4734
        %4736 = vadd.xlane.f32.xlu0 %v4673
        %v4737 = vpop.xlane.xlu0 %4736
        %4738 = vadd.xlane.f32.xlu0 %v4675
        %v4739 = vpop.xlane.xlu0 %4738
        %4740 = vadd.xlane.f32.xlu0 %v4677
        %v4741 = vpop.xlane.xlu0 %4740
        %4742 = vadd.xlane.f32.xlu0 %v4679
        %v4743 = vpop.xlane.xlu0 %4742
        %4744 = vadd.xlane.f32.xlu0 %v4681
        %v4745 = vpop.xlane.xlu0 %4744
        %4746 = vadd.xlane.f32.xlu0 %v4683
        %v4747 = vpop.xlane.xlu0 %4746
        %4748 = vadd.xlane.f32.xlu0 %v4685
        %v4749 = vpop.xlane.xlu0 %4748
        %4750 = vadd.xlane.f32.xlu0 %v4687
        %v4751 = vpop.xlane.xlu0 %4750
        %4752 = vadd.xlane.f32.xlu0 %v4689
        %v4753 = vpop.xlane.xlu0 %4752
        %4754 = vadd.xlane.f32.xlu0 %v4691
        %v4755 = vpop.xlane.xlu0 %4754
        %4756 = vadd.xlane.f32.xlu0 %v4693
        %v4757 = vpop.xlane.xlu0 %4756
        %4758 = vadd.xlane.f32.xlu0 %v4695
        %v4759 = vpop.xlane.xlu0 %4758
        %4760 = vadd.xlane.f32.xlu0 %v4697
        %v4761 = vpop.xlane.xlu0 %4760
        %4762 = vadd.xlane.f32.xlu0 %v4699
        %v4763 = vpop.xlane.xlu0 %4762
        %4764 = vadd.xlane.f32.xlu0 %v4701
        %v4765 = vpop.xlane.xlu0 %4764
        %4766 = vadd.xlane.f32.xlu0 %v4703
        %v4767 = vpop.xlane.xlu0 %4766
        %4768 = vadd.xlane.f32.xlu0 %v4705
        %v4769 = vpop.xlane.xlu0 %4768
        %4770 = vadd.xlane.f32.xlu0 %v4707
        %v4771 = vpop.xlane.xlu0 %4770
        %4772 = vadd.xlane.f32.xlu0 %v4709
        %v4773 = vpop.xlane.xlu0 %4772
        %4774 = vadd.xlane.f32.xlu0 %v4711
        %v4775 = vpop.xlane.xlu0 %4774
        %4776 = vadd.xlane.f32.xlu0 %v4713
        %v4777 = vpop.xlane.xlu0 %4776
        %4778 = vadd.xlane.f32.xlu0 %v4715
        %v4779 = vpop.xlane.xlu0 %4778
        %4780 = vadd.xlane.f32.xlu0 %v4717
        %v4781 = vpop.xlane.xlu0 %4780
        %4782 = vadd.xlane.f32.xlu0 %v4719
        %v4783 = vpop.xlane.xlu0 %4782
        %4784 = vadd.xlane.f32.xlu0 %v4721
        %v4785 = vpop.xlane.xlu0 %4784
        %4786 = vadd.xlane.f32.xlu0 %v4723
        %v4787 = vpop.xlane.xlu0 %4786
        %4788 = vadd.xlane.f32.xlu0 %v4725
        %v4789 = vpop.xlane.xlu0 %4788
        %4790 = vadd.xlane.f32.xlu0 %v4727
        %v4791 = vpop.xlane.xlu0 %4790
        %4792 = vadd.xlane.f32.xlu0 %v4729
        %v4793 = vpop.xlane.xlu0 %4792
        %v4794 = vlog2.pop %v4731
        %v4795 = vmul.f32 %v4794, 0.6931472
        %v4796 = vlog2.pop %v4733
        %v4797 = vmul.f32 %v4796, 0.6931472
        %v4798 = vlog2.pop %v4735
        %v4799 = vmul.f32 %v4798, 0.6931472
        %v4800 = vlog2.pop %v4737
        %v4801 = vmul.f32 %v4800, 0.6931472
        %v4802 = vlog2.pop %v4739
        %v4803 = vmul.f32 %v4802, 0.6931472
        %v4804 = vlog2.pop %v4741
        %v4805 = vmul.f32 %v4804, 0.6931472
        %v4806 = vlog2.pop %v4743
        %v4807 = vmul.f32 %v4806, 0.6931472
        %v4808 = vlog2.pop %v4745
        %v4809 = vmul.f32 %v4808, 0.6931472
        %v4810 = vlog2.pop %v4747
        %v4811 = vmul.f32 %v4810, 0.6931472
        %v4812 = vlog2.pop %v4749
        %v4813 = vmul.f32 %v4812, 0.6931472
        %v4814 = vlog2.pop %v4751
        %v4815 = vmul.f32 %v4814, 0.6931472
        %v4816 = vlog2.pop %v4753
        %v4817 = vmul.f32 %v4816, 0.6931472
        %v4818 = vlog2.pop %v4755
        %v4819 = vmul.f32 %v4818, 0.6931472
        %v4820 = vlog2.pop %v4757
        %v4821 = vmul.f32 %v4820, 0.6931472
        %v4822 = vlog2.pop %v4759
        %v4823 = vmul.f32 %v4822, 0.6931472
        %v4824 = vlog2.pop %v4761
        %v4825 = vmul.f32 %v4824, 0.6931472
        %v4826 = vlog2.pop %v4763
        %v4827 = vmul.f32 %v4826, 0.6931472
        %v4828 = vlog2.pop %v4765
        %v4829 = vmul.f32 %v4828, 0.6931472
        %v4830 = vlog2.pop %v4767
        %v4831 = vmul.f32 %v4830, 0.6931472
        %v4832 = vlog2.pop %v4769
        %v4833 = vmul.f32 %v4832, 0.6931472
        %v4834 = vlog2.pop %v4771
        %v4835 = vmul.f32 %v4834, 0.6931472
        %v4836 = vlog2.pop %v4773
        %v4837 = vmul.f32 %v4836, 0.6931472
        %v4838 = vlog2.pop %v4775
        %v4839 = vmul.f32 %v4838, 0.6931472
        %v4840 = vlog2.pop %v4777
        %v4841 = vmul.f32 %v4840, 0.6931472
        %v4842 = vlog2.pop %v4779
        %v4843 = vmul.f32 %v4842, 0.6931472
        %v4844 = vlog2.pop %v4781
        %v4845 = vmul.f32 %v4844, 0.6931472
        %v4846 = vlog2.pop %v4783
        %v4847 = vmul.f32 %v4846, 0.6931472
        %v4848 = vlog2.pop %v4785
        %v4849 = vmul.f32 %v4848, 0.6931472
        %v4850 = vlog2.pop %v4787
        %v4851 = vmul.f32 %v4850, 0.6931472
        %v4852 = vlog2.pop %v4789
        %v4853 = vmul.f32 %v4852, 0.6931472
        %v4854 = vlog2.pop %v4791
        %v4855 = vmul.f32 %v4854, 0.6931472
        %v4856 = vlog2.pop %v4793
        %v4857 = vmul.f32 %v4856, 0.6931472
        %v4858 = vsub.f32 %v4634, %v4795
        %v4859 = vsub.f32 %v4635, %v4797
        %v4860 = vsub.f32 %v4636, %v4799
        %v4861 = vsub.f32 %v4637, %v4801
        %v4862 = vsub.f32 %v4638, %v4803
        %v4863 = vsub.f32 %v4639, %v4805
        %v4864 = vsub.f32 %v4640, %v4807
        %v4865 = vsub.f32 %v4641, %v4809
        %v4866 = vsub.f32 %v4642, %v4811
        %v4867 = vsub.f32 %v4643, %v4813
        %v4868 = vsub.f32 %v4644, %v4815
        %v4869 = vsub.f32 %v4645, %v4817
        %v4870 = vsub.f32 %v4646, %v4819
        %v4871 = vsub.f32 %v4647, %v4821
        %v4872 = vsub.f32 %v4648, %v4823
        %v4873 = vsub.f32 %v4649, %v4825
        %v4874 = vsub.f32 %v4650, %v4827
        %v4875 = vsub.f32 %v4651, %v4829
        %v4876 = vsub.f32 %v4652, %v4831
        %v4877 = vsub.f32 %v4653, %v4833
        %v4878 = vsub.f32 %v4654, %v4835
        %v4879 = vsub.f32 %v4655, %v4837
        %v4880 = vsub.f32 %v4656, %v4839
        %v4881 = vsub.f32 %v4657, %v4841
        %v4882 = vsub.f32 %v4658, %v4843
        %v4883 = vsub.f32 %v4659, %v4845
        %v4884 = vsub.f32 %v4660, %v4847
        %v4885 = vsub.f32 %v4661, %v4849
        %v4886 = vsub.f32 %v4662, %v4851
        %v4887 = vsub.f32 %v4663, %v4853
        %v4888 = vsub.f32 %v4664, %v4855
        %v4889 = vsub.f32 %v4665, %v4857
        %vm4890 = vcmask 80896
        %4891 = vst.msk [vmem:[%s514] sm:$0xff] %vm4890, %v4858
        %4892 = vst.msk [vmem:[%s514 + $0x8] sm:$0xff] %vm4890, %v4859
        %4893 = vst.msk [vmem:[%s514 + $0x10] sm:$0xff] %vm4890, %v4860
        %4894 = vst.msk [vmem:[%s514 + $0x18] sm:$0xff] %vm4890, %v4861
        %4895 = vst.msk [vmem:[%s514 + $0x20] sm:$0xff] %vm4890, %v4862
        %4896 = vst.msk [vmem:[%s514 + $0x28] sm:$0xff] %vm4890, %v4863
        %4897 = vst.msk [vmem:[%s514 + $0x30] sm:$0xff] %vm4890, %v4864
        %4898 = vst.msk [vmem:[%s514 + $0x38] sm:$0xff] %vm4890, %v4865
        %4899 = vst.msk [vmem:[%s514 + $0x40] sm:$0xff] %vm4890, %v4866
        %4900 = vst.msk [vmem:[%s514 + $0x48] sm:$0xff] %vm4890, %v4867
        %4901 = vst.msk [vmem:[%s514 + $0x50] sm:$0xff] %vm4890, %v4868
        %4902 = vst.msk [vmem:[%s514 + $0x58] sm:$0xff] %vm4890, %v4869
        %4903 = vst.msk [vmem:[%s514 + $0x60] sm:$0xff] %vm4890, %v4870
        %4904 = vst.msk [vmem:[%s514 + $0x68] sm:$0xff] %vm4890, %v4871
        %4905 = vst.msk [vmem:[%s514 + $0x70] sm:$0xff] %vm4890, %v4872
        %4906 = vst.msk [vmem:[%s514 + $0x78] sm:$0xff] %vm4890, %v4873
        %4907 = vst.msk [vmem:[%s514 + $0x80] sm:$0xff] %vm4890, %v4874
        %4908 = vst.msk [vmem:[%s514 + $0x88] sm:$0xff] %vm4890, %v4875
        %4909 = vst.msk [vmem:[%s514 + $0x90] sm:$0xff] %vm4890, %v4876
        %4910 = vst.msk [vmem:[%s514 + $0x98] sm:$0xff] %vm4890, %v4877
        %4911 = vst.msk [vmem:[%s514 + $0xa0] sm:$0xff] %vm4890, %v4878
        %4912 = vst.msk [vmem:[%s514 + $0xa8] sm:$0xff] %vm4890, %v4879
        %4913 = vst.msk [vmem:[%s514 + $0xb0] sm:$0xff] %vm4890, %v4880
        %4914 = vst.msk [vmem:[%s514 + $0xb8] sm:$0xff] %vm4890, %v4881
        %4915 = vst.msk [vmem:[%s514 + $0xc0] sm:$0xff] %vm4890, %v4882
        %4916 = vst.msk [vmem:[%s514 + $0xc8] sm:$0xff] %vm4890, %v4883
        %4917 = vst.msk [vmem:[%s514 + $0xd0] sm:$0xff] %vm4890, %v4884
        %4918 = vst.msk [vmem:[%s514 + $0xd8] sm:$0xff] %vm4890, %v4885
        %4919 = vst.msk [vmem:[%s514 + $0xe0] sm:$0xff] %vm4890, %v4886
        %4920 = vst.msk [vmem:[%s514 + $0xe8] sm:$0xff] %vm4890, %v4887
        %4921 = vst.msk [vmem:[%s514 + $0xf0] sm:$0xff] %vm4890, %v4888
        %4922 = vst.msk [vmem:[%s514 + $0xf8] sm:$0xff] %vm4890, %v4889
        %s4923 = smul.u32 2, %s27
        %p4924 = scmp.lt.s32.totalorder %s4923, 7
        %s4925 = scalar_select %p4924, %s4923, 7
        %s4926 = smul.addr %s4925, 16
        %s4927 = smul.addr %s4926, 8
        %s4928 = scalar_lea.vmem %s12, %s4927
        // Predicated region
        $region93: #{tpu_custom_call.1} parent=67 // pred_check
          %p4929 = pneg %p302
        $region94: #{tpu_custom_call.1} parent=67 // pred_check_branch
          %4931 = sbr.rel (%p4929) target = $region96
        $region95: #{tpu_custom_call.1} parent=67 // pred_region
          %s4932 = smul.u32 2, %s27
        $region96: #{tpu_custom_call.1} parent=67 // pred_fallthru
          _
      $region68: #{tpu_custom_call.1} parent=5 // pred_fallthru
        _
      %p4933 = scmp.le.s32.totalorder 2, %s22
      // Predicated region
      $region97: #{tpu_custom_call.1} parent=5 // pred_check
        %p4934 = pneg %p4933
      $region98: #{tpu_custom_call.1} parent=5 // pred_check_branch
        %4936 = sbr.rel (%p4934) target = $region100
      $region99: #{tpu_custom_call.1} parent=5 // pred_region
        %s4937 = ssub.s32 %s22, 2
        // Predicated region
        $region101: #{tpu_custom_call.1} parent=99 // pred_check
          %p4938 = pneg %p308
        $region102: #{tpu_custom_call.1} parent=99 // pred_check_branch
          %4940 = sbr.rel (%p4938) target = $region104
        $region103: #{tpu_custom_call.1} parent=99 // pred_region
          %s4941 = smul.u32 2, %s28
          %p4942 = scmp.lt.s32.totalorder %s4941, 7
          %s4943 = scalar_select %p4942, %s4941, 7
          %s4944 = smul.addr %s4943, 16
          %s4945 = smul.addr %s4944, 8
          %s4946 = scalar_lea.vmem %s12, %s4945
        $region104: #{tpu_custom_call.1} parent=99 // pred_fallthru
          _
      $region100: #{tpu_custom_call.1} parent=5 // pred_fallthru
        _
    $region6: #{tpu_custom_call.1} parent=1 // loop_footer
      %s26 = sadd.s32 1, %s22
    $region7: #{tpu_custom_call.1} parent=1 // loop_footer_branch
      %21 = sbr.rel target = $region3
    $region8: #{tpu_custom_call.1} parent=1 // loop_exit
      _
    %4947 = vsyncpa [#allocation5], 1
    %s4948 = scalar_lea.sflag [#allocation5], 1
    %4949 = vsyncpa %s4948, 1
    %4950 = vsyncpa [#allocation7], 1
    %4951 = vsyncpa [#allocation10], 1
    %4952 = vsyncpa [#allocation13], 1

</llo_original>
